<compile_context>
chip_gen: v6e
topology: v6e:2x2x1
jax: 0.10.0
libtpu: 0.0.40
codegen_flags: <defaults>
</compile_context>

<pallas_src>
import functools

import jax
import jax.numpy as jnp
from jax.experimental import pallas as pl
from jax.experimental.pallas import tpu as pltpu

EPS = 1e-5


def residual_block_kernel(
    xpad_ref,          # (Rp, Cp) f32: spatially zero-padded NHWC input, flattened rows
    maskf_ref,         # (Rc, 1)  f32: 1.0 on rows that map to a real (n,h,w), else 0.0
    w1_ref,            # (9, Cp, Cp) compute_dtype: conv1 per-tap matrices [tap, ci, co]
    g1_ref, be1_ref,   # (1, Cp) f32: BN1 gamma / beta
    w2_ref,            # (9, Cp, Cp) compute_dtype
    g2_ref, be2_ref,   # (1, Cp) f32: BN2 gamma / beta
    o_ref,             # (Rp, Cp) f32: output, padded-row coordinates (wrapper extracts)
    hpad_ref,          # scratch (Rp, Cp) f32: padded relu(bn1(conv1(x)))
    *, N, H, W, compute_dtype,
):
    Hp, Wp = H + 2, W + 2
    Rp, Cp = xpad_ref.shape
    Rc = Rp - (2 * Wp + 2)        # rows whose 9 tap offsets all stay in bounds
    M = N * H * W
    inv_m = 1.0 / M

    maskf = maskf_ref[...]        # (Rc, 1)

    def conv3x3(src_ref, w_ref):
        # 3x3 "SAME" conv as 9 chained accumulated matmuls on row-shifted views:
        #   out[r] = sum_{ky,kx} src[r + ky*Wp + kx] @ W[ky, kx]   (padded coords)
        # Rows not corresponding to a real (n,h,w) hold garbage and are masked later.
        acc = None
        for ky in range(3):
            for kx in range(3):
                k = ky * 3 + kx
                lhs = src_ref[pl.ds(ky * Wp + kx, Rc), :].astype(compute_dtype)
                part = jnp.dot(lhs, w_ref[k], preferred_element_type=jnp.float32)
                acc = part if acc is None else acc + part
        return acc                # (Rc, Cp) f32

    def bn_train(acc, gamma, beta):
        # Train-mode BatchNorm, statistics taken ONLY over the M valid rows.
        mean = jnp.sum(acc * maskf, axis=0, keepdims=True) * inv_m     # (1, Cp)
        d = (acc - mean) * maskf                                       # centered
        var = jnp.sum(d * d, axis=0, keepdims=True) * inv_m            # biased var
        return gamma * d * jax.lax.rsqrt(var + EPS) + beta

    # ---- conv1 -> BN1 -> ReLU (re-masked so conv2's zero-padding ring stays zero) ----
    acc1 = conv3x3(xpad_ref, w1_ref)
    h1 = jnp.maximum(bn_train(acc1, g1_ref[...], be1_ref[...]), 0.0) * maskf

    # Place h1 back into padded coordinates: padded row index = valid row + (Wp + 1).
    # The first/last (Wp+1) rows are never covered by that store -> zero them; every
    # other padding-ring position receives a masked (zero) value from h1 itself.
    hpad_ref[pl.ds(0, Wp + 1), :] = jnp.zeros((Wp + 1, Cp), jnp.float32)
    hpad_ref[pl.ds(Wp + 1 + Rc, Wp + 1), :] = jnp.zeros((Wp + 1, Cp), jnp.float32)
    hpad_ref[pl.ds(Wp + 1, Rc), :] = h1

    # ---- conv2 -> BN2 -> + residual -> ReLU ----
    acc2 = conv3x3(hpad_ref, w2_ref)
    res = xpad_ref[pl.ds(Wp + 1, Rc), :]       # re-read x (interior rows) at the add
    out = jnp.maximum(bn_train(acc2, g2_ref[...], be2_ref[...]) + res, 0.0)

    o_ref[pl.ds(0, Rc), :] = out
    o_ref[pl.ds(Rc, Rp - Rc), :] = jnp.zeros((Rp - Rc, Cp), jnp.float32)


def residual_block_pallas(x, params, *, compute_dtype=jnp.float32):
    """x: (N, C, H, W) float32 (PyTorch NCHW). Returns (N, C, H, W) float32.

    compute_dtype: MXU operand dtype for the conv matmuls. f32 is exact;
    jnp.bfloat16 feeds the bf16 MXU path (f32 accumulation, f32 epilogue)."""
    N, C, H, W = x.shape
    Hp, Wp = H + 2, W + 2
    Cp = ((C + 127) // 128) * 128          # lane-dense channel count
    Rp = N * Hp * Wp
    Rc = Rp - (2 * Wp + 2)

    # Wrapper-side layout plumbing (cheap XLA): NCHW -> NHWC, zero-pad channels to Cp
    # and the spatial border by 1, flatten to a (Rp, Cp) padded-coordinate row slab.
    x_nhwc = jnp.transpose(x, (0, 2, 3, 1))
    xpad = jnp.pad(x_nhwc, ((0, 0), (1, 1), (1, 1), (0, Cp - C)))
    xpad = xpad.reshape(Rp, Cp).astype(jnp.float32)

    # Row-validity mask: padded-coordinate row r = n*Hp*Wp + h*Wp + w is a real output
    # location iff h < H and w < W.
    r = jnp.arange(Rc, dtype=jnp.int32)
    q = r % (Hp * Wp)
    maskf = (((q // Wp) < H) & ((q % Wp) < W)).astype(jnp.float32).reshape(Rc, 1)

    def w_taps(w):   # PyTorch OIHW (C,C,3,3) -> (9, Cp, Cp) with [tap, c_in, c_out]
        wt = jnp.transpose(w, (2, 3, 1, 0)).reshape(9, C, C)
        wt = jnp.pad(wt, ((0, 0), (0, Cp - C), (0, Cp - C)))
        return wt.astype(compute_dtype)            # pre-cast MXU operands in wrapper

    def bn_row(v, pad_val):
        return jnp.pad(v, (0, Cp - C), constant_values=pad_val).reshape(1, Cp)

    kernel = functools.partial(residual_block_kernel, N=N, H=H, W=W,
                               compute_dtype=compute_dtype)
    vmem = pl.BlockSpec(memory_space=pltpu.MemorySpace.VMEM)

    # Conv biases b1/b2 are intentionally NOT passed: they are cancelled exactly by
    # the train-mode BN mean subtraction.
    out_flat = pl.pallas_call(
        kernel,
        out_shape=jax.ShapeDtypeStruct((Rp, Cp), jnp.float32),
        in_specs=[vmem] * 8,
        out_specs=vmem,
        scratch_shapes=[pltpu.VMEM((Rp, Cp), jnp.float32)],
        compiler_params=pltpu.CompilerParams(vmem_limit_bytes=32 * 1024 * 1024),
    )(
        xpad, maskf,
        w_taps(params["w1"]), bn_row(params["g1"], 1.0), bn_row(params["be1"], 0.0),
        w_taps(params["w2"]), bn_row(params["g2"], 1.0), bn_row(params["be2"], 0.0),
    )

    out = out_flat.reshape(N, Hp, Wp, Cp)[:, :H, :W, :C]
    return jnp.transpose(out, (0, 3, 1, 2))


# ---------------- pure-JAX reference (PyTorch semantics, for correctness) ----------------
def _conv3x3_ref(x, w, b):
    y = jax.lax.conv_general_dilated(
        x, w, window_strides=(1, 1), padding="SAME",
        dimension_numbers=("NCHW", "OIHW", "NCHW"))
    return y + b[None, :, None, None]


def _bn_train_ref(x, g, be, eps=EPS):
    mean = x.mean(axis=(0, 2, 3), keepdims=True)
    var = ((x - mean) ** 2).mean(axis=(0, 2, 3), keepdims=True)
    return g[None, :, None, None] * (x - mean) / jnp.sqrt(var + eps) + be[None, :, None, None]


def residual_block_ref(x, p):
    h = jnp.maximum(_bn_train_ref(_conv3x3_ref(x, p["w1"], p["b1"]), p["g1"], p["be1"]), 0.0)
    o = _bn_train_ref(_conv3x3_ref(h, p["w2"], p["b2"]), p["g2"], p["be2"]) + x
    return jnp.maximum(o, 0.0)


if __name__ == "__main__":
    # Shapes consistent with CustomModel's residual blocks: 64 channels, 8x8 board.
    N, C, H, W = 2, 64, 8, 8

    key = jax.random.PRNGKey(0)
    ks = jax.random.split(key, 9)

    x = jax.random.normal(ks[0], (N, C, H, W), dtype=jnp.float32)

    params = {
        # conv weights: (out_channels, in_channels, 3, 3), PyTorch OIHW convention
        "w1": 0.1 * jax.random.normal(ks[1], (C, C, 3, 3), dtype=jnp.float32),
        "b1": 0.1 * jax.random.normal(ks[2], (C,), dtype=jnp.float32),
        "w2": 0.1 * jax.random.normal(ks[3], (C, C, 3, 3), dtype=jnp.float32),
        "b2": 0.1 * jax.random.normal(ks[4], (C,), dtype=jnp.float32),
        # BN affine params
        "g1": 1.0 + 0.1 * jax.random.normal(ks[5], (C,), dtype=jnp.float32),
        "be1": 0.1 * jax.random.normal(ks[6], (C,), dtype=jnp.float32),
        "g2": 1.0 + 0.1 * jax.random.normal(ks[7], (C,), dtype=jnp.float32),
        "be2": 0.1 * jax.random.normal(ks[8], (C,), dtype=jnp.float32),
    }

    ref = jax.block_until_ready(residual_block_ref(x, params))

    # f32 MXU path: tight-tolerance check against the PyTorch-semantics reference
    # (the dropped conv bias is mathematically cancelled by train-mode BN).
    out = jax.block_until_ready(residual_block_pallas(x, params, compute_dtype=jnp.float32))
    assert out.shape == (N, C, H, W) and out.dtype == jnp.float32
    if not jnp.allclose(out, ref, rtol=1e-4, atol=1e-4):
        max_err = float(jnp.max(jnp.abs(out - ref)))
        raise AssertionError(f"Pallas (f32) mismatch vs reference, max abs err = {max_err}")

    # bf16-operand / f32-accumulate MXU path (recommended on v5e/v6e/v7x): run it and
    # sanity-check it is numerically in the right ballpark of the f32 reference.
    out_bf16 = jax.block_until_ready(
        residual_block_pallas(x, params, compute_dtype=jnp.bfloat16))
    assert out_bf16.shape == (N, C, H, W) and out_bf16.dtype == jnp.float32
    bf16_err = float(jnp.max(jnp.abs(out_bf16 - ref)))
    if bf16_err > 0.25:
        raise AssertionError(f"Pallas (bf16 matmul) sanity check failed, max abs err = {bf16_err}")

    print("KERNEL_OK")
</pallas_src>

<mosaic_0001>
module attributes {stable_mosaic.version = 11 : i64} {
  func.func @residual_block_kernel(%arg0: memref<200x128xf32, #tpu.memory_space<vmem>>, %arg1: memref<178x1xf32, #tpu.memory_space<vmem>>, %arg2: memref<9x128x128xf32, #tpu.memory_space<vmem>>, %arg3: memref<1x128xf32, #tpu.memory_space<vmem>>, %arg4: memref<1x128xf32, #tpu.memory_space<vmem>>, %arg5: memref<9x128x128xf32, #tpu.memory_space<vmem>>, %arg6: memref<1x128xf32, #tpu.memory_space<vmem>>, %arg7: memref<1x128xf32, #tpu.memory_space<vmem>>, %arg8: memref<200x128xf32, #tpu.memory_space<vmem>>, %arg9: memref<200x128xf32, #tpu.memory_space<vmem>>) attributes {dimension_semantics = [], scalar_prefetch = 0 : i64, scratch_operands = 1 : i64, tpu.core_type = #tpu.core_type<tc>} {
    %c0 = arith.constant 0 : index
    %c0_0 = arith.constant 0 : index
    %0 = vector.load %arg1[%c0, %c0_0] : memref<178x1xf32, #tpu.memory_space<vmem>>, vector<178x1xf32>
    %c0_1 = arith.constant 0 : index
    %c0_2 = arith.constant 0 : index
    %1 = vector.load %arg0[%c0_1, %c0_2] : memref<200x128xf32, #tpu.memory_space<vmem>>, vector<178x128xf32>
    %c0_3 = arith.constant 0 : index
    %c0_4 = arith.constant 0 : index
    %c0_5 = arith.constant 0 : index
    %2 = vector.load %arg2[%c0_3, %c0_4, %c0_5] : memref<9x128x128xf32, #tpu.memory_space<vmem>>, vector<1x128x128xf32>
    %3 = vector.shape_cast %2 : vector<1x128x128xf32> to vector<128x128xf32>
    %cst = arith.constant dense<0.000000e+00> : vector<178x128xf32>
    %4 = tpu.matmul %1, %3, %cst {dimension_numbers = #tpu.dot_dimension_numbers<[1], [0], [0], [1], [0, 0, 1, 1], [], []>} : vector<178x128xf32>, vector<128x128xf32>, vector<178x128xf32> -> vector<178x128xf32>
    %c1 = arith.constant 1 : index
    %c0_6 = arith.constant 0 : index
    %5 = vector.load %arg0[%c1, %c0_6] : memref<200x128xf32, #tpu.memory_space<vmem>>, vector<178x128xf32>
    %c1_7 = arith.constant 1 : index
    %c0_8 = arith.constant 0 : index
    %c0_9 = arith.constant 0 : index
    %6 = vector.load %arg2[%c1_7, %c0_8, %c0_9] : memref<9x128x128xf32, #tpu.memory_space<vmem>>, vector<1x128x128xf32>
    %7 = vector.shape_cast %6 : vector<1x128x128xf32> to vector<128x128xf32>
    %cst_10 = arith.constant dense<0.000000e+00> : vector<178x128xf32>
    %8 = tpu.matmul %5, %7, %cst_10 {dimension_numbers = #tpu.dot_dimension_numbers<[1], [0], [0], [1], [0, 0, 1, 1], [], []>} : vector<178x128xf32>, vector<128x128xf32>, vector<178x128xf32> -> vector<178x128xf32>
    %9 = arith.addf %4, %8 : vector<178x128xf32>
    %c2 = arith.constant 2 : index
    %c0_11 = arith.constant 0 : index
    %10 = vector.load %arg0[%c2, %c0_11] : memref<200x128xf32, #tpu.memory_space<vmem>>, vector<178x128xf32>
    %c2_12 = arith.constant 2 : index
    %c0_13 = arith.constant 0 : index
    %c0_14 = arith.constant 0 : index
    %11 = vector.load %arg2[%c2_12, %c0_13, %c0_14] : memref<9x128x128xf32, #tpu.memory_space<vmem>>, vector<1x128x128xf32>
    %12 = vector.shape_cast %11 : vector<1x128x128xf32> to vector<128x128xf32>
    %cst_15 = arith.constant dense<0.000000e+00> : vector<178x128xf32>
    %13 = tpu.matmul %10, %12, %cst_15 {dimension_numbers = #tpu.dot_dimension_numbers<[1], [0], [0], [1], [0, 0, 1, 1], [], []>} : vector<178x128xf32>, vector<128x128xf32>, vector<178x128xf32> -> vector<178x128xf32>
    %14 = arith.addf %9, %13 : vector<178x128xf32>
    %c10 = arith.constant 10 : index
    %c0_16 = arith.constant 0 : index
    %15 = vector.load %arg0[%c10, %c0_16] : memref<200x128xf32, #tpu.memory_space<vmem>>, vector<178x128xf32>
    %c3 = arith.constant 3 : index
    %c0_17 = arith.constant 0 : index
    %c0_18 = arith.constant 0 : index
    %16 = vector.load %arg2[%c3, %c0_17, %c0_18] : memref<9x128x128xf32, #tpu.memory_space<vmem>>, vector<1x128x128xf32>
    %17 = vector.shape_cast %16 : vector<1x128x128xf32> to vector<128x128xf32>
    %cst_19 = arith.constant dense<0.000000e+00> : vector<178x128xf32>
    %18 = tpu.matmul %15, %17, %cst_19 {dimension_numbers = #tpu.dot_dimension_numbers<[1], [0], [0], [1], [0, 0, 1, 1], [], []>} : vector<178x128xf32>, vector<128x128xf32>, vector<178x128xf32> -> vector<178x128xf32>
    %19 = arith.addf %14, %18 : vector<178x128xf32>
    %c11 = arith.constant 11 : index
    %c0_20 = arith.constant 0 : index
    %20 = vector.load %arg0[%c11, %c0_20] : memref<200x128xf32, #tpu.memory_space<vmem>>, vector<178x128xf32>
    %c4 = arith.constant 4 : index
    %c0_21 = arith.constant 0 : index
    %c0_22 = arith.constant 0 : index
    %21 = vector.load %arg2[%c4, %c0_21, %c0_22] : memref<9x128x128xf32, #tpu.memory_space<vmem>>, vector<1x128x128xf32>
    %22 = vector.shape_cast %21 : vector<1x128x128xf32> to vector<128x128xf32>
    %cst_23 = arith.constant dense<0.000000e+00> : vector<178x128xf32>
    %23 = tpu.matmul %20, %22, %cst_23 {dimension_numbers = #tpu.dot_dimension_numbers<[1], [0], [0], [1], [0, 0, 1, 1], [], []>} : vector<178x128xf32>, vector<128x128xf32>, vector<178x128xf32> -> vector<178x128xf32>
    %24 = arith.addf %19, %23 : vector<178x128xf32>
    %c12 = arith.constant 12 : index
    %c0_24 = arith.constant 0 : index
    %25 = vector.load %arg0[%c12, %c0_24] : memref<200x128xf32, #tpu.memory_space<vmem>>, vector<178x128xf32>
    %c5 = arith.constant 5 : index
    %c0_25 = arith.constant 0 : index
    %c0_26 = arith.constant 0 : index
    %26 = vector.load %arg2[%c5, %c0_25, %c0_26] : memref<9x128x128xf32, #tpu.memory_space<vmem>>, vector<1x128x128xf32>
    %27 = vector.shape_cast %26 : vector<1x128x128xf32> to vector<128x128xf32>
    %cst_27 = arith.constant dense<0.000000e+00> : vector<178x128xf32>
    %28 = tpu.matmul %25, %27, %cst_27 {dimension_numbers = #tpu.dot_dimension_numbers<[1], [0], [0], [1], [0, 0, 1, 1], [], []>} : vector<178x128xf32>, vector<128x128xf32>, vector<178x128xf32> -> vector<178x128xf32>
    %29 = arith.addf %24, %28 : vector<178x128xf32>
    %c20 = arith.constant 20 : index
    %c0_28 = arith.constant 0 : index
    %30 = vector.load %arg0[%c20, %c0_28] : memref<200x128xf32, #tpu.memory_space<vmem>>, vector<178x128xf32>
    %c6 = arith.constant 6 : index
    %c0_29 = arith.constant 0 : index
    %c0_30 = arith.constant 0 : index
    %31 = vector.load %arg2[%c6, %c0_29, %c0_30] : memref<9x128x128xf32, #tpu.memory_space<vmem>>, vector<1x128x128xf32>
    %32 = vector.shape_cast %31 : vector<1x128x128xf32> to vector<128x128xf32>
    %cst_31 = arith.constant dense<0.000000e+00> : vector<178x128xf32>
    %33 = tpu.matmul %30, %32, %cst_31 {dimension_numbers = #tpu.dot_dimension_numbers<[1], [0], [0], [1], [0, 0, 1, 1], [], []>} : vector<178x128xf32>, vector<128x128xf32>, vector<178x128xf32> -> vector<178x128xf32>
    %34 = arith.addf %29, %33 : vector<178x128xf32>
    %c21 = arith.constant 21 : index
    %c0_32 = arith.constant 0 : index
    %35 = vector.load %arg0[%c21, %c0_32] : memref<200x128xf32, #tpu.memory_space<vmem>>, vector<178x128xf32>
    %c7 = arith.constant 7 : index
    %c0_33 = arith.constant 0 : index
    %c0_34 = arith.constant 0 : index
    %36 = vector.load %arg2[%c7, %c0_33, %c0_34] : memref<9x128x128xf32, #tpu.memory_space<vmem>>, vector<1x128x128xf32>
    %37 = vector.shape_cast %36 : vector<1x128x128xf32> to vector<128x128xf32>
    %cst_35 = arith.constant dense<0.000000e+00> : vector<178x128xf32>
    %38 = tpu.matmul %35, %37, %cst_35 {dimension_numbers = #tpu.dot_dimension_numbers<[1], [0], [0], [1], [0, 0, 1, 1], [], []>} : vector<178x128xf32>, vector<128x128xf32>, vector<178x128xf32> -> vector<178x128xf32>
    %39 = arith.addf %34, %38 : vector<178x128xf32>
    %c22 = arith.constant 22 : index
    %c0_36 = arith.constant 0 : index
    %40 = vector.load %arg0[%c22, %c0_36] : memref<200x128xf32, #tpu.memory_space<vmem>>, vector<178x128xf32>
    %c8 = arith.constant 8 : index
    %c0_37 = arith.constant 0 : index
    %c0_38 = arith.constant 0 : index
    %41 = vector.load %arg2[%c8, %c0_37, %c0_38] : memref<9x128x128xf32, #tpu.memory_space<vmem>>, vector<1x128x128xf32>
    %42 = vector.shape_cast %41 : vector<1x128x128xf32> to vector<128x128xf32>
    %cst_39 = arith.constant dense<0.000000e+00> : vector<178x128xf32>
    %43 = tpu.matmul %40, %42, %cst_39 {dimension_numbers = #tpu.dot_dimension_numbers<[1], [0], [0], [1], [0, 0, 1, 1], [], []>} : vector<178x128xf32>, vector<128x128xf32>, vector<178x128xf32> -> vector<178x128xf32>
    %44 = arith.addf %39, %43 : vector<178x128xf32>
    %c0_40 = arith.constant 0 : index
    %c0_41 = arith.constant 0 : index
    %45 = vector.load %arg3[%c0_40, %c0_41] : memref<1x128xf32, #tpu.memory_space<vmem>>, vector<1x128xf32>
    %c0_42 = arith.constant 0 : index
    %c0_43 = arith.constant 0 : index
    %46 = vector.load %arg4[%c0_42, %c0_43] : memref<1x128xf32, #tpu.memory_space<vmem>>, vector<1x128xf32>
    %47 = vector.broadcast %0 : vector<178x1xf32> to vector<178x128xf32>
    %48 = arith.mulf %44, %47 : vector<178x128xf32>
    %cst_44 = arith.constant dense<0.000000e+00> : vector<128xf32>
    %49 = vector.multi_reduction <add>, %48, %cst_44 [0] : vector<178x128xf32> to vector<128xf32>
    %50 = vector.shape_cast %49 : vector<128xf32> to vector<1x128xf32>
    %cst_45 = arith.constant 7.812500e-03 : f32
    %51 = vector.broadcast %cst_45 : f32 to vector<1x128xf32>
    %52 = arith.mulf %50, %51 : vector<1x128xf32>
    %53 = vector.broadcast %52 : vector<1x128xf32> to vector<178x128xf32>
    %54 = arith.subf %44, %53 : vector<178x128xf32>
    %55 = vector.broadcast %0 : vector<178x1xf32> to vector<178x128xf32>
    %56 = arith.mulf %54, %55 : vector<178x128xf32>
    %57 = arith.mulf %56, %56 : vector<178x128xf32>
    %cst_46 = arith.constant dense<0.000000e+00> : vector<128xf32>
    %58 = vector.multi_reduction <add>, %57, %cst_46 [0] : vector<178x128xf32> to vector<128xf32>
    %59 = vector.shape_cast %58 : vector<128xf32> to vector<1x128xf32>
    %cst_47 = arith.constant 7.812500e-03 : f32
    %60 = vector.broadcast %cst_47 : f32 to vector<1x128xf32>
    %61 = arith.mulf %59, %60 : vector<1x128xf32>
    %62 = vector.broadcast %45 : vector<1x128xf32> to vector<178x128xf32>
    %63 = arith.mulf %62, %56 : vector<178x128xf32>
    %cst_48 = arith.constant 9.99999974E-6 : f32
    %64 = vector.broadcast %cst_48 : f32 to vector<1x128xf32>
    %65 = arith.addf %61, %64 : vector<1x128xf32>
    %66 = math.rsqrt %65 : vector<1x128xf32>
    %67 = vector.broadcast %66 : vector<1x128xf32> to vector<178x128xf32>
    %68 = arith.mulf %63, %67 : vector<178x128xf32>
    %69 = vector.broadcast %46 : vector<1x128xf32> to vector<178x128xf32>
    %70 = arith.addf %68, %69 : vector<178x128xf32>
    %cst_49 = arith.constant 0.000000e+00 : f32
    %71 = vector.broadcast %cst_49 : f32 to vector<178x128xf32>
    %72 = arith.maximumf %70, %71 : vector<178x128xf32>
    %73 = vector.broadcast %0 : vector<178x1xf32> to vector<178x128xf32>
    %74 = arith.mulf %72, %73 : vector<178x128xf32>
    %cst_50 = arith.constant 0.000000e+00 : f32
    %75 = vector.broadcast %cst_50 : f32 to vector<11x128xf32>
    %c0_51 = arith.constant 0 : index
    %c0_52 = arith.constant 0 : index
    %76 = vector.load %arg9[%c0_51, %c0_52] : memref<200x128xf32, #tpu.memory_space<vmem>>, vector<11x128xf32>
    tpu.vector_store %arg9[%c0_51, %c0_52], %75 {strides = array<i32>} : memref<200x128xf32, #tpu.memory_space<vmem>>, vector<11x128xf32>,
    %cst_53 = arith.constant 0.000000e+00 : f32
    %77 = vector.broadcast %cst_53 : f32 to vector<11x128xf32>
    %c189 = arith.constant 189 : index
    %c0_54 = arith.constant 0 : index
    %78 = vector.load %arg9[%c189, %c0_54] : memref<200x128xf32, #tpu.memory_space<vmem>>, vector<11x128xf32>
    tpu.vector_store %arg9[%c189, %c0_54], %77 {strides = array<i32>} : memref<200x128xf32, #tpu.memory_space<vmem>>, vector<11x128xf32>,
    %c11_55 = arith.constant 11 : index
    %c0_56 = arith.constant 0 : index
    %79 = vector.load %arg9[%c11_55, %c0_56] : memref<200x128xf32, #tpu.memory_space<vmem>>, vector<178x128xf32>
    tpu.vector_store %arg9[%c11_55, %c0_56], %74 {strides = array<i32>} : memref<200x128xf32, #tpu.memory_space<vmem>>, vector<178x128xf32>,
    %c0_57 = arith.constant 0 : index
    %c0_58 = arith.constant 0 : index
    %80 = vector.load %arg9[%c0_57, %c0_58] : memref<200x128xf32, #tpu.memory_space<vmem>>, vector<178x128xf32>
    %c0_59 = arith.constant 0 : index
    %c0_60 = arith.constant 0 : index
    %c0_61 = arith.constant 0 : index
    %81 = vector.load %arg5[%c0_59, %c0_60, %c0_61] : memref<9x128x128xf32, #tpu.memory_space<vmem>>, vector<1x128x128xf32>
    %82 = vector.shape_cast %81 : vector<1x128x128xf32> to vector<128x128xf32>
    %cst_62 = arith.constant dense<0.000000e+00> : vector<178x128xf32>
    %83 = tpu.matmul %80, %82, %cst_62 {dimension_numbers = #tpu.dot_dimension_numbers<[1], [0], [0], [1], [0, 0, 1, 1], [], []>} : vector<178x128xf32>, vector<128x128xf32>, vector<178x128xf32> -> vector<178x128xf32>
    %c1_63 = arith.constant 1 : index
    %c0_64 = arith.constant 0 : index
    %84 = vector.load %arg9[%c1_63, %c0_64] : memref<200x128xf32, #tpu.memory_space<vmem>>, vector<178x128xf32>
    %c1_65 = arith.constant 1 : index
    %c0_66 = arith.constant 0 : index
    %c0_67 = arith.constant 0 : index
    %85 = vector.load %arg5[%c1_65, %c0_66, %c0_67] : memref<9x128x128xf32, #tpu.memory_space<vmem>>, vector<1x128x128xf32>
    %86 = vector.shape_cast %85 : vector<1x128x128xf32> to vector<128x128xf32>
    %cst_68 = arith.constant dense<0.000000e+00> : vector<178x128xf32>
    %87 = tpu.matmul %84, %86, %cst_68 {dimension_numbers = #tpu.dot_dimension_numbers<[1], [0], [0], [1], [0, 0, 1, 1], [], []>} : vector<178x128xf32>, vector<128x128xf32>, vector<178x128xf32> -> vector<178x128xf32>
    %88 = arith.addf %83, %87 : vector<178x128xf32>
    %c2_69 = arith.constant 2 : index
    %c0_70 = arith.constant 0 : index
    %89 = vector.load %arg9[%c2_69, %c0_70] : memref<200x128xf32, #tpu.memory_space<vmem>>, vector<178x128xf32>
    %c2_71 = arith.constant 2 : index
    %c0_72 = arith.constant 0 : index
    %c0_73 = arith.constant 0 : index
    %90 = vector.load %arg5[%c2_71, %c0_72, %c0_73] : memref<9x128x128xf32, #tpu.memory_space<vmem>>, vector<1x128x128xf32>
    %91 = vector.shape_cast %90 : vector<1x128x128xf32> to vector<128x128xf32>
    %cst_74 = arith.constant dense<0.000000e+00> : vector<178x128xf32>
    %92 = tpu.matmul %89, %91, %cst_74 {dimension_numbers = #tpu.dot_dimension_numbers<[1], [0], [0], [1], [0, 0, 1, 1], [], []>} : vector<178x128xf32>, vector<128x128xf32>, vector<178x128xf32> -> vector<178x128xf32>
    %93 = arith.addf %88, %92 : vector<178x128xf32>
    %c10_75 = arith.constant 10 : index
    %c0_76 = arith.constant 0 : index
    %94 = vector.load %arg9[%c10_75, %c0_76] : memref<200x128xf32, #tpu.memory_space<vmem>>, vector<178x128xf32>
    %c3_77 = arith.constant 3 : index
    %c0_78 = arith.constant 0 : index
    %c0_79 = arith.constant 0 : index
    %95 = vector.load %arg5[%c3_77, %c0_78, %c0_79] : memref<9x128x128xf32, #tpu.memory_space<vmem>>, vector<1x128x128xf32>
    %96 = vector.shape_cast %95 : vector<1x128x128xf32> to vector<128x128xf32>
    %cst_80 = arith.constant dense<0.000000e+00> : vector<178x128xf32>
    %97 = tpu.matmul %94, %96, %cst_80 {dimension_numbers = #tpu.dot_dimension_numbers<[1], [0], [0], [1], [0, 0, 1, 1], [], []>} : vector<178x128xf32>, vector<128x128xf32>, vector<178x128xf32> -> vector<178x128xf32>
    %98 = arith.addf %93, %97 : vector<178x128xf32>
    %c11_81 = arith.constant 11 : index
    %c0_82 = arith.constant 0 : index
    %99 = vector.load %arg9[%c11_81, %c0_82] : memref<200x128xf32, #tpu.memory_space<vmem>>, vector<178x128xf32>
    %c4_83 = arith.constant 4 : index
    %c0_84 = arith.constant 0 : index
    %c0_85 = arith.constant 0 : index
    %100 = vector.load %arg5[%c4_83, %c0_84, %c0_85] : memref<9x128x128xf32, #tpu.memory_space<vmem>>, vector<1x128x128xf32>
    %101 = vector.shape_cast %100 : vector<1x128x128xf32> to vector<128x128xf32>
    %cst_86 = arith.constant dense<0.000000e+00> : vector<178x128xf32>
    %102 = tpu.matmul %99, %101, %cst_86 {dimension_numbers = #tpu.dot_dimension_numbers<[1], [0], [0], [1], [0, 0, 1, 1], [], []>} : vector<178x128xf32>, vector<128x128xf32>, vector<178x128xf32> -> vector<178x128xf32>
    %103 = arith.addf %98, %102 : vector<178x128xf32>
    %c12_87 = arith.constant 12 : index
    %c0_88 = arith.constant 0 : index
    %104 = vector.load %arg9[%c12_87, %c0_88] : memref<200x128xf32, #tpu.memory_space<vmem>>, vector<178x128xf32>
    %c5_89 = arith.constant 5 : index
    %c0_90 = arith.constant 0 : index
    %c0_91 = arith.constant 0 : index
    %105 = vector.load %arg5[%c5_89, %c0_90, %c0_91] : memref<9x128x128xf32, #tpu.memory_space<vmem>>, vector<1x128x128xf32>
    %106 = vector.shape_cast %105 : vector<1x128x128xf32> to vector<128x128xf32>
    %cst_92 = arith.constant dense<0.000000e+00> : vector<178x128xf32>
    %107 = tpu.matmul %104, %106, %cst_92 {dimension_numbers = #tpu.dot_dimension_numbers<[1], [0], [0], [1], [0, 0, 1, 1], [], []>} : vector<178x128xf32>, vector<128x128xf32>, vector<178x128xf32> -> vector<178x128xf32>
    %108 = arith.addf %103, %107 : vector<178x128xf32>
    %c20_93 = arith.constant 20 : index
    %c0_94 = arith.constant 0 : index
    %109 = vector.load %arg9[%c20_93, %c0_94] : memref<200x128xf32, #tpu.memory_space<vmem>>, vector<178x128xf32>
    %c6_95 = arith.constant 6 : index
    %c0_96 = arith.constant 0 : index
    %c0_97 = arith.constant 0 : index
    %110 = vector.load %arg5[%c6_95, %c0_96, %c0_97] : memref<9x128x128xf32, #tpu.memory_space<vmem>>, vector<1x128x128xf32>
    %111 = vector.shape_cast %110 : vector<1x128x128xf32> to vector<128x128xf32>
    %cst_98 = arith.constant dense<0.000000e+00> : vector<178x128xf32>
    %112 = tpu.matmul %109, %111, %cst_98 {dimension_numbers = #tpu.dot_dimension_numbers<[1], [0], [0], [1], [0, 0, 1, 1], [], []>} : vector<178x128xf32>, vector<128x128xf32>, vector<178x128xf32> -> vector<178x128xf32>
    %113 = arith.addf %108, %112 : vector<178x128xf32>
    %c21_99 = arith.constant 21 : index
    %c0_100 = arith.constant 0 : index
    %114 = vector.load %arg9[%c21_99, %c0_100] : memref<200x128xf32, #tpu.memory_space<vmem>>, vector<178x128xf32>
    %c7_101 = arith.constant 7 : index
    %c0_102 = arith.constant 0 : index
    %c0_103 = arith.constant 0 : index
    %115 = vector.load %arg5[%c7_101, %c0_102, %c0_103] : memref<9x128x128xf32, #tpu.memory_space<vmem>>, vector<1x128x128xf32>
    %116 = vector.shape_cast %115 : vector<1x128x128xf32> to vector<128x128xf32>
    %cst_104 = arith.constant dense<0.000000e+00> : vector<178x128xf32>
    %117 = tpu.matmul %114, %116, %cst_104 {dimension_numbers = #tpu.dot_dimension_numbers<[1], [0], [0], [1], [0, 0, 1, 1], [], []>} : vector<178x128xf32>, vector<128x128xf32>, vector<178x128xf32> -> vector<178x128xf32>
    %118 = arith.addf %113, %117 : vector<178x128xf32>
    %c22_105 = arith.constant 22 : index
    %c0_106 = arith.constant 0 : index
    %119 = vector.load %arg9[%c22_105, %c0_106] : memref<200x128xf32, #tpu.memory_space<vmem>>, vector<178x128xf32>
    %c8_107 = arith.constant 8 : index
    %c0_108 = arith.constant 0 : index
    %c0_109 = arith.constant 0 : index
    %120 = vector.load %arg5[%c8_107, %c0_108, %c0_109] : memref<9x128x128xf32, #tpu.memory_space<vmem>>, vector<1x128x128xf32>
    %121 = vector.shape_cast %120 : vector<1x128x128xf32> to vector<128x128xf32>
    %cst_110 = arith.constant dense<0.000000e+00> : vector<178x128xf32>
    %122 = tpu.matmul %119, %121, %cst_110 {dimension_numbers = #tpu.dot_dimension_numbers<[1], [0], [0], [1], [0, 0, 1, 1], [], []>} : vector<178x128xf32>, vector<128x128xf32>, vector<178x128xf32> -> vector<178x128xf32>
    %123 = arith.addf %118, %122 : vector<178x128xf32>
    %c11_111 = arith.constant 11 : index
    %c0_112 = arith.constant 0 : index
    %124 = vector.load %arg0[%c11_111, %c0_112] : memref<200x128xf32, #tpu.memory_space<vmem>>, vector<178x128xf32>
    %c0_113 = arith.constant 0 : index
    %c0_114 = arith.constant 0 : index
    %125 = vector.load %arg6[%c0_113, %c0_114] : memref<1x128xf32, #tpu.memory_space<vmem>>, vector<1x128xf32>
    %c0_115 = arith.constant 0 : index
    %c0_116 = arith.constant 0 : index
    %126 = vector.load %arg7[%c0_115, %c0_116] : memref<1x128xf32, #tpu.memory_space<vmem>>, vector<1x128xf32>
    %127 = vector.broadcast %0 : vector<178x1xf32> to vector<178x128xf32>
    %128 = arith.mulf %123, %127 : vector<178x128xf32>
    %cst_117 = arith.constant dense<0.000000e+00> : vector<128xf32>
    %129 = vector.multi_reduction <add>, %128, %cst_117 [0] : vector<178x128xf32> to vector<128xf32>
    %130 = vector.shape_cast %129 : vector<128xf32> to vector<1x128xf32>
    %cst_118 = arith.constant 7.812500e-03 : f32
    %131 = vector.broadcast %cst_118 : f32 to vector<1x128xf32>
    %132 = arith.mulf %130, %131 : vector<1x128xf32>
    %133 = vector.broadcast %132 : vector<1x128xf32> to vector<178x128xf32>
    %134 = arith.subf %123, %133 : vector<178x128xf32>
    %135 = vector.broadcast %0 : vector<178x1xf32> to vector<178x128xf32>
    %136 = arith.mulf %134, %135 : vector<178x128xf32>
    %137 = arith.mulf %136, %136 : vector<178x128xf32>
    %cst_119 = arith.constant dense<0.000000e+00> : vector<128xf32>
    %138 = vector.multi_reduction <add>, %137, %cst_119 [0] : vector<178x128xf32> to vector<128xf32>
    %139 = vector.shape_cast %138 : vector<128xf32> to vector<1x128xf32>
    %cst_120 = arith.constant 7.812500e-03 : f32
    %140 = vector.broadcast %cst_120 : f32 to vector<1x128xf32>
    %141 = arith.mulf %139, %140 : vector<1x128xf32>
    %142 = vector.broadcast %125 : vector<1x128xf32> to vector<178x128xf32>
    %143 = arith.mulf %142, %136 : vector<178x128xf32>
    %cst_121 = arith.constant 9.99999974E-6 : f32
    %144 = vector.broadcast %cst_121 : f32 to vector<1x128xf32>
    %145 = arith.addf %141, %144 : vector<1x128xf32>
    %146 = math.rsqrt %145 : vector<1x128xf32>
    %147 = vector.broadcast %146 : vector<1x128xf32> to vector<178x128xf32>
    %148 = arith.mulf %143, %147 : vector<178x128xf32>
    %149 = vector.broadcast %126 : vector<1x128xf32> to vector<178x128xf32>
    %150 = arith.addf %148, %149 : vector<178x128xf32>
    %151 = arith.addf %150, %124 : vector<178x128xf32>
    %cst_122 = arith.constant 0.000000e+00 : f32
    %152 = vector.broadcast %cst_122 : f32 to vector<178x128xf32>
    %153 = arith.maximumf %151, %152 : vector<178x128xf32>
    %c0_123 = arith.constant 0 : index
    %c0_124 = arith.constant 0 : index
    %154 = vector.load %arg8[%c0_123, %c0_124] : memref<200x128xf32, #tpu.memory_space<vmem>>, vector<178x128xf32>
    tpu.vector_store %arg8[%c0_123, %c0_124], %153 {strides = array<i32>} : memref<200x128xf32, #tpu.memory_space<vmem>>, vector<178x128xf32>,
    %cst_125 = arith.constant 0.000000e+00 : f32
    %155 = vector.broadcast %cst_125 : f32 to vector<22x128xf32>
    %c178 = arith.constant 178 : index
    %c0_126 = arith.constant 0 : index
    %156 = vector.load %arg8[%c178, %c0_126] : memref<200x128xf32, #tpu.memory_space<vmem>>, vector<22x128xf32>
    tpu.vector_store %arg8[%c178, %c0_126], %155 {strides = array<i32>} : memref<200x128xf32, #tpu.memory_space<vmem>>, vector<22x128xf32>,
    return
  }
}

</mosaic_0001>

<llo_original>
// kernel: tpu_custom_call.1
$region0: #{tpu_custom_call.1}
  #allocation0 [shape = 'u32[]', space=smem, size = 0x4, offset = 0x4, fixed_abs, tag = 'smem constant byte address 0x4 - core index']
  #allocation1 [shape = 'u32[144,128]{1,0:T(1,128)}', space=vmem, size = 0x12000, scoped, tag = 'internal scratch']
  #allocation2 [shape = 'f32[200,128]{1,0:T(8,128)}', space=vmem, size = 0x19000, scoped, tag = 'scratch operand']
  %s0 = inlined_call_operand.hbm [shape: f32[200,128], index: 0, kind: input, shape index: {}]
  %s1 = inlined_call_operand.vmem [shape: f32[178,1], index: 1, kind: input, shape index: {}]
  %s2 = inlined_call_operand.hbm [shape: f32[9,128,128], index: 2, kind: input, shape index: {}]
  %s3 = inlined_call_operand.vmem [shape: f32[1,128], index: 3, kind: input, shape index: {}]
  %s4 = inlined_call_operand.vmem [shape: f32[1,128], index: 4, kind: input, shape index: {}]
  %s5 = inlined_call_operand.hbm [shape: f32[9,128,128], index: 5, kind: input, shape index: {}]
  %s6 = inlined_call_operand.vmem [shape: f32[1,128], index: 6, kind: input, shape index: {}]
  %s7 = inlined_call_operand.vmem [shape: f32[1,128], index: 7, kind: input, shape index: {}]
  %s8 = inlined_call_operand.hbm [shape: f32[200,128], index: 8, kind: output, shape index: {}]
  %s9 = sld [smem:[#allocation0]]
  $region54: #{tpu_custom_call.1} parent=0
    _
  %s11 = ssub.s32 1, %s9
  %s12 = scalar_select 0, %s11, %s9
  $region1: #{tpu_custom_call.1} parent=0
    #allocation3 [shape = 'u8[102400]{0}', space=vmem, size = 0x19000, scoped, tag = 'input window, operand 0, single buffered']
    #allocation4 [shape = 's32[1]{0}', space=sflag, size = 0x4, scoped, tag = 'scoped memory for tpu_custom_call.1']
    #allocation5 [shape = 's32[1]{0}', space=sflag, size = 0x4, scoped, tag = 'scoped memory for tpu_custom_call.1']
    #allocation6 [shape = 'u8[589824]{0}', space=vmem, size = 0x90000, scoped, tag = 'input window, operand 2, single buffered']
    #allocation7 [shape = 's32[1]{0}', space=sflag, size = 0x4, scoped, tag = 'scoped memory for tpu_custom_call.1']
    #allocation8 [shape = 'u8[589824]{0}', space=vmem, size = 0x90000, scoped, tag = 'input window, operand 5, single buffered']
    #allocation9 [shape = 'u8[102400]{0}', space=vmem, size = 0x19000, scoped, tag = 'output window, operand 0, single buffered']
    %13 = vsyncpa [#allocation4], 0
    %14 = vsyncpa [#allocation7], 0
    %15 = vsyncpa [#allocation5], 0
    // Predicated region
    $region2: #{tpu_custom_call.1} parent=1 // pred_check
      _
    $region3: #{tpu_custom_call.1} parent=1 // pred_check_branch
      %17 = sbr.rel (0) target = $region5
    $region4: #{tpu_custom_call.1} parent=1 // pred_region
      %s19 = ssub.s32 3200, 3200
      %20 = vsyncadd [#allocation4], %s19
      %s21 = sshll.u32 [#allocation3], 4
      %s22 = int_to_ptr.vmem [resolvable:$true] %s21
      %27 = dma.hbm_to_vmem [thread:$0]  %s0, 3200, %s22, [#allocation4], 128, 128, 8
    $region5: #{tpu_custom_call.1} parent=1 // pred_fallthru
      _
    // Predicated region
    $region6: #{tpu_custom_call.1} parent=1 // pred_check
      _
    $region7: #{tpu_custom_call.1} parent=1 // pred_check_branch
      %29 = sbr.rel (0) target = $region9
    $region8: #{tpu_custom_call.1} parent=1 // pred_region
      _
    $region9: #{tpu_custom_call.1} parent=1 // pred_fallthru
      _
    // Predicated region
    $region10: #{tpu_custom_call.1} parent=1 // pred_check
      _
    $region11: #{tpu_custom_call.1} parent=1 // pred_check_branch
      %31 = sbr.rel (0) target = $region13
    $region12: #{tpu_custom_call.1} parent=1 // pred_region
      %s33 = ssub.s32 18432, 18432
      %34 = vsyncadd [#allocation7], %s33
      %s35 = sshll.u32 [#allocation6], 4
      %s36 = int_to_ptr.vmem [resolvable:$true] %s35
      %41 = dma.hbm_to_vmem [thread:$0]  %s2, 18432, %s36, [#allocation7], 128, 128, 8
    $region13: #{tpu_custom_call.1} parent=1 // pred_fallthru
      _
    // Predicated region
    $region14: #{tpu_custom_call.1} parent=1 // pred_check
      _
    $region15: #{tpu_custom_call.1} parent=1 // pred_check_branch
      %43 = sbr.rel (0) target = $region17
    $region16: #{tpu_custom_call.1} parent=1 // pred_region
      _
    $region17: #{tpu_custom_call.1} parent=1 // pred_fallthru
      _
    // Predicated region
    $region18: #{tpu_custom_call.1} parent=1 // pred_check
      _
    $region19: #{tpu_custom_call.1} parent=1 // pred_check_branch
      %45 = sbr.rel (0) target = $region21
    $region20: #{tpu_custom_call.1} parent=1 // pred_region
      _
    $region21: #{tpu_custom_call.1} parent=1 // pred_fallthru
      _
    // Predicated region
    $region22: #{tpu_custom_call.1} parent=1 // pred_check
      _
    $region23: #{tpu_custom_call.1} parent=1 // pred_check_branch
      %47 = sbr.rel (0) target = $region25
    $region24: #{tpu_custom_call.1} parent=1 // pred_region
      %s49 = ssub.s32 18432, 18432
      %50 = vsyncadd [#allocation7], %s49
      %s51 = sshll.u32 [#allocation8], 4
      %s52 = int_to_ptr.vmem [resolvable:$true] %s51
      %57 = dma.hbm_to_vmem [thread:$0]  %s5, 18432, %s52, [#allocation7], 128, 128, 8
    $region25: #{tpu_custom_call.1} parent=1 // pred_fallthru
      _
    // Predicated region
    $region26: #{tpu_custom_call.1} parent=1 // pred_check
      _
    $region27: #{tpu_custom_call.1} parent=1 // pred_check_branch
      %59 = sbr.rel (0) target = $region29
    $region28: #{tpu_custom_call.1} parent=1 // pred_region
      _
    $region29: #{tpu_custom_call.1} parent=1 // pred_fallthru
      _
    // Predicated region
    $region30: #{tpu_custom_call.1} parent=1 // pred_check
      _
    $region31: #{tpu_custom_call.1} parent=1 // pred_check_branch
      %61 = sbr.rel (0) target = $region33
    $region32: #{tpu_custom_call.1} parent=1 // pred_region
      _
    $region33: #{tpu_custom_call.1} parent=1 // pred_fallthru
      _
    // Predicated region
    $region34: #{tpu_custom_call.1} parent=1 // pred_check
      _
    $region35: #{tpu_custom_call.1} parent=1 // pred_check_branch
      %63 = sbr.rel (0) target = $region37
    $region36: #{tpu_custom_call.1} parent=1 // pred_region
      %64 = dma.done [#allocation4], 3200
    $region37: #{tpu_custom_call.1} parent=1 // pred_fallthru
      _
    // Predicated region
    $region38: #{tpu_custom_call.1} parent=1 // pred_check
      _
    $region39: #{tpu_custom_call.1} parent=1 // pred_check_branch
      %66 = sbr.rel (0) target = $region41
    $region40: #{tpu_custom_call.1} parent=1 // pred_region
      %67 = dma.done [#allocation7], 18432
    $region41: #{tpu_custom_call.1} parent=1 // pred_fallthru
      _
    // Predicated region
    $region42: #{tpu_custom_call.1} parent=1 // pred_check
      _
    $region43: #{tpu_custom_call.1} parent=1 // pred_check_branch
      %69 = sbr.rel (0) target = $region45
    $region44: #{tpu_custom_call.1} parent=1 // pred_region
      %70 = dma.done [#allocation7], 18432
    $region45: #{tpu_custom_call.1} parent=1 // pred_fallthru
      _
    %v71 = vld [vmem:[%s1] sm:$0xff]
    %v72 = vld [vmem:[%s1 + $0x8] sm:$0xff]
    %v73 = vld [vmem:[%s1 + $0x10] sm:$0xff]
    %v74 = vld [vmem:[%s1 + $0x18] sm:$0xff]
    %v75 = vld [vmem:[%s1 + $0x20] sm:$0xff]
    %v76 = vld [vmem:[%s1 + $0x28] sm:$0xff]
    %v77 = vld [vmem:[%s1 + $0x30] sm:$0xff]
    %v78 = vld [vmem:[%s1 + $0x38] sm:$0xff]
    %v79 = vld [vmem:[%s1 + $0x40] sm:$0xff]
    %v80 = vld [vmem:[%s1 + $0x48] sm:$0xff]
    %v81 = vld [vmem:[%s1 + $0x50] sm:$0xff]
    %v82 = vld [vmem:[%s1 + $0x58] sm:$0xff]
    %v83 = vld [vmem:[%s1 + $0x60] sm:$0xff]
    %v84 = vld [vmem:[%s1 + $0x68] sm:$0xff]
    %v85 = vld [vmem:[%s1 + $0x70] sm:$0xff]
    %v86 = vld [vmem:[%s1 + $0x78] sm:$0xff]
    %v87 = vld [vmem:[%s1 + $0x80] sm:$0xff]
    %v88 = vld [vmem:[%s1 + $0x88] sm:$0xff]
    %v89 = vld [vmem:[%s1 + $0x90] sm:$0xff]
    %v90 = vld [vmem:[%s1 + $0x98] sm:$0xff]
    %v91 = vld [vmem:[%s1 + $0xa0] sm:$0xff]
    %v92 = vld [vmem:[%s1 + $0xa8] sm:$0xff]
    %v93 = vld [vmem:[%s1 + $0xb0] sm:$0x3]
    %v94 = vld [vmem:[#allocation3] sm:$0xff]
    %v95 = vld [vmem:[#allocation3 + $0x8] sm:$0xff]
    %v96 = vld [vmem:[#allocation3 + $0x10] sm:$0xff]
    %v97 = vld [vmem:[#allocation3 + $0x18] sm:$0xff]
    %v98 = vld [vmem:[#allocation3 + $0x20] sm:$0xff]
    %v99 = vld [vmem:[#allocation3 + $0x28] sm:$0xff]
    %v100 = vld [vmem:[#allocation3 + $0x30] sm:$0xff]
    %v101 = vld [vmem:[#allocation3 + $0x38] sm:$0xff]
    %v102 = vld [vmem:[#allocation3 + $0x40] sm:$0xff]
    %v103 = vld [vmem:[#allocation3 + $0x48] sm:$0xff]
    %v104 = vld [vmem:[#allocation3 + $0x50] sm:$0xff]
    %v105 = vld [vmem:[#allocation3 + $0x58] sm:$0xff]
    %v106 = vld [vmem:[#allocation3 + $0x60] sm:$0xff]
    %v107 = vld [vmem:[#allocation3 + $0x68] sm:$0xff]
    %v108 = vld [vmem:[#allocation3 + $0x70] sm:$0xff]
    %v109 = vld [vmem:[#allocation3 + $0x78] sm:$0xff]
    %v110 = vld [vmem:[#allocation3 + $0x80] sm:$0xff]
    %v111 = vld [vmem:[#allocation3 + $0x88] sm:$0xff]
    %v112 = vld [vmem:[#allocation3 + $0x90] sm:$0xff]
    %v113 = vld [vmem:[#allocation3 + $0x98] sm:$0xff]
    %v114 = vld [vmem:[#allocation3 + $0xa0] sm:$0xff]
    %v115 = vld [vmem:[#allocation3 + $0xa8] sm:$0xff]
    %v116 = vld [vmem:[#allocation3 + $0xb0] sm:$0x3]
    %v117 = vld [vmem:[#allocation6] sm:$0xff]
    %v118 = vld [vmem:[#allocation6 + $0x8] sm:$0xff]
    %v119 = vld [vmem:[#allocation6 + $0x10] sm:$0xff]
    %v120 = vld [vmem:[#allocation6 + $0x18] sm:$0xff]
    %v121 = vld [vmem:[#allocation6 + $0x20] sm:$0xff]
    %v122 = vld [vmem:[#allocation6 + $0x28] sm:$0xff]
    %v123 = vld [vmem:[#allocation6 + $0x30] sm:$0xff]
    %v124 = vld [vmem:[#allocation6 + $0x38] sm:$0xff]
    %v125 = vld [vmem:[#allocation6 + $0x40] sm:$0xff]
    %v126 = vld [vmem:[#allocation6 + $0x48] sm:$0xff]
    %v127 = vld [vmem:[#allocation6 + $0x50] sm:$0xff]
    %v128 = vld [vmem:[#allocation6 + $0x58] sm:$0xff]
    %v129 = vld [vmem:[#allocation6 + $0x60] sm:$0xff]
    %v130 = vld [vmem:[#allocation6 + $0x68] sm:$0xff]
    %v131 = vld [vmem:[#allocation6 + $0x70] sm:$0xff]
    %v132 = vld [vmem:[#allocation6 + $0x78] sm:$0xff]
    %v133 = vld [vmem:[#allocation3 + $0x1] sm:$0xff]
    %v134 = vld [vmem:[#allocation3 + $0x9] sm:$0xff]
    %v135 = vld [vmem:[#allocation3 + $0x11] sm:$0xff]
    %v136 = vld [vmem:[#allocation3 + $0x19] sm:$0xff]
    %v137 = vld [vmem:[#allocation3 + $0x21] sm:$0xff]
    %v138 = vld [vmem:[#allocation3 + $0x29] sm:$0xff]
    %v139 = vld [vmem:[#allocation3 + $0x31] sm:$0xff]
    %v140 = vld [vmem:[#allocation3 + $0x39] sm:$0xff]
    %v141 = vld [vmem:[#allocation3 + $0x41] sm:$0xff]
    %v142 = vld [vmem:[#allocation3 + $0x49] sm:$0xff]
    %v143 = vld [vmem:[#allocation3 + $0x51] sm:$0xff]
    %v144 = vld [vmem:[#allocation3 + $0x59] sm:$0xff]
    %v145 = vld [vmem:[#allocation3 + $0x61] sm:$0xff]
    %v146 = vld [vmem:[#allocation3 + $0x69] sm:$0xff]
    %v147 = vld [vmem:[#allocation3 + $0x71] sm:$0xff]
    %v148 = vld [vmem:[#allocation3 + $0x79] sm:$0xff]
    %v149 = vld [vmem:[#allocation3 + $0x81] sm:$0xff]
    %v150 = vld [vmem:[#allocation3 + $0x89] sm:$0xff]
    %v151 = vld [vmem:[#allocation3 + $0x91] sm:$0xff]
    %v152 = vld [vmem:[#allocation3 + $0x99] sm:$0xff]
    %v153 = vld [vmem:[#allocation3 + $0xa1] sm:$0xff]
    %v154 = vld [vmem:[#allocation3 + $0xa9] sm:$0xff]
    %v155 = vld [vmem:[#allocation3 + $0xb1] sm:$0x3]
    %s156 = scalar_lea.vmem [#allocation6], 128
    %v157 = vld [vmem:[%s156] sm:$0xff]
    %v158 = vld [vmem:[%s156 + $0x8] sm:$0xff]
    %v159 = vld [vmem:[%s156 + $0x10] sm:$0xff]
    %v160 = vld [vmem:[%s156 + $0x18] sm:$0xff]
    %v161 = vld [vmem:[%s156 + $0x20] sm:$0xff]
    %v162 = vld [vmem:[%s156 + $0x28] sm:$0xff]
    %v163 = vld [vmem:[%s156 + $0x30] sm:$0xff]
    %v164 = vld [vmem:[%s156 + $0x38] sm:$0xff]
    %v165 = vld [vmem:[%s156 + $0x40] sm:$0xff]
    %v166 = vld [vmem:[%s156 + $0x48] sm:$0xff]
    %v167 = vld [vmem:[%s156 + $0x50] sm:$0xff]
    %v168 = vld [vmem:[%s156 + $0x58] sm:$0xff]
    %v169 = vld [vmem:[%s156 + $0x60] sm:$0xff]
    %v170 = vld [vmem:[%s156 + $0x68] sm:$0xff]
    %v171 = vld [vmem:[%s156 + $0x70] sm:$0xff]
    %v172 = vld [vmem:[%s156 + $0x78] sm:$0xff]
    %173 = vmatprep.subr.mxu0 0.0
    %174 = vmatpush1.msra.mxu0 %v172
    %175 = vmatprep.subr.mxu0 0.0
    %176 = vmatpush1.msra.mxu0 %v171
    %177 = vmatprep.subr.mxu0 0.0
    %178 = vmatpush1.msra.mxu0 %v170
    %179 = vmatprep.subr.mxu0 0.0
    %180 = vmatpush1.msra.mxu0 %v169
    %181 = vmatprep.subr.mxu0 0.0
    %182 = vmatpush1.msra.mxu0 %v168
    %183 = vmatprep.subr.mxu0 0.0
    %184 = vmatpush1.msra.mxu0 %v167
    %185 = vmatprep.subr.mxu0 0.0
    %186 = vmatpush1.msra.mxu0 %v166
    %187 = vmatprep.subr.mxu0 0.0
    %188 = vmatpush1.msra.mxu0 %v165
    %189 = vmatprep.subr.mxu0 0.0
    %190 = vmatpush1.msra.mxu0 %v164
    %191 = vmatprep.subr.mxu0 0.0
    %192 = vmatpush1.msra.mxu0 %v163
    %193 = vmatprep.subr.mxu0 0.0
    %194 = vmatpush1.msra.mxu0 %v162
    %195 = vmatprep.subr.mxu0 0.0
    %196 = vmatpush1.msra.mxu0 %v161
    %197 = vmatprep.subr.mxu0 0.0
    %198 = vmatpush1.msra.mxu0 %v160
    %199 = vmatprep.subr.mxu0 0.0
    %200 = vmatpush1.msra.mxu0 %v159
    %201 = vmatprep.subr.mxu0 0.0
    %202 = vmatpush1.msra.mxu0 %v158
    %203 = vmatprep.subr.mxu0 0.0
    %204 = vmatpush1.msra.mxu0 %v157
    %205 = vmatprep.subr.mxu0 0.0
    %206 = vmatpush2.msra.mxu0 0.0
    %207 = vmatprep.subr.mxu0 0.0
    %208 = vmatpush2.msra.mxu0 0.0
    %209 = vmatprep.subr.mxu0 0.0
    %210 = vmatpush2.msra.mxu0 0.0
    %211 = vmatprep.subr.mxu0 0.0
    %212 = vmatpush2.msra.mxu0 0.0
    %213 = vmatprep.subr.mxu0 0.0
    %214 = vmatpush2.msra.mxu0 0.0
    %215 = vmatprep.subr.mxu0 0.0
    %216 = vmatpush2.msra.mxu0 0.0
    %217 = vmatprep.subr.mxu0 0.0
    %218 = vmatpush2.msra.mxu0 0.0
    %219 = vmatprep.subr.mxu0 0.0
    %220 = vmatpush2.msra.mxu0 0.0
    %221 = vmatprep.subr.mxu0 0.0
    %222 = vmatpush2.msra.mxu0 0.0
    %223 = vmatprep.subr.mxu0 0.0
    %224 = vmatpush2.msra.mxu0 0.0
    %225 = vmatprep.subr.mxu0 0.0
    %226 = vmatpush2.msra.mxu0 0.0
    %227 = vmatprep.subr.mxu0 0.0
    %228 = vmatpush2.msra.mxu0 0.0
    %229 = vmatprep.subr.mxu0 0.0
    %230 = vmatpush2.msra.mxu0 0.0
    %231 = vmatprep.subr.mxu0 0.0
    %232 = vmatpush2.msra.mxu0 0.0
    %233 = vmatprep.subr.mxu0 0.0
    %234 = vmatpush2.msra.mxu0 0.0
    %235 = vmatprep.subr.mxu0 0.0
    %236 = vmatpush2.msra.mxu0 0.0
    %237 = vmatprep.mubr.f32.mxu0 0.0
    %238 = vmatmul.mubr.f32.gmra.mxu0 %v133
    %v239 = vpop.f32.mrf.mxu0
    %v240 = vadd.f32 0.0, %v239
    %v241 = vpop.f32.mrf.mxu0
    %242 = vmatprep.mubr.f32.mxu0 0.0
    %243 = vmatmul.mubr.f32.gmra.mxu0 %v134
    %v244 = vpop.f32.mrf.mxu0
    %v245 = vadd.f32 0.0, %v244
    %v246 = vpop.f32.mrf.mxu0
    %247 = vmatprep.mubr.f32.mxu0 0.0
    %248 = vmatmul.mubr.f32.gmra.mxu0 %v135
    %v249 = vpop.f32.mrf.mxu0
    %v250 = vadd.f32 0.0, %v249
    %v251 = vpop.f32.mrf.mxu0
    %252 = vmatprep.mubr.f32.mxu0 0.0
    %253 = vmatmul.mubr.f32.gmra.mxu0 %v136
    %v254 = vpop.f32.mrf.mxu0
    %v255 = vadd.f32 0.0, %v254
    %v256 = vpop.f32.mrf.mxu0
    %257 = vmatprep.mubr.f32.mxu0 0.0
    %258 = vmatmul.mubr.f32.gmra.mxu0 %v137
    %v259 = vpop.f32.mrf.mxu0
    %v260 = vadd.f32 0.0, %v259
    %v261 = vpop.f32.mrf.mxu0
    %262 = vmatprep.mubr.f32.mxu0 0.0
    %263 = vmatmul.mubr.f32.gmra.mxu0 %v138
    %v264 = vpop.f32.mrf.mxu0
    %v265 = vadd.f32 0.0, %v264
    %v266 = vpop.f32.mrf.mxu0
    %267 = vmatprep.mubr.f32.mxu0 0.0
    %268 = vmatmul.mubr.f32.gmra.mxu0 %v139
    %v269 = vpop.f32.mrf.mxu0
    %v270 = vadd.f32 0.0, %v269
    %v271 = vpop.f32.mrf.mxu0
    %272 = vmatprep.mubr.f32.mxu0 0.0
    %273 = vmatmul.mubr.f32.gmra.mxu0 %v140
    %v274 = vpop.f32.mrf.mxu0
    %v275 = vadd.f32 0.0, %v274
    %v276 = vpop.f32.mrf.mxu0
    %277 = vmatprep.mubr.f32.mxu0 0.0
    %278 = vmatmul.mubr.f32.gmra.mxu0 %v141
    %v279 = vpop.f32.mrf.mxu0
    %v280 = vadd.f32 0.0, %v279
    %v281 = vpop.f32.mrf.mxu0
    %282 = vmatprep.mubr.f32.mxu0 0.0
    %283 = vmatmul.mubr.f32.gmra.mxu0 %v142
    %v284 = vpop.f32.mrf.mxu0
    %v285 = vadd.f32 0.0, %v284
    %v286 = vpop.f32.mrf.mxu0
    %287 = vmatprep.mubr.f32.mxu0 0.0
    %288 = vmatmul.mubr.f32.gmra.mxu0 %v143
    %v289 = vpop.f32.mrf.mxu0
    %v290 = vadd.f32 0.0, %v289
    %v291 = vpop.f32.mrf.mxu0
    %292 = vmatprep.mubr.f32.mxu0 0.0
    %293 = vmatmul.mubr.f32.gmra.mxu0 %v144
    %v294 = vpop.f32.mrf.mxu0
    %v295 = vadd.f32 0.0, %v294
    %v296 = vpop.f32.mrf.mxu0
    %297 = vmatprep.mubr.f32.mxu0 0.0
    %298 = vmatmul.mubr.f32.gmra.mxu0 %v145
    %v299 = vpop.f32.mrf.mxu0
    %v300 = vadd.f32 0.0, %v299
    %v301 = vpop.f32.mrf.mxu0
    %302 = vmatprep.mubr.f32.mxu0 0.0
    %303 = vmatmul.mubr.f32.gmra.mxu0 %v146
    %v304 = vpop.f32.mrf.mxu0
    %v305 = vadd.f32 0.0, %v304
    %v306 = vpop.f32.mrf.mxu0
    %307 = vmatprep.mubr.f32.mxu0 0.0
    %308 = vmatmul.mubr.f32.gmra.mxu0 %v147
    %v309 = vpop.f32.mrf.mxu0
    %v310 = vadd.f32 0.0, %v309
    %v311 = vpop.f32.mrf.mxu0
    %312 = vmatprep.mubr.f32.mxu0 0.0
    %313 = vmatmul.mubr.f32.gmra.mxu0 %v148
    %v314 = vpop.f32.mrf.mxu0
    %v315 = vadd.f32 0.0, %v314
    %v316 = vpop.f32.mrf.mxu0
    %317 = vmatprep.mubr.f32.mxu0 0.0
    %318 = vmatmul.mubr.f32.gmra.mxu0 %v149
    %v319 = vpop.f32.mrf.mxu0
    %v320 = vadd.f32 0.0, %v319
    %v321 = vpop.f32.mrf.mxu0
    %322 = vmatprep.mubr.f32.mxu0 0.0
    %323 = vmatmul.mubr.f32.gmra.mxu0 %v150
    %v324 = vpop.f32.mrf.mxu0
    %v325 = vadd.f32 0.0, %v324
    %v326 = vpop.f32.mrf.mxu0
    %327 = vmatprep.mubr.f32.mxu0 0.0
    %328 = vmatmul.mubr.f32.gmra.mxu0 %v151
    %v329 = vpop.f32.mrf.mxu0
    %v330 = vadd.f32 0.0, %v329
    %v331 = vpop.f32.mrf.mxu0
    %332 = vmatprep.mubr.f32.mxu0 0.0
    %333 = vmatmul.mubr.f32.gmra.mxu0 %v152
    %v334 = vpop.f32.mrf.mxu0
    %v335 = vadd.f32 0.0, %v334
    %v336 = vpop.f32.mrf.mxu0
    %337 = vmatprep.mubr.f32.mxu0 0.0
    %338 = vmatmul.mubr.f32.gmra.mxu0 %v153
    %v339 = vpop.f32.mrf.mxu0
    %v340 = vadd.f32 0.0, %v339
    %v341 = vpop.f32.mrf.mxu0
    %342 = vmatprep.mubr.f32.mxu0 0.0
    %343 = vmatmul.mubr.f32.gmra.mxu0 %v154
    %v344 = vpop.f32.mrf.mxu0
    %v345 = vadd.f32 0.0, %v344
    %v346 = vpop.f32.mrf.mxu0
    %347 = vmatprep.mubr.f32.mxu0 0.0
    %348 = vmatmul.mubr.f32.gmra.mxu0 %v155
    %v349 = vpop.f32.mrf.mxu0
    %v350 = vadd.f32 0.0, %v349
    %v351 = vpop.f32.mrf.mxu0
    %352 = vdwg.mxu0
    %353 = vmatprep.subr.mxu0 0.0
    %354 = vmatpush1.msra.mxu0 %v132
    %355 = vmatprep.subr.mxu0 0.0
    %356 = vmatpush1.msra.mxu0 %v131
    %357 = vmatprep.subr.mxu0 0.0
    %358 = vmatpush1.msra.mxu0 %v130
    %359 = vmatprep.subr.mxu0 0.0
    %360 = vmatpush1.msra.mxu0 %v129
    %361 = vmatprep.subr.mxu0 0.0
    %362 = vmatpush1.msra.mxu0 %v128
    %363 = vmatprep.subr.mxu0 0.0
    %364 = vmatpush1.msra.mxu0 %v127
    %365 = vmatprep.subr.mxu0 0.0
    %366 = vmatpush1.msra.mxu0 %v126
    %367 = vmatprep.subr.mxu0 0.0
    %368 = vmatpush1.msra.mxu0 %v125
    %369 = vmatprep.subr.mxu0 0.0
    %370 = vmatpush1.msra.mxu0 %v124
    %371 = vmatprep.subr.mxu0 0.0
    %372 = vmatpush1.msra.mxu0 %v123
    %373 = vmatprep.subr.mxu0 0.0
    %374 = vmatpush1.msra.mxu0 %v122
    %375 = vmatprep.subr.mxu0 0.0
    %376 = vmatpush1.msra.mxu0 %v121
    %377 = vmatprep.subr.mxu0 0.0
    %378 = vmatpush1.msra.mxu0 %v120
    %379 = vmatprep.subr.mxu0 0.0
    %380 = vmatpush1.msra.mxu0 %v119
    %381 = vmatprep.subr.mxu0 0.0
    %382 = vmatpush1.msra.mxu0 %v118
    %383 = vmatprep.subr.mxu0 0.0
    %384 = vmatpush1.msra.mxu0 %v117
    %385 = vmatprep.subr.mxu0 0.0
    %386 = vmatpush2.msra.mxu0 0.0
    %387 = vmatprep.subr.mxu0 0.0
    %388 = vmatpush2.msra.mxu0 0.0
    %389 = vmatprep.subr.mxu0 0.0
    %390 = vmatpush2.msra.mxu0 0.0
    %391 = vmatprep.subr.mxu0 0.0
    %392 = vmatpush2.msra.mxu0 0.0
    %393 = vmatprep.subr.mxu0 0.0
    %394 = vmatpush2.msra.mxu0 0.0
    %395 = vmatprep.subr.mxu0 0.0
    %396 = vmatpush2.msra.mxu0 0.0
    %397 = vmatprep.subr.mxu0 0.0
    %398 = vmatpush2.msra.mxu0 0.0
    %399 = vmatprep.subr.mxu0 0.0
    %400 = vmatpush2.msra.mxu0 0.0
    %401 = vmatprep.subr.mxu0 0.0
    %402 = vmatpush2.msra.mxu0 0.0
    %403 = vmatprep.subr.mxu0 0.0
    %404 = vmatpush2.msra.mxu0 0.0
    %405 = vmatprep.subr.mxu0 0.0
    %406 = vmatpush2.msra.mxu0 0.0
    %407 = vmatprep.subr.mxu0 0.0
    %408 = vmatpush2.msra.mxu0 0.0
    %409 = vmatprep.subr.mxu0 0.0
    %410 = vmatpush2.msra.mxu0 0.0
    %411 = vmatprep.subr.mxu0 0.0
    %412 = vmatpush2.msra.mxu0 0.0
    %413 = vmatprep.subr.mxu0 0.0
    %414 = vmatpush2.msra.mxu0 0.0
    %415 = vmatprep.subr.mxu0 0.0
    %416 = vmatpush2.msra.mxu0 0.0
    %417 = vmatprep.mubr.f32.mxu0 0.0
    %418 = vmatmul.mubr.f32.gmra.mxu0 %v94
    %v419 = vpop.f32.mrf.mxu0
    %v420 = vadd.f32 %v240, %v419
    %v421 = vpop.f32.mrf.mxu0
    %422 = vmatprep.mubr.f32.mxu0 0.0
    %423 = vmatmul.mubr.f32.gmra.mxu0 %v95
    %v424 = vpop.f32.mrf.mxu0
    %v425 = vadd.f32 %v245, %v424
    %v426 = vpop.f32.mrf.mxu0
    %427 = vmatprep.mubr.f32.mxu0 0.0
    %428 = vmatmul.mubr.f32.gmra.mxu0 %v96
    %v429 = vpop.f32.mrf.mxu0
    %v430 = vadd.f32 %v250, %v429
    %v431 = vpop.f32.mrf.mxu0
    %432 = vmatprep.mubr.f32.mxu0 0.0
    %433 = vmatmul.mubr.f32.gmra.mxu0 %v97
    %v434 = vpop.f32.mrf.mxu0
    %v435 = vadd.f32 %v255, %v434
    %v436 = vpop.f32.mrf.mxu0
    %437 = vmatprep.mubr.f32.mxu0 0.0
    %438 = vmatmul.mubr.f32.gmra.mxu0 %v98
    %v439 = vpop.f32.mrf.mxu0
    %v440 = vadd.f32 %v260, %v439
    %v441 = vpop.f32.mrf.mxu0
    %442 = vmatprep.mubr.f32.mxu0 0.0
    %443 = vmatmul.mubr.f32.gmra.mxu0 %v99
    %v444 = vpop.f32.mrf.mxu0
    %v445 = vadd.f32 %v265, %v444
    %v446 = vpop.f32.mrf.mxu0
    %447 = vmatprep.mubr.f32.mxu0 0.0
    %448 = vmatmul.mubr.f32.gmra.mxu0 %v100
    %v449 = vpop.f32.mrf.mxu0
    %v450 = vadd.f32 %v270, %v449
    %v451 = vpop.f32.mrf.mxu0
    %452 = vmatprep.mubr.f32.mxu0 0.0
    %453 = vmatmul.mubr.f32.gmra.mxu0 %v101
    %v454 = vpop.f32.mrf.mxu0
    %v455 = vadd.f32 %v275, %v454
    %v456 = vpop.f32.mrf.mxu0
    %457 = vmatprep.mubr.f32.mxu0 0.0
    %458 = vmatmul.mubr.f32.gmra.mxu0 %v102
    %v459 = vpop.f32.mrf.mxu0
    %v460 = vadd.f32 %v280, %v459
    %v461 = vpop.f32.mrf.mxu0
    %462 = vmatprep.mubr.f32.mxu0 0.0
    %463 = vmatmul.mubr.f32.gmra.mxu0 %v103
    %v464 = vpop.f32.mrf.mxu0
    %v465 = vadd.f32 %v285, %v464
    %v466 = vpop.f32.mrf.mxu0
    %467 = vmatprep.mubr.f32.mxu0 0.0
    %468 = vmatmul.mubr.f32.gmra.mxu0 %v104
    %v469 = vpop.f32.mrf.mxu0
    %v470 = vadd.f32 %v290, %v469
    %v471 = vpop.f32.mrf.mxu0
    %472 = vmatprep.mubr.f32.mxu0 0.0
    %473 = vmatmul.mubr.f32.gmra.mxu0 %v105
    %v474 = vpop.f32.mrf.mxu0
    %v475 = vadd.f32 %v295, %v474
    %v476 = vpop.f32.mrf.mxu0
    %477 = vmatprep.mubr.f32.mxu0 0.0
    %478 = vmatmul.mubr.f32.gmra.mxu0 %v106
    %v479 = vpop.f32.mrf.mxu0
    %v480 = vadd.f32 %v300, %v479
    %v481 = vpop.f32.mrf.mxu0
    %482 = vmatprep.mubr.f32.mxu0 0.0
    %483 = vmatmul.mubr.f32.gmra.mxu0 %v107
    %v484 = vpop.f32.mrf.mxu0
    %v485 = vadd.f32 %v305, %v484
    %v486 = vpop.f32.mrf.mxu0
    %487 = vmatprep.mubr.f32.mxu0 0.0
    %488 = vmatmul.mubr.f32.gmra.mxu0 %v108
    %v489 = vpop.f32.mrf.mxu0
    %v490 = vadd.f32 %v310, %v489
    %v491 = vpop.f32.mrf.mxu0
    %492 = vmatprep.mubr.f32.mxu0 0.0
    %493 = vmatmul.mubr.f32.gmra.mxu0 %v109
    %v494 = vpop.f32.mrf.mxu0
    %v495 = vadd.f32 %v315, %v494
    %v496 = vpop.f32.mrf.mxu0
    %497 = vmatprep.mubr.f32.mxu0 0.0
    %498 = vmatmul.mubr.f32.gmra.mxu0 %v110
    %v499 = vpop.f32.mrf.mxu0
    %v500 = vadd.f32 %v320, %v499
    %v501 = vpop.f32.mrf.mxu0
    %502 = vmatprep.mubr.f32.mxu0 0.0
    %503 = vmatmul.mubr.f32.gmra.mxu0 %v111
    %v504 = vpop.f32.mrf.mxu0
    %v505 = vadd.f32 %v325, %v504
    %v506 = vpop.f32.mrf.mxu0
    %507 = vmatprep.mubr.f32.mxu0 0.0
    %508 = vmatmul.mubr.f32.gmra.mxu0 %v112
    %v509 = vpop.f32.mrf.mxu0
    %v510 = vadd.f32 %v330, %v509
    %v511 = vpop.f32.mrf.mxu0
    %512 = vmatprep.mubr.f32.mxu0 0.0
    %513 = vmatmul.mubr.f32.gmra.mxu0 %v113
    %v514 = vpop.f32.mrf.mxu0
    %v515 = vadd.f32 %v335, %v514
    %v516 = vpop.f32.mrf.mxu0
    %517 = vmatprep.mubr.f32.mxu0 0.0
    %518 = vmatmul.mubr.f32.gmra.mxu0 %v114
    %v519 = vpop.f32.mrf.mxu0
    %v520 = vadd.f32 %v340, %v519
    %v521 = vpop.f32.mrf.mxu0
    %522 = vmatprep.mubr.f32.mxu0 0.0
    %523 = vmatmul.mubr.f32.gmra.mxu0 %v115
    %v524 = vpop.f32.mrf.mxu0
    %v525 = vadd.f32 %v345, %v524
    %v526 = vpop.f32.mrf.mxu0
    %527 = vmatprep.mubr.f32.mxu0 0.0
    %528 = vmatmul.mubr.f32.gmra.mxu0 %v116
    %v529 = vpop.f32.mrf.mxu0
    %v530 = vadd.f32 %v350, %v529
    %v531 = vpop.f32.mrf.mxu0
    %532 = vdwg.mxu0
    %v533 = vld [vmem:[#allocation3 + $0x2] sm:$0xff]
    %v534 = vld [vmem:[#allocation3 + $0xa] sm:$0xff]
    %v535 = vld [vmem:[#allocation3 + $0x12] sm:$0xff]
    %v536 = vld [vmem:[#allocation3 + $0x1a] sm:$0xff]
    %v537 = vld [vmem:[#allocation3 + $0x22] sm:$0xff]
    %v538 = vld [vmem:[#allocation3 + $0x2a] sm:$0xff]
    %v539 = vld [vmem:[#allocation3 + $0x32] sm:$0xff]
    %v540 = vld [vmem:[#allocation3 + $0x3a] sm:$0xff]
    %v541 = vld [vmem:[#allocation3 + $0x42] sm:$0xff]
    %v542 = vld [vmem:[#allocation3 + $0x4a] sm:$0xff]
    %v543 = vld [vmem:[#allocation3 + $0x52] sm:$0xff]
    %v544 = vld [vmem:[#allocation3 + $0x5a] sm:$0xff]
    %v545 = vld [vmem:[#allocation3 + $0x62] sm:$0xff]
    %v546 = vld [vmem:[#allocation3 + $0x6a] sm:$0xff]
    %v547 = vld [vmem:[#allocation3 + $0x72] sm:$0xff]
    %v548 = vld [vmem:[#allocation3 + $0x7a] sm:$0xff]
    %v549 = vld [vmem:[#allocation3 + $0x82] sm:$0xff]
    %v550 = vld [vmem:[#allocation3 + $0x8a] sm:$0xff]
    %v551 = vld [vmem:[#allocation3 + $0x92] sm:$0xff]
    %v552 = vld [vmem:[#allocation3 + $0x9a] sm:$0xff]
    %v553 = vld [vmem:[#allocation3 + $0xa2] sm:$0xff]
    %v554 = vld [vmem:[#allocation3 + $0xaa] sm:$0xff]
    %v555 = vld [vmem:[#allocation3 + $0xb2] sm:$0x3]
    %s556 = scalar_lea.vmem [#allocation6], 256
    %v557 = vld [vmem:[%s556] sm:$0xff]
    %v558 = vld [vmem:[%s556 + $0x8] sm:$0xff]
    %v559 = vld [vmem:[%s556 + $0x10] sm:$0xff]
    %v560 = vld [vmem:[%s556 + $0x18] sm:$0xff]
    %v561 = vld [vmem:[%s556 + $0x20] sm:$0xff]
    %v562 = vld [vmem:[%s556 + $0x28] sm:$0xff]
    %v563 = vld [vmem:[%s556 + $0x30] sm:$0xff]
    %v564 = vld [vmem:[%s556 + $0x38] sm:$0xff]
    %v565 = vld [vmem:[%s556 + $0x40] sm:$0xff]
    %v566 = vld [vmem:[%s556 + $0x48] sm:$0xff]
    %v567 = vld [vmem:[%s556 + $0x50] sm:$0xff]
    %v568 = vld [vmem:[%s556 + $0x58] sm:$0xff]
    %v569 = vld [vmem:[%s556 + $0x60] sm:$0xff]
    %v570 = vld [vmem:[%s556 + $0x68] sm:$0xff]
    %v571 = vld [vmem:[%s556 + $0x70] sm:$0xff]
    %v572 = vld [vmem:[%s556 + $0x78] sm:$0xff]
    %573 = vmatprep.subr.mxu0 0.0
    %574 = vmatpush1.msra.mxu0 %v572
    %575 = vmatprep.subr.mxu0 0.0
    %576 = vmatpush1.msra.mxu0 %v571
    %577 = vmatprep.subr.mxu0 0.0
    %578 = vmatpush1.msra.mxu0 %v570
    %579 = vmatprep.subr.mxu0 0.0
    %580 = vmatpush1.msra.mxu0 %v569
    %581 = vmatprep.subr.mxu0 0.0
    %582 = vmatpush1.msra.mxu0 %v568
    %583 = vmatprep.subr.mxu0 0.0
    %584 = vmatpush1.msra.mxu0 %v567
    %585 = vmatprep.subr.mxu0 0.0
    %586 = vmatpush1.msra.mxu0 %v566
    %587 = vmatprep.subr.mxu0 0.0
    %588 = vmatpush1.msra.mxu0 %v565
    %589 = vmatprep.subr.mxu0 0.0
    %590 = vmatpush1.msra.mxu0 %v564
    %591 = vmatprep.subr.mxu0 0.0
    %592 = vmatpush1.msra.mxu0 %v563
    %593 = vmatprep.subr.mxu0 0.0
    %594 = vmatpush1.msra.mxu0 %v562
    %595 = vmatprep.subr.mxu0 0.0
    %596 = vmatpush1.msra.mxu0 %v561
    %597 = vmatprep.subr.mxu0 0.0
    %598 = vmatpush1.msra.mxu0 %v560
    %599 = vmatprep.subr.mxu0 0.0
    %600 = vmatpush1.msra.mxu0 %v559
    %601 = vmatprep.subr.mxu0 0.0
    %602 = vmatpush1.msra.mxu0 %v558
    %603 = vmatprep.subr.mxu0 0.0
    %604 = vmatpush1.msra.mxu0 %v557
    %605 = vmatprep.subr.mxu0 0.0
    %606 = vmatpush2.msra.mxu0 0.0
    %607 = vmatprep.subr.mxu0 0.0
    %608 = vmatpush2.msra.mxu0 0.0
    %609 = vmatprep.subr.mxu0 0.0
    %610 = vmatpush2.msra.mxu0 0.0
    %611 = vmatprep.subr.mxu0 0.0
    %612 = vmatpush2.msra.mxu0 0.0
    %613 = vmatprep.subr.mxu0 0.0
    %614 = vmatpush2.msra.mxu0 0.0
    %615 = vmatprep.subr.mxu0 0.0
    %616 = vmatpush2.msra.mxu0 0.0
    %617 = vmatprep.subr.mxu0 0.0
    %618 = vmatpush2.msra.mxu0 0.0
    %619 = vmatprep.subr.mxu0 0.0
    %620 = vmatpush2.msra.mxu0 0.0
    %621 = vmatprep.subr.mxu0 0.0
    %622 = vmatpush2.msra.mxu0 0.0
    %623 = vmatprep.subr.mxu0 0.0
    %624 = vmatpush2.msra.mxu0 0.0
    %625 = vmatprep.subr.mxu0 0.0
    %626 = vmatpush2.msra.mxu0 0.0
    %627 = vmatprep.subr.mxu0 0.0
    %628 = vmatpush2.msra.mxu0 0.0
    %629 = vmatprep.subr.mxu0 0.0
    %630 = vmatpush2.msra.mxu0 0.0
    %631 = vmatprep.subr.mxu0 0.0
    %632 = vmatpush2.msra.mxu0 0.0
    %633 = vmatprep.subr.mxu0 0.0
    %634 = vmatpush2.msra.mxu0 0.0
    %635 = vmatprep.subr.mxu0 0.0
    %636 = vmatpush2.msra.mxu0 0.0
    %637 = vmatprep.mubr.f32.mxu0 0.0
    %638 = vmatmul.mubr.f32.gmra.mxu0 %v533
    %v639 = vpop.f32.mrf.mxu0
    %v640 = vadd.f32 0.0, %v639
    %v641 = vpop.f32.mrf.mxu0
    %642 = vmatprep.mubr.f32.mxu0 0.0
    %643 = vmatmul.mubr.f32.gmra.mxu0 %v534
    %v644 = vpop.f32.mrf.mxu0
    %v645 = vadd.f32 0.0, %v644
    %v646 = vpop.f32.mrf.mxu0
    %647 = vmatprep.mubr.f32.mxu0 0.0
    %648 = vmatmul.mubr.f32.gmra.mxu0 %v535
    %v649 = vpop.f32.mrf.mxu0
    %v650 = vadd.f32 0.0, %v649
    %v651 = vpop.f32.mrf.mxu0
    %652 = vmatprep.mubr.f32.mxu0 0.0
    %653 = vmatmul.mubr.f32.gmra.mxu0 %v536
    %v654 = vpop.f32.mrf.mxu0
    %v655 = vadd.f32 0.0, %v654
    %v656 = vpop.f32.mrf.mxu0
    %657 = vmatprep.mubr.f32.mxu0 0.0
    %658 = vmatmul.mubr.f32.gmra.mxu0 %v537
    %v659 = vpop.f32.mrf.mxu0
    %v660 = vadd.f32 0.0, %v659
    %v661 = vpop.f32.mrf.mxu0
    %662 = vmatprep.mubr.f32.mxu0 0.0
    %663 = vmatmul.mubr.f32.gmra.mxu0 %v538
    %v664 = vpop.f32.mrf.mxu0
    %v665 = vadd.f32 0.0, %v664
    %v666 = vpop.f32.mrf.mxu0
    %667 = vmatprep.mubr.f32.mxu0 0.0
    %668 = vmatmul.mubr.f32.gmra.mxu0 %v539
    %v669 = vpop.f32.mrf.mxu0
    %v670 = vadd.f32 0.0, %v669
    %v671 = vpop.f32.mrf.mxu0
    %672 = vmatprep.mubr.f32.mxu0 0.0
    %673 = vmatmul.mubr.f32.gmra.mxu0 %v540
    %v674 = vpop.f32.mrf.mxu0
    %v675 = vadd.f32 0.0, %v674
    %v676 = vpop.f32.mrf.mxu0
    %677 = vmatprep.mubr.f32.mxu0 0.0
    %678 = vmatmul.mubr.f32.gmra.mxu0 %v541
    %v679 = vpop.f32.mrf.mxu0
    %v680 = vadd.f32 0.0, %v679
    %v681 = vpop.f32.mrf.mxu0
    %682 = vmatprep.mubr.f32.mxu0 0.0
    %683 = vmatmul.mubr.f32.gmra.mxu0 %v542
    %v684 = vpop.f32.mrf.mxu0
    %v685 = vadd.f32 0.0, %v684
    %v686 = vpop.f32.mrf.mxu0
    %687 = vmatprep.mubr.f32.mxu0 0.0
    %688 = vmatmul.mubr.f32.gmra.mxu0 %v543
    %v689 = vpop.f32.mrf.mxu0
    %v690 = vadd.f32 0.0, %v689
    %v691 = vpop.f32.mrf.mxu0
    %692 = vmatprep.mubr.f32.mxu0 0.0
    %693 = vmatmul.mubr.f32.gmra.mxu0 %v544
    %v694 = vpop.f32.mrf.mxu0
    %v695 = vadd.f32 0.0, %v694
    %v696 = vpop.f32.mrf.mxu0
    %697 = vmatprep.mubr.f32.mxu0 0.0
    %698 = vmatmul.mubr.f32.gmra.mxu0 %v545
    %v699 = vpop.f32.mrf.mxu0
    %v700 = vadd.f32 0.0, %v699
    %v701 = vpop.f32.mrf.mxu0
    %702 = vmatprep.mubr.f32.mxu0 0.0
    %703 = vmatmul.mubr.f32.gmra.mxu0 %v546
    %v704 = vpop.f32.mrf.mxu0
    %v705 = vadd.f32 0.0, %v704
    %v706 = vpop.f32.mrf.mxu0
    %707 = vmatprep.mubr.f32.mxu0 0.0
    %708 = vmatmul.mubr.f32.gmra.mxu0 %v547
    %v709 = vpop.f32.mrf.mxu0
    %v710 = vadd.f32 0.0, %v709
    %v711 = vpop.f32.mrf.mxu0
    %712 = vmatprep.mubr.f32.mxu0 0.0
    %713 = vmatmul.mubr.f32.gmra.mxu0 %v548
    %v714 = vpop.f32.mrf.mxu0
    %v715 = vadd.f32 0.0, %v714
    %v716 = vpop.f32.mrf.mxu0
    %717 = vmatprep.mubr.f32.mxu0 0.0
    %718 = vmatmul.mubr.f32.gmra.mxu0 %v549
    %v719 = vpop.f32.mrf.mxu0
    %v720 = vadd.f32 0.0, %v719
    %v721 = vpop.f32.mrf.mxu0
    %722 = vmatprep.mubr.f32.mxu0 0.0
    %723 = vmatmul.mubr.f32.gmra.mxu0 %v550
    %v724 = vpop.f32.mrf.mxu0
    %v725 = vadd.f32 0.0, %v724
    %v726 = vpop.f32.mrf.mxu0
    %727 = vmatprep.mubr.f32.mxu0 0.0
    %728 = vmatmul.mubr.f32.gmra.mxu0 %v551
    %v729 = vpop.f32.mrf.mxu0
    %v730 = vadd.f32 0.0, %v729
    %v731 = vpop.f32.mrf.mxu0
    %732 = vmatprep.mubr.f32.mxu0 0.0
    %733 = vmatmul.mubr.f32.gmra.mxu0 %v552
    %v734 = vpop.f32.mrf.mxu0
    %v735 = vadd.f32 0.0, %v734
    %v736 = vpop.f32.mrf.mxu0
    %737 = vmatprep.mubr.f32.mxu0 0.0
    %738 = vmatmul.mubr.f32.gmra.mxu0 %v553
    %v739 = vpop.f32.mrf.mxu0
    %v740 = vadd.f32 0.0, %v739
    %v741 = vpop.f32.mrf.mxu0
    %742 = vmatprep.mubr.f32.mxu0 0.0
    %743 = vmatmul.mubr.f32.gmra.mxu0 %v554
    %v744 = vpop.f32.mrf.mxu0
    %v745 = vadd.f32 0.0, %v744
    %v746 = vpop.f32.mrf.mxu0
    %747 = vmatprep.mubr.f32.mxu0 0.0
    %748 = vmatmul.mubr.f32.gmra.mxu0 %v555
    %v749 = vpop.f32.mrf.mxu0
    %v750 = vadd.f32 0.0, %v749
    %v751 = vpop.f32.mrf.mxu0
    %752 = vdwg.mxu0
    %v753 = vadd.f32 %v420, %v640
    %v754 = vadd.f32 %v425, %v645
    %v755 = vadd.f32 %v430, %v650
    %v756 = vadd.f32 %v435, %v655
    %v757 = vadd.f32 %v440, %v660
    %v758 = vadd.f32 %v445, %v665
    %v759 = vadd.f32 %v450, %v670
    %v760 = vadd.f32 %v455, %v675
    %v761 = vadd.f32 %v460, %v680
    %v762 = vadd.f32 %v465, %v685
    %v763 = vadd.f32 %v470, %v690
    %v764 = vadd.f32 %v475, %v695
    %v765 = vadd.f32 %v480, %v700
    %v766 = vadd.f32 %v485, %v705
    %v767 = vadd.f32 %v490, %v710
    %v768 = vadd.f32 %v495, %v715
    %v769 = vadd.f32 %v500, %v720
    %v770 = vadd.f32 %v505, %v725
    %v771 = vadd.f32 %v510, %v730
    %v772 = vadd.f32 %v515, %v735
    %v773 = vadd.f32 %v520, %v740
    %v774 = vadd.f32 %v525, %v745
    %v775 = vadd.f32 %v530, %v750
    %v776 = vld [vmem:[#allocation3 + $0xa] sm:$0xff]
    %v777 = vld [vmem:[#allocation3 + $0x12] sm:$0xff]
    %v778 = vld [vmem:[#allocation3 + $0x1a] sm:$0xff]
    %v779 = vld [vmem:[#allocation3 + $0x22] sm:$0xff]
    %v780 = vld [vmem:[#allocation3 + $0x2a] sm:$0xff]
    %v781 = vld [vmem:[#allocation3 + $0x32] sm:$0xff]
    %v782 = vld [vmem:[#allocation3 + $0x3a] sm:$0xff]
    %v783 = vld [vmem:[#allocation3 + $0x42] sm:$0xff]
    %v784 = vld [vmem:[#allocation3 + $0x4a] sm:$0xff]
    %v785 = vld [vmem:[#allocation3 + $0x52] sm:$0xff]
    %v786 = vld [vmem:[#allocation3 + $0x5a] sm:$0xff]
    %v787 = vld [vmem:[#allocation3 + $0x62] sm:$0xff]
    %v788 = vld [vmem:[#allocation3 + $0x6a] sm:$0xff]
    %v789 = vld [vmem:[#allocation3 + $0x72] sm:$0xff]
    %v790 = vld [vmem:[#allocation3 + $0x7a] sm:$0xff]
    %v791 = vld [vmem:[#allocation3 + $0x82] sm:$0xff]
    %v792 = vld [vmem:[#allocation3 + $0x8a] sm:$0xff]
    %v793 = vld [vmem:[#allocation3 + $0x92] sm:$0xff]
    %v794 = vld [vmem:[#allocation3 + $0x9a] sm:$0xff]
    %v795 = vld [vmem:[#allocation3 + $0xa2] sm:$0xff]
    %v796 = vld [vmem:[#allocation3 + $0xaa] sm:$0xff]
    %v797 = vld [vmem:[#allocation3 + $0xb2] sm:$0xff]
    %v798 = vld [vmem:[#allocation3 + $0xba] sm:$0x3]
    %s799 = scalar_lea.vmem [#allocation6], 384
    %v800 = vld [vmem:[%s799] sm:$0xff]
    %v801 = vld [vmem:[%s799 + $0x8] sm:$0xff]
    %v802 = vld [vmem:[%s799 + $0x10] sm:$0xff]
    %v803 = vld [vmem:[%s799 + $0x18] sm:$0xff]
    %v804 = vld [vmem:[%s799 + $0x20] sm:$0xff]
    %v805 = vld [vmem:[%s799 + $0x28] sm:$0xff]
    %v806 = vld [vmem:[%s799 + $0x30] sm:$0xff]
    %v807 = vld [vmem:[%s799 + $0x38] sm:$0xff]
    %v808 = vld [vmem:[%s799 + $0x40] sm:$0xff]
    %v809 = vld [vmem:[%s799 + $0x48] sm:$0xff]
    %v810 = vld [vmem:[%s799 + $0x50] sm:$0xff]
    %v811 = vld [vmem:[%s799 + $0x58] sm:$0xff]
    %v812 = vld [vmem:[%s799 + $0x60] sm:$0xff]
    %v813 = vld [vmem:[%s799 + $0x68] sm:$0xff]
    %v814 = vld [vmem:[%s799 + $0x70] sm:$0xff]
    %v815 = vld [vmem:[%s799 + $0x78] sm:$0xff]
    %816 = vmatprep.subr.mxu0 0.0
    %817 = vmatpush1.msra.mxu0 %v815
    %818 = vmatprep.subr.mxu0 0.0
    %819 = vmatpush1.msra.mxu0 %v814
    %820 = vmatprep.subr.mxu0 0.0
    %821 = vmatpush1.msra.mxu0 %v813
    %822 = vmatprep.subr.mxu0 0.0
    %823 = vmatpush1.msra.mxu0 %v812
    %824 = vmatprep.subr.mxu0 0.0
    %825 = vmatpush1.msra.mxu0 %v811
    %826 = vmatprep.subr.mxu0 0.0
    %827 = vmatpush1.msra.mxu0 %v810
    %828 = vmatprep.subr.mxu0 0.0
    %829 = vmatpush1.msra.mxu0 %v809
    %830 = vmatprep.subr.mxu0 0.0
    %831 = vmatpush1.msra.mxu0 %v808
    %832 = vmatprep.subr.mxu0 0.0
    %833 = vmatpush1.msra.mxu0 %v807
    %834 = vmatprep.subr.mxu0 0.0
    %835 = vmatpush1.msra.mxu0 %v806
    %836 = vmatprep.subr.mxu0 0.0
    %837 = vmatpush1.msra.mxu0 %v805
    %838 = vmatprep.subr.mxu0 0.0
    %839 = vmatpush1.msra.mxu0 %v804
    %840 = vmatprep.subr.mxu0 0.0
    %841 = vmatpush1.msra.mxu0 %v803
    %842 = vmatprep.subr.mxu0 0.0
    %843 = vmatpush1.msra.mxu0 %v802
    %844 = vmatprep.subr.mxu0 0.0
    %845 = vmatpush1.msra.mxu0 %v801
    %846 = vmatprep.subr.mxu0 0.0
    %847 = vmatpush1.msra.mxu0 %v800
    %848 = vmatprep.subr.mxu0 0.0
    %849 = vmatpush2.msra.mxu0 0.0
    %850 = vmatprep.subr.mxu0 0.0
    %851 = vmatpush2.msra.mxu0 0.0
    %852 = vmatprep.subr.mxu0 0.0
    %853 = vmatpush2.msra.mxu0 0.0
    %854 = vmatprep.subr.mxu0 0.0
    %855 = vmatpush2.msra.mxu0 0.0
    %856 = vmatprep.subr.mxu0 0.0
    %857 = vmatpush2.msra.mxu0 0.0
    %858 = vmatprep.subr.mxu0 0.0
    %859 = vmatpush2.msra.mxu0 0.0
    %860 = vmatprep.subr.mxu0 0.0
    %861 = vmatpush2.msra.mxu0 0.0
    %862 = vmatprep.subr.mxu0 0.0
    %863 = vmatpush2.msra.mxu0 0.0
    %864 = vmatprep.subr.mxu0 0.0
    %865 = vmatpush2.msra.mxu0 0.0
    %866 = vmatprep.subr.mxu0 0.0
    %867 = vmatpush2.msra.mxu0 0.0
    %868 = vmatprep.subr.mxu0 0.0
    %869 = vmatpush2.msra.mxu0 0.0
    %870 = vmatprep.subr.mxu0 0.0
    %871 = vmatpush2.msra.mxu0 0.0
    %872 = vmatprep.subr.mxu0 0.0
    %873 = vmatpush2.msra.mxu0 0.0
    %874 = vmatprep.subr.mxu0 0.0
    %875 = vmatpush2.msra.mxu0 0.0
    %876 = vmatprep.subr.mxu0 0.0
    %877 = vmatpush2.msra.mxu0 0.0
    %878 = vmatprep.subr.mxu0 0.0
    %879 = vmatpush2.msra.mxu0 0.0
    %880 = vmatprep.mubr.f32.mxu0 0.0
    %881 = vmatmul.mubr.f32.gmra.mxu0 %v776
    %v882 = vpop.f32.mrf.mxu0
    %v883 = vadd.f32 0.0, %v882
    %v884 = vpop.f32.mrf.mxu0
    %885 = vmatprep.mubr.f32.mxu0 0.0
    %886 = vmatmul.mubr.f32.gmra.mxu0 %v777
    %v887 = vpop.f32.mrf.mxu0
    %v888 = vadd.f32 0.0, %v887
    %v889 = vpop.f32.mrf.mxu0
    %890 = vmatprep.mubr.f32.mxu0 0.0
    %891 = vmatmul.mubr.f32.gmra.mxu0 %v778
    %v892 = vpop.f32.mrf.mxu0
    %v893 = vadd.f32 0.0, %v892
    %v894 = vpop.f32.mrf.mxu0
    %895 = vmatprep.mubr.f32.mxu0 0.0
    %896 = vmatmul.mubr.f32.gmra.mxu0 %v779
    %v897 = vpop.f32.mrf.mxu0
    %v898 = vadd.f32 0.0, %v897
    %v899 = vpop.f32.mrf.mxu0
    %900 = vmatprep.mubr.f32.mxu0 0.0
    %901 = vmatmul.mubr.f32.gmra.mxu0 %v780
    %v902 = vpop.f32.mrf.mxu0
    %v903 = vadd.f32 0.0, %v902
    %v904 = vpop.f32.mrf.mxu0
    %905 = vmatprep.mubr.f32.mxu0 0.0
    %906 = vmatmul.mubr.f32.gmra.mxu0 %v781
    %v907 = vpop.f32.mrf.mxu0
    %v908 = vadd.f32 0.0, %v907
    %v909 = vpop.f32.mrf.mxu0
    %910 = vmatprep.mubr.f32.mxu0 0.0
    %911 = vmatmul.mubr.f32.gmra.mxu0 %v782
    %v912 = vpop.f32.mrf.mxu0
    %v913 = vadd.f32 0.0, %v912
    %v914 = vpop.f32.mrf.mxu0
    %915 = vmatprep.mubr.f32.mxu0 0.0
    %916 = vmatmul.mubr.f32.gmra.mxu0 %v783
    %v917 = vpop.f32.mrf.mxu0
    %v918 = vadd.f32 0.0, %v917
    %v919 = vpop.f32.mrf.mxu0
    %920 = vmatprep.mubr.f32.mxu0 0.0
    %921 = vmatmul.mubr.f32.gmra.mxu0 %v784
    %v922 = vpop.f32.mrf.mxu0
    %v923 = vadd.f32 0.0, %v922
    %v924 = vpop.f32.mrf.mxu0
    %925 = vmatprep.mubr.f32.mxu0 0.0
    %926 = vmatmul.mubr.f32.gmra.mxu0 %v785
    %v927 = vpop.f32.mrf.mxu0
    %v928 = vadd.f32 0.0, %v927
    %v929 = vpop.f32.mrf.mxu0
    %930 = vmatprep.mubr.f32.mxu0 0.0
    %931 = vmatmul.mubr.f32.gmra.mxu0 %v786
    %v932 = vpop.f32.mrf.mxu0
    %v933 = vadd.f32 0.0, %v932
    %v934 = vpop.f32.mrf.mxu0
    %935 = vmatprep.mubr.f32.mxu0 0.0
    %936 = vmatmul.mubr.f32.gmra.mxu0 %v787
    %v937 = vpop.f32.mrf.mxu0
    %v938 = vadd.f32 0.0, %v937
    %v939 = vpop.f32.mrf.mxu0
    %940 = vmatprep.mubr.f32.mxu0 0.0
    %941 = vmatmul.mubr.f32.gmra.mxu0 %v788
    %v942 = vpop.f32.mrf.mxu0
    %v943 = vadd.f32 0.0, %v942
    %v944 = vpop.f32.mrf.mxu0
    %945 = vmatprep.mubr.f32.mxu0 0.0
    %946 = vmatmul.mubr.f32.gmra.mxu0 %v789
    %v947 = vpop.f32.mrf.mxu0
    %v948 = vadd.f32 0.0, %v947
    %v949 = vpop.f32.mrf.mxu0
    %950 = vmatprep.mubr.f32.mxu0 0.0
    %951 = vmatmul.mubr.f32.gmra.mxu0 %v790
    %v952 = vpop.f32.mrf.mxu0
    %v953 = vadd.f32 0.0, %v952
    %v954 = vpop.f32.mrf.mxu0
    %955 = vmatprep.mubr.f32.mxu0 0.0
    %956 = vmatmul.mubr.f32.gmra.mxu0 %v791
    %v957 = vpop.f32.mrf.mxu0
    %v958 = vadd.f32 0.0, %v957
    %v959 = vpop.f32.mrf.mxu0
    %960 = vmatprep.mubr.f32.mxu0 0.0
    %961 = vmatmul.mubr.f32.gmra.mxu0 %v792
    %v962 = vpop.f32.mrf.mxu0
    %v963 = vadd.f32 0.0, %v962
    %v964 = vpop.f32.mrf.mxu0
    %965 = vmatprep.mubr.f32.mxu0 0.0
    %966 = vmatmul.mubr.f32.gmra.mxu0 %v793
    %v967 = vpop.f32.mrf.mxu0
    %v968 = vadd.f32 0.0, %v967
    %v969 = vpop.f32.mrf.mxu0
    %970 = vmatprep.mubr.f32.mxu0 0.0
    %971 = vmatmul.mubr.f32.gmra.mxu0 %v794
    %v972 = vpop.f32.mrf.mxu0
    %v973 = vadd.f32 0.0, %v972
    %v974 = vpop.f32.mrf.mxu0
    %975 = vmatprep.mubr.f32.mxu0 0.0
    %976 = vmatmul.mubr.f32.gmra.mxu0 %v795
    %v977 = vpop.f32.mrf.mxu0
    %v978 = vadd.f32 0.0, %v977
    %v979 = vpop.f32.mrf.mxu0
    %980 = vmatprep.mubr.f32.mxu0 0.0
    %981 = vmatmul.mubr.f32.gmra.mxu0 %v796
    %v982 = vpop.f32.mrf.mxu0
    %v983 = vadd.f32 0.0, %v982
    %v984 = vpop.f32.mrf.mxu0
    %985 = vmatprep.mubr.f32.mxu0 0.0
    %986 = vmatmul.mubr.f32.gmra.mxu0 %v797
    %v987 = vpop.f32.mrf.mxu0
    %v988 = vadd.f32 0.0, %v987
    %v989 = vpop.f32.mrf.mxu0
    %990 = vmatprep.mubr.f32.mxu0 0.0
    %991 = vmatmul.mubr.f32.gmra.mxu0 %v798
    %v992 = vpop.f32.mrf.mxu0
    %v993 = vadd.f32 0.0, %v992
    %v994 = vpop.f32.mrf.mxu0
    %995 = vdwg.mxu0
    %v996 = vadd.f32 %v753, %v883
    %v997 = vadd.f32 %v754, %v888
    %v998 = vadd.f32 %v755, %v893
    %v999 = vadd.f32 %v756, %v898
    %v1000 = vadd.f32 %v757, %v903
    %v1001 = vadd.f32 %v758, %v908
    %v1002 = vadd.f32 %v759, %v913
    %v1003 = vadd.f32 %v760, %v918
    %v1004 = vadd.f32 %v761, %v923
    %v1005 = vadd.f32 %v762, %v928
    %v1006 = vadd.f32 %v763, %v933
    %v1007 = vadd.f32 %v764, %v938
    %v1008 = vadd.f32 %v765, %v943
    %v1009 = vadd.f32 %v766, %v948
    %v1010 = vadd.f32 %v767, %v953
    %v1011 = vadd.f32 %v768, %v958
    %v1012 = vadd.f32 %v769, %v963
    %v1013 = vadd.f32 %v770, %v968
    %v1014 = vadd.f32 %v771, %v973
    %v1015 = vadd.f32 %v772, %v978
    %v1016 = vadd.f32 %v773, %v983
    %v1017 = vadd.f32 %v774, %v988
    %v1018 = vadd.f32 %v775, %v993
    %v1019 = vld [vmem:[#allocation3 + $0xb] sm:$0xff]
    %v1020 = vld [vmem:[#allocation3 + $0x13] sm:$0xff]
    %v1021 = vld [vmem:[#allocation3 + $0x1b] sm:$0xff]
    %v1022 = vld [vmem:[#allocation3 + $0x23] sm:$0xff]
    %v1023 = vld [vmem:[#allocation3 + $0x2b] sm:$0xff]
    %v1024 = vld [vmem:[#allocation3 + $0x33] sm:$0xff]
    %v1025 = vld [vmem:[#allocation3 + $0x3b] sm:$0xff]
    %v1026 = vld [vmem:[#allocation3 + $0x43] sm:$0xff]
    %v1027 = vld [vmem:[#allocation3 + $0x4b] sm:$0xff]
    %v1028 = vld [vmem:[#allocation3 + $0x53] sm:$0xff]
    %v1029 = vld [vmem:[#allocation3 + $0x5b] sm:$0xff]
    %v1030 = vld [vmem:[#allocation3 + $0x63] sm:$0xff]
    %v1031 = vld [vmem:[#allocation3 + $0x6b] sm:$0xff]
    %v1032 = vld [vmem:[#allocation3 + $0x73] sm:$0xff]
    %v1033 = vld [vmem:[#allocation3 + $0x7b] sm:$0xff]
    %v1034 = vld [vmem:[#allocation3 + $0x83] sm:$0xff]
    %v1035 = vld [vmem:[#allocation3 + $0x8b] sm:$0xff]
    %v1036 = vld [vmem:[#allocation3 + $0x93] sm:$0xff]
    %v1037 = vld [vmem:[#allocation3 + $0x9b] sm:$0xff]
    %v1038 = vld [vmem:[#allocation3 + $0xa3] sm:$0xff]
    %v1039 = vld [vmem:[#allocation3 + $0xab] sm:$0xff]
    %v1040 = vld [vmem:[#allocation3 + $0xb3] sm:$0xff]
    %v1041 = vld [vmem:[#allocation3 + $0xbb] sm:$0x3]
    %s1042 = scalar_lea.vmem [#allocation6], 512
    %v1043 = vld [vmem:[%s1042] sm:$0xff]
    %v1044 = vld [vmem:[%s1042 + $0x8] sm:$0xff]
    %v1045 = vld [vmem:[%s1042 + $0x10] sm:$0xff]
    %v1046 = vld [vmem:[%s1042 + $0x18] sm:$0xff]
    %v1047 = vld [vmem:[%s1042 + $0x20] sm:$0xff]
    %v1048 = vld [vmem:[%s1042 + $0x28] sm:$0xff]
    %v1049 = vld [vmem:[%s1042 + $0x30] sm:$0xff]
    %v1050 = vld [vmem:[%s1042 + $0x38] sm:$0xff]
    %v1051 = vld [vmem:[%s1042 + $0x40] sm:$0xff]
    %v1052 = vld [vmem:[%s1042 + $0x48] sm:$0xff]
    %v1053 = vld [vmem:[%s1042 + $0x50] sm:$0xff]
    %v1054 = vld [vmem:[%s1042 + $0x58] sm:$0xff]
    %v1055 = vld [vmem:[%s1042 + $0x60] sm:$0xff]
    %v1056 = vld [vmem:[%s1042 + $0x68] sm:$0xff]
    %v1057 = vld [vmem:[%s1042 + $0x70] sm:$0xff]
    %v1058 = vld [vmem:[%s1042 + $0x78] sm:$0xff]
    %1059 = vmatprep.subr.mxu0 0.0
    %1060 = vmatpush1.msra.mxu0 %v1058
    %1061 = vmatprep.subr.mxu0 0.0
    %1062 = vmatpush1.msra.mxu0 %v1057
    %1063 = vmatprep.subr.mxu0 0.0
    %1064 = vmatpush1.msra.mxu0 %v1056
    %1065 = vmatprep.subr.mxu0 0.0
    %1066 = vmatpush1.msra.mxu0 %v1055
    %1067 = vmatprep.subr.mxu0 0.0
    %1068 = vmatpush1.msra.mxu0 %v1054
    %1069 = vmatprep.subr.mxu0 0.0
    %1070 = vmatpush1.msra.mxu0 %v1053
    %1071 = vmatprep.subr.mxu0 0.0
    %1072 = vmatpush1.msra.mxu0 %v1052
    %1073 = vmatprep.subr.mxu0 0.0
    %1074 = vmatpush1.msra.mxu0 %v1051
    %1075 = vmatprep.subr.mxu0 0.0
    %1076 = vmatpush1.msra.mxu0 %v1050
    %1077 = vmatprep.subr.mxu0 0.0
    %1078 = vmatpush1.msra.mxu0 %v1049
    %1079 = vmatprep.subr.mxu0 0.0
    %1080 = vmatpush1.msra.mxu0 %v1048
    %1081 = vmatprep.subr.mxu0 0.0
    %1082 = vmatpush1.msra.mxu0 %v1047
    %1083 = vmatprep.subr.mxu0 0.0
    %1084 = vmatpush1.msra.mxu0 %v1046
    %1085 = vmatprep.subr.mxu0 0.0
    %1086 = vmatpush1.msra.mxu0 %v1045
    %1087 = vmatprep.subr.mxu0 0.0
    %1088 = vmatpush1.msra.mxu0 %v1044
    %1089 = vmatprep.subr.mxu0 0.0
    %1090 = vmatpush1.msra.mxu0 %v1043
    %1091 = vmatprep.subr.mxu0 0.0
    %1092 = vmatpush2.msra.mxu0 0.0
    %1093 = vmatprep.subr.mxu0 0.0
    %1094 = vmatpush2.msra.mxu0 0.0
    %1095 = vmatprep.subr.mxu0 0.0
    %1096 = vmatpush2.msra.mxu0 0.0
    %1097 = vmatprep.subr.mxu0 0.0
    %1098 = vmatpush2.msra.mxu0 0.0
    %1099 = vmatprep.subr.mxu0 0.0
    %1100 = vmatpush2.msra.mxu0 0.0
    %1101 = vmatprep.subr.mxu0 0.0
    %1102 = vmatpush2.msra.mxu0 0.0
    %1103 = vmatprep.subr.mxu0 0.0
    %1104 = vmatpush2.msra.mxu0 0.0
    %1105 = vmatprep.subr.mxu0 0.0
    %1106 = vmatpush2.msra.mxu0 0.0
    %1107 = vmatprep.subr.mxu0 0.0
    %1108 = vmatpush2.msra.mxu0 0.0
    %1109 = vmatprep.subr.mxu0 0.0
    %1110 = vmatpush2.msra.mxu0 0.0
    %1111 = vmatprep.subr.mxu0 0.0
    %1112 = vmatpush2.msra.mxu0 0.0
    %1113 = vmatprep.subr.mxu0 0.0
    %1114 = vmatpush2.msra.mxu0 0.0
    %1115 = vmatprep.subr.mxu0 0.0
    %1116 = vmatpush2.msra.mxu0 0.0
    %1117 = vmatprep.subr.mxu0 0.0
    %1118 = vmatpush2.msra.mxu0 0.0
    %1119 = vmatprep.subr.mxu0 0.0
    %1120 = vmatpush2.msra.mxu0 0.0
    %1121 = vmatprep.subr.mxu0 0.0
    %1122 = vmatpush2.msra.mxu0 0.0
    %1123 = vmatprep.mubr.f32.mxu0 0.0
    %1124 = vmatmul.mubr.f32.gmra.mxu0 %v1019
    %v1125 = vpop.f32.mrf.mxu0
    %v1126 = vadd.f32 0.0, %v1125
    %v1127 = vpop.f32.mrf.mxu0
    %1128 = vmatprep.mubr.f32.mxu0 0.0
    %1129 = vmatmul.mubr.f32.gmra.mxu0 %v1020
    %v1130 = vpop.f32.mrf.mxu0
    %v1131 = vadd.f32 0.0, %v1130
    %v1132 = vpop.f32.mrf.mxu0
    %1133 = vmatprep.mubr.f32.mxu0 0.0
    %1134 = vmatmul.mubr.f32.gmra.mxu0 %v1021
    %v1135 = vpop.f32.mrf.mxu0
    %v1136 = vadd.f32 0.0, %v1135
    %v1137 = vpop.f32.mrf.mxu0
    %1138 = vmatprep.mubr.f32.mxu0 0.0
    %1139 = vmatmul.mubr.f32.gmra.mxu0 %v1022
    %v1140 = vpop.f32.mrf.mxu0
    %v1141 = vadd.f32 0.0, %v1140
    %v1142 = vpop.f32.mrf.mxu0
    %1143 = vmatprep.mubr.f32.mxu0 0.0
    %1144 = vmatmul.mubr.f32.gmra.mxu0 %v1023
    %v1145 = vpop.f32.mrf.mxu0
    %v1146 = vadd.f32 0.0, %v1145
    %v1147 = vpop.f32.mrf.mxu0
    %1148 = vmatprep.mubr.f32.mxu0 0.0
    %1149 = vmatmul.mubr.f32.gmra.mxu0 %v1024
    %v1150 = vpop.f32.mrf.mxu0
    %v1151 = vadd.f32 0.0, %v1150
    %v1152 = vpop.f32.mrf.mxu0
    %1153 = vmatprep.mubr.f32.mxu0 0.0
    %1154 = vmatmul.mubr.f32.gmra.mxu0 %v1025
    %v1155 = vpop.f32.mrf.mxu0
    %v1156 = vadd.f32 0.0, %v1155
    %v1157 = vpop.f32.mrf.mxu0
    %1158 = vmatprep.mubr.f32.mxu0 0.0
    %1159 = vmatmul.mubr.f32.gmra.mxu0 %v1026
    %v1160 = vpop.f32.mrf.mxu0
    %v1161 = vadd.f32 0.0, %v1160
    %v1162 = vpop.f32.mrf.mxu0
    %1163 = vmatprep.mubr.f32.mxu0 0.0
    %1164 = vmatmul.mubr.f32.gmra.mxu0 %v1027
    %v1165 = vpop.f32.mrf.mxu0
    %v1166 = vadd.f32 0.0, %v1165
    %v1167 = vpop.f32.mrf.mxu0
    %1168 = vmatprep.mubr.f32.mxu0 0.0
    %1169 = vmatmul.mubr.f32.gmra.mxu0 %v1028
    %v1170 = vpop.f32.mrf.mxu0
    %v1171 = vadd.f32 0.0, %v1170
    %v1172 = vpop.f32.mrf.mxu0
    %1173 = vmatprep.mubr.f32.mxu0 0.0
    %1174 = vmatmul.mubr.f32.gmra.mxu0 %v1029
    %v1175 = vpop.f32.mrf.mxu0
    %v1176 = vadd.f32 0.0, %v1175
    %v1177 = vpop.f32.mrf.mxu0
    %1178 = vmatprep.mubr.f32.mxu0 0.0
    %1179 = vmatmul.mubr.f32.gmra.mxu0 %v1030
    %v1180 = vpop.f32.mrf.mxu0
    %v1181 = vadd.f32 0.0, %v1180
    %v1182 = vpop.f32.mrf.mxu0
    %1183 = vmatprep.mubr.f32.mxu0 0.0
    %1184 = vmatmul.mubr.f32.gmra.mxu0 %v1031
    %v1185 = vpop.f32.mrf.mxu0
    %v1186 = vadd.f32 0.0, %v1185
    %v1187 = vpop.f32.mrf.mxu0
    %1188 = vmatprep.mubr.f32.mxu0 0.0
    %1189 = vmatmul.mubr.f32.gmra.mxu0 %v1032
    %v1190 = vpop.f32.mrf.mxu0
    %v1191 = vadd.f32 0.0, %v1190
    %v1192 = vpop.f32.mrf.mxu0
    %1193 = vmatprep.mubr.f32.mxu0 0.0
    %1194 = vmatmul.mubr.f32.gmra.mxu0 %v1033
    %v1195 = vpop.f32.mrf.mxu0
    %v1196 = vadd.f32 0.0, %v1195
    %v1197 = vpop.f32.mrf.mxu0
    %1198 = vmatprep.mubr.f32.mxu0 0.0
    %1199 = vmatmul.mubr.f32.gmra.mxu0 %v1034
    %v1200 = vpop.f32.mrf.mxu0
    %v1201 = vadd.f32 0.0, %v1200
    %v1202 = vpop.f32.mrf.mxu0
    %1203 = vmatprep.mubr.f32.mxu0 0.0
    %1204 = vmatmul.mubr.f32.gmra.mxu0 %v1035
    %v1205 = vpop.f32.mrf.mxu0
    %v1206 = vadd.f32 0.0, %v1205
    %v1207 = vpop.f32.mrf.mxu0
    %1208 = vmatprep.mubr.f32.mxu0 0.0
    %1209 = vmatmul.mubr.f32.gmra.mxu0 %v1036
    %v1210 = vpop.f32.mrf.mxu0
    %v1211 = vadd.f32 0.0, %v1210
    %v1212 = vpop.f32.mrf.mxu0
    %1213 = vmatprep.mubr.f32.mxu0 0.0
    %1214 = vmatmul.mubr.f32.gmra.mxu0 %v1037
    %v1215 = vpop.f32.mrf.mxu0
    %v1216 = vadd.f32 0.0, %v1215
    %v1217 = vpop.f32.mrf.mxu0
    %1218 = vmatprep.mubr.f32.mxu0 0.0
    %1219 = vmatmul.mubr.f32.gmra.mxu0 %v1038
    %v1220 = vpop.f32.mrf.mxu0
    %v1221 = vadd.f32 0.0, %v1220
    %v1222 = vpop.f32.mrf.mxu0
    %1223 = vmatprep.mubr.f32.mxu0 0.0
    %1224 = vmatmul.mubr.f32.gmra.mxu0 %v1039
    %v1225 = vpop.f32.mrf.mxu0
    %v1226 = vadd.f32 0.0, %v1225
    %v1227 = vpop.f32.mrf.mxu0
    %1228 = vmatprep.mubr.f32.mxu0 0.0
    %1229 = vmatmul.mubr.f32.gmra.mxu0 %v1040
    %v1230 = vpop.f32.mrf.mxu0
    %v1231 = vadd.f32 0.0, %v1230
    %v1232 = vpop.f32.mrf.mxu0
    %1233 = vmatprep.mubr.f32.mxu0 0.0
    %1234 = vmatmul.mubr.f32.gmra.mxu0 %v1041
    %v1235 = vpop.f32.mrf.mxu0
    %v1236 = vadd.f32 0.0, %v1235
    %v1237 = vpop.f32.mrf.mxu0
    %1238 = vdwg.mxu0
    %v1239 = vadd.f32 %v996, %v1126
    %v1240 = vadd.f32 %v997, %v1131
    %v1241 = vadd.f32 %v998, %v1136
    %v1242 = vadd.f32 %v999, %v1141
    %v1243 = vadd.f32 %v1000, %v1146
    %v1244 = vadd.f32 %v1001, %v1151
    %v1245 = vadd.f32 %v1002, %v1156
    %v1246 = vadd.f32 %v1003, %v1161
    %v1247 = vadd.f32 %v1004, %v1166
    %v1248 = vadd.f32 %v1005, %v1171
    %v1249 = vadd.f32 %v1006, %v1176
    %v1250 = vadd.f32 %v1007, %v1181
    %v1251 = vadd.f32 %v1008, %v1186
    %v1252 = vadd.f32 %v1009, %v1191
    %v1253 = vadd.f32 %v1010, %v1196
    %v1254 = vadd.f32 %v1011, %v1201
    %v1255 = vadd.f32 %v1012, %v1206
    %v1256 = vadd.f32 %v1013, %v1211
    %v1257 = vadd.f32 %v1014, %v1216
    %v1258 = vadd.f32 %v1015, %v1221
    %v1259 = vadd.f32 %v1016, %v1226
    %v1260 = vadd.f32 %v1017, %v1231
    %v1261 = vadd.f32 %v1018, %v1236
    %v1262 = vld [vmem:[#allocation3 + $0xc] sm:$0xff]
    %v1263 = vld [vmem:[#allocation3 + $0x14] sm:$0xff]
    %v1264 = vld [vmem:[#allocation3 + $0x1c] sm:$0xff]
    %v1265 = vld [vmem:[#allocation3 + $0x24] sm:$0xff]
    %v1266 = vld [vmem:[#allocation3 + $0x2c] sm:$0xff]
    %v1267 = vld [vmem:[#allocation3 + $0x34] sm:$0xff]
    %v1268 = vld [vmem:[#allocation3 + $0x3c] sm:$0xff]
    %v1269 = vld [vmem:[#allocation3 + $0x44] sm:$0xff]
    %v1270 = vld [vmem:[#allocation3 + $0x4c] sm:$0xff]
    %v1271 = vld [vmem:[#allocation3 + $0x54] sm:$0xff]
    %v1272 = vld [vmem:[#allocation3 + $0x5c] sm:$0xff]
    %v1273 = vld [vmem:[#allocation3 + $0x64] sm:$0xff]
    %v1274 = vld [vmem:[#allocation3 + $0x6c] sm:$0xff]
    %v1275 = vld [vmem:[#allocation3 + $0x74] sm:$0xff]
    %v1276 = vld [vmem:[#allocation3 + $0x7c] sm:$0xff]
    %v1277 = vld [vmem:[#allocation3 + $0x84] sm:$0xff]
    %v1278 = vld [vmem:[#allocation3 + $0x8c] sm:$0xff]
    %v1279 = vld [vmem:[#allocation3 + $0x94] sm:$0xff]
    %v1280 = vld [vmem:[#allocation3 + $0x9c] sm:$0xff]
    %v1281 = vld [vmem:[#allocation3 + $0xa4] sm:$0xff]
    %v1282 = vld [vmem:[#allocation3 + $0xac] sm:$0xff]
    %v1283 = vld [vmem:[#allocation3 + $0xb4] sm:$0xff]
    %v1284 = vld [vmem:[#allocation3 + $0xbc] sm:$0x3]
    %s1285 = scalar_lea.vmem [#allocation6], 640
    %v1286 = vld [vmem:[%s1285] sm:$0xff]
    %v1287 = vld [vmem:[%s1285 + $0x8] sm:$0xff]
    %v1288 = vld [vmem:[%s1285 + $0x10] sm:$0xff]
    %v1289 = vld [vmem:[%s1285 + $0x18] sm:$0xff]
    %v1290 = vld [vmem:[%s1285 + $0x20] sm:$0xff]
    %v1291 = vld [vmem:[%s1285 + $0x28] sm:$0xff]
    %v1292 = vld [vmem:[%s1285 + $0x30] sm:$0xff]
    %v1293 = vld [vmem:[%s1285 + $0x38] sm:$0xff]
    %v1294 = vld [vmem:[%s1285 + $0x40] sm:$0xff]
    %v1295 = vld [vmem:[%s1285 + $0x48] sm:$0xff]
    %v1296 = vld [vmem:[%s1285 + $0x50] sm:$0xff]
    %v1297 = vld [vmem:[%s1285 + $0x58] sm:$0xff]
    %v1298 = vld [vmem:[%s1285 + $0x60] sm:$0xff]
    %v1299 = vld [vmem:[%s1285 + $0x68] sm:$0xff]
    %v1300 = vld [vmem:[%s1285 + $0x70] sm:$0xff]
    %v1301 = vld [vmem:[%s1285 + $0x78] sm:$0xff]
    %1302 = vmatprep.subr.mxu0 0.0
    %1303 = vmatpush1.msra.mxu0 %v1301
    %1304 = vmatprep.subr.mxu0 0.0
    %1305 = vmatpush1.msra.mxu0 %v1300
    %1306 = vmatprep.subr.mxu0 0.0
    %1307 = vmatpush1.msra.mxu0 %v1299
    %1308 = vmatprep.subr.mxu0 0.0
    %1309 = vmatpush1.msra.mxu0 %v1298
    %1310 = vmatprep.subr.mxu0 0.0
    %1311 = vmatpush1.msra.mxu0 %v1297
    %1312 = vmatprep.subr.mxu0 0.0
    %1313 = vmatpush1.msra.mxu0 %v1296
    %1314 = vmatprep.subr.mxu0 0.0
    %1315 = vmatpush1.msra.mxu0 %v1295
    %1316 = vmatprep.subr.mxu0 0.0
    %1317 = vmatpush1.msra.mxu0 %v1294
    %1318 = vmatprep.subr.mxu0 0.0
    %1319 = vmatpush1.msra.mxu0 %v1293
    %1320 = vmatprep.subr.mxu0 0.0
    %1321 = vmatpush1.msra.mxu0 %v1292
    %1322 = vmatprep.subr.mxu0 0.0
    %1323 = vmatpush1.msra.mxu0 %v1291
    %1324 = vmatprep.subr.mxu0 0.0
    %1325 = vmatpush1.msra.mxu0 %v1290
    %1326 = vmatprep.subr.mxu0 0.0
    %1327 = vmatpush1.msra.mxu0 %v1289
    %1328 = vmatprep.subr.mxu0 0.0
    %1329 = vmatpush1.msra.mxu0 %v1288
    %1330 = vmatprep.subr.mxu0 0.0
    %1331 = vmatpush1.msra.mxu0 %v1287
    %1332 = vmatprep.subr.mxu0 0.0
    %1333 = vmatpush1.msra.mxu0 %v1286
    %1334 = vmatprep.subr.mxu0 0.0
    %1335 = vmatpush2.msra.mxu0 0.0
    %1336 = vmatprep.subr.mxu0 0.0
    %1337 = vmatpush2.msra.mxu0 0.0
    %1338 = vmatprep.subr.mxu0 0.0
    %1339 = vmatpush2.msra.mxu0 0.0
    %1340 = vmatprep.subr.mxu0 0.0
    %1341 = vmatpush2.msra.mxu0 0.0
    %1342 = vmatprep.subr.mxu0 0.0
    %1343 = vmatpush2.msra.mxu0 0.0
    %1344 = vmatprep.subr.mxu0 0.0
    %1345 = vmatpush2.msra.mxu0 0.0
    %1346 = vmatprep.subr.mxu0 0.0
    %1347 = vmatpush2.msra.mxu0 0.0
    %1348 = vmatprep.subr.mxu0 0.0
    %1349 = vmatpush2.msra.mxu0 0.0
    %1350 = vmatprep.subr.mxu0 0.0
    %1351 = vmatpush2.msra.mxu0 0.0
    %1352 = vmatprep.subr.mxu0 0.0
    %1353 = vmatpush2.msra.mxu0 0.0
    %1354 = vmatprep.subr.mxu0 0.0
    %1355 = vmatpush2.msra.mxu0 0.0
    %1356 = vmatprep.subr.mxu0 0.0
    %1357 = vmatpush2.msra.mxu0 0.0
    %1358 = vmatprep.subr.mxu0 0.0
    %1359 = vmatpush2.msra.mxu0 0.0
    %1360 = vmatprep.subr.mxu0 0.0
    %1361 = vmatpush2.msra.mxu0 0.0
    %1362 = vmatprep.subr.mxu0 0.0
    %1363 = vmatpush2.msra.mxu0 0.0
    %1364 = vmatprep.subr.mxu0 0.0
    %1365 = vmatpush2.msra.mxu0 0.0
    %1366 = vmatprep.mubr.f32.mxu0 0.0
    %1367 = vmatmul.mubr.f32.gmra.mxu0 %v1262
    %v1368 = vpop.f32.mrf.mxu0
    %v1369 = vadd.f32 0.0, %v1368
    %v1370 = vpop.f32.mrf.mxu0
    %1371 = vmatprep.mubr.f32.mxu0 0.0
    %1372 = vmatmul.mubr.f32.gmra.mxu0 %v1263
    %v1373 = vpop.f32.mrf.mxu0
    %v1374 = vadd.f32 0.0, %v1373
    %v1375 = vpop.f32.mrf.mxu0
    %1376 = vmatprep.mubr.f32.mxu0 0.0
    %1377 = vmatmul.mubr.f32.gmra.mxu0 %v1264
    %v1378 = vpop.f32.mrf.mxu0
    %v1379 = vadd.f32 0.0, %v1378
    %v1380 = vpop.f32.mrf.mxu0
    %1381 = vmatprep.mubr.f32.mxu0 0.0
    %1382 = vmatmul.mubr.f32.gmra.mxu0 %v1265
    %v1383 = vpop.f32.mrf.mxu0
    %v1384 = vadd.f32 0.0, %v1383
    %v1385 = vpop.f32.mrf.mxu0
    %1386 = vmatprep.mubr.f32.mxu0 0.0
    %1387 = vmatmul.mubr.f32.gmra.mxu0 %v1266
    %v1388 = vpop.f32.mrf.mxu0
    %v1389 = vadd.f32 0.0, %v1388
    %v1390 = vpop.f32.mrf.mxu0
    %1391 = vmatprep.mubr.f32.mxu0 0.0
    %1392 = vmatmul.mubr.f32.gmra.mxu0 %v1267
    %v1393 = vpop.f32.mrf.mxu0
    %v1394 = vadd.f32 0.0, %v1393
    %v1395 = vpop.f32.mrf.mxu0
    %1396 = vmatprep.mubr.f32.mxu0 0.0
    %1397 = vmatmul.mubr.f32.gmra.mxu0 %v1268
    %v1398 = vpop.f32.mrf.mxu0
    %v1399 = vadd.f32 0.0, %v1398
    %v1400 = vpop.f32.mrf.mxu0
    %1401 = vmatprep.mubr.f32.mxu0 0.0
    %1402 = vmatmul.mubr.f32.gmra.mxu0 %v1269
    %v1403 = vpop.f32.mrf.mxu0
    %v1404 = vadd.f32 0.0, %v1403
    %v1405 = vpop.f32.mrf.mxu0
    %1406 = vmatprep.mubr.f32.mxu0 0.0
    %1407 = vmatmul.mubr.f32.gmra.mxu0 %v1270
    %v1408 = vpop.f32.mrf.mxu0
    %v1409 = vadd.f32 0.0, %v1408
    %v1410 = vpop.f32.mrf.mxu0
    %1411 = vmatprep.mubr.f32.mxu0 0.0
    %1412 = vmatmul.mubr.f32.gmra.mxu0 %v1271
    %v1413 = vpop.f32.mrf.mxu0
    %v1414 = vadd.f32 0.0, %v1413
    %v1415 = vpop.f32.mrf.mxu0
    %1416 = vmatprep.mubr.f32.mxu0 0.0
    %1417 = vmatmul.mubr.f32.gmra.mxu0 %v1272
    %v1418 = vpop.f32.mrf.mxu0
    %v1419 = vadd.f32 0.0, %v1418
    %v1420 = vpop.f32.mrf.mxu0
    %1421 = vmatprep.mubr.f32.mxu0 0.0
    %1422 = vmatmul.mubr.f32.gmra.mxu0 %v1273
    %v1423 = vpop.f32.mrf.mxu0
    %v1424 = vadd.f32 0.0, %v1423
    %v1425 = vpop.f32.mrf.mxu0
    %1426 = vmatprep.mubr.f32.mxu0 0.0
    %1427 = vmatmul.mubr.f32.gmra.mxu0 %v1274
    %v1428 = vpop.f32.mrf.mxu0
    %v1429 = vadd.f32 0.0, %v1428
    %v1430 = vpop.f32.mrf.mxu0
    %1431 = vmatprep.mubr.f32.mxu0 0.0
    %1432 = vmatmul.mubr.f32.gmra.mxu0 %v1275
    %v1433 = vpop.f32.mrf.mxu0
    %v1434 = vadd.f32 0.0, %v1433
    %v1435 = vpop.f32.mrf.mxu0
    %1436 = vmatprep.mubr.f32.mxu0 0.0
    %1437 = vmatmul.mubr.f32.gmra.mxu0 %v1276
    %v1438 = vpop.f32.mrf.mxu0
    %v1439 = vadd.f32 0.0, %v1438
    %v1440 = vpop.f32.mrf.mxu0
    %1441 = vmatprep.mubr.f32.mxu0 0.0
    %1442 = vmatmul.mubr.f32.gmra.mxu0 %v1277
    %v1443 = vpop.f32.mrf.mxu0
    %v1444 = vadd.f32 0.0, %v1443
    %v1445 = vpop.f32.mrf.mxu0
    %1446 = vmatprep.mubr.f32.mxu0 0.0
    %1447 = vmatmul.mubr.f32.gmra.mxu0 %v1278
    %v1448 = vpop.f32.mrf.mxu0
    %v1449 = vadd.f32 0.0, %v1448
    %v1450 = vpop.f32.mrf.mxu0
    %1451 = vmatprep.mubr.f32.mxu0 0.0
    %1452 = vmatmul.mubr.f32.gmra.mxu0 %v1279
    %v1453 = vpop.f32.mrf.mxu0
    %v1454 = vadd.f32 0.0, %v1453
    %v1455 = vpop.f32.mrf.mxu0
    %1456 = vmatprep.mubr.f32.mxu0 0.0
    %1457 = vmatmul.mubr.f32.gmra.mxu0 %v1280
    %v1458 = vpop.f32.mrf.mxu0
    %v1459 = vadd.f32 0.0, %v1458
    %v1460 = vpop.f32.mrf.mxu0
    %1461 = vmatprep.mubr.f32.mxu0 0.0
    %1462 = vmatmul.mubr.f32.gmra.mxu0 %v1281
    %v1463 = vpop.f32.mrf.mxu0
    %v1464 = vadd.f32 0.0, %v1463
    %v1465 = vpop.f32.mrf.mxu0
    %1466 = vmatprep.mubr.f32.mxu0 0.0
    %1467 = vmatmul.mubr.f32.gmra.mxu0 %v1282
    %v1468 = vpop.f32.mrf.mxu0
    %v1469 = vadd.f32 0.0, %v1468
    %v1470 = vpop.f32.mrf.mxu0
    %1471 = vmatprep.mubr.f32.mxu0 0.0
    %1472 = vmatmul.mubr.f32.gmra.mxu0 %v1283
    %v1473 = vpop.f32.mrf.mxu0
    %v1474 = vadd.f32 0.0, %v1473
    %v1475 = vpop.f32.mrf.mxu0
    %1476 = vmatprep.mubr.f32.mxu0 0.0
    %1477 = vmatmul.mubr.f32.gmra.mxu0 %v1284
    %v1478 = vpop.f32.mrf.mxu0
    %v1479 = vadd.f32 0.0, %v1478
    %v1480 = vpop.f32.mrf.mxu0
    %1481 = vdwg.mxu0
    %v1482 = vadd.f32 %v1239, %v1369
    %v1483 = vadd.f32 %v1240, %v1374
    %v1484 = vadd.f32 %v1241, %v1379
    %v1485 = vadd.f32 %v1242, %v1384
    %v1486 = vadd.f32 %v1243, %v1389
    %v1487 = vadd.f32 %v1244, %v1394
    %v1488 = vadd.f32 %v1245, %v1399
    %v1489 = vadd.f32 %v1246, %v1404
    %v1490 = vadd.f32 %v1247, %v1409
    %v1491 = vadd.f32 %v1248, %v1414
    %v1492 = vadd.f32 %v1249, %v1419
    %v1493 = vadd.f32 %v1250, %v1424
    %v1494 = vadd.f32 %v1251, %v1429
    %v1495 = vadd.f32 %v1252, %v1434
    %v1496 = vadd.f32 %v1253, %v1439
    %v1497 = vadd.f32 %v1254, %v1444
    %v1498 = vadd.f32 %v1255, %v1449
    %v1499 = vadd.f32 %v1256, %v1454
    %v1500 = vadd.f32 %v1257, %v1459
    %v1501 = vadd.f32 %v1258, %v1464
    %v1502 = vadd.f32 %v1259, %v1469
    %v1503 = vadd.f32 %v1260, %v1474
    %v1504 = vadd.f32 %v1261, %v1479
    %v1505 = vld [vmem:[#allocation3 + $0x14] sm:$0xff]
    %v1506 = vld [vmem:[#allocation3 + $0x1c] sm:$0xff]
    %v1507 = vld [vmem:[#allocation3 + $0x24] sm:$0xff]
    %v1508 = vld [vmem:[#allocation3 + $0x2c] sm:$0xff]
    %v1509 = vld [vmem:[#allocation3 + $0x34] sm:$0xff]
    %v1510 = vld [vmem:[#allocation3 + $0x3c] sm:$0xff]
    %v1511 = vld [vmem:[#allocation3 + $0x44] sm:$0xff]
    %v1512 = vld [vmem:[#allocation3 + $0x4c] sm:$0xff]
    %v1513 = vld [vmem:[#allocation3 + $0x54] sm:$0xff]
    %v1514 = vld [vmem:[#allocation3 + $0x5c] sm:$0xff]
    %v1515 = vld [vmem:[#allocation3 + $0x64] sm:$0xff]
    %v1516 = vld [vmem:[#allocation3 + $0x6c] sm:$0xff]
    %v1517 = vld [vmem:[#allocation3 + $0x74] sm:$0xff]
    %v1518 = vld [vmem:[#allocation3 + $0x7c] sm:$0xff]
    %v1519 = vld [vmem:[#allocation3 + $0x84] sm:$0xff]
    %v1520 = vld [vmem:[#allocation3 + $0x8c] sm:$0xff]
    %v1521 = vld [vmem:[#allocation3 + $0x94] sm:$0xff]
    %v1522 = vld [vmem:[#allocation3 + $0x9c] sm:$0xff]
    %v1523 = vld [vmem:[#allocation3 + $0xa4] sm:$0xff]
    %v1524 = vld [vmem:[#allocation3 + $0xac] sm:$0xff]
    %v1525 = vld [vmem:[#allocation3 + $0xb4] sm:$0xff]
    %v1526 = vld [vmem:[#allocation3 + $0xbc] sm:$0xff]
    %v1527 = vld [vmem:[#allocation3 + $0xc4] sm:$0x3]
    %s1528 = scalar_lea.vmem [#allocation6], 768
    %v1529 = vld [vmem:[%s1528] sm:$0xff]
    %v1530 = vld [vmem:[%s1528 + $0x8] sm:$0xff]
    %v1531 = vld [vmem:[%s1528 + $0x10] sm:$0xff]
    %v1532 = vld [vmem:[%s1528 + $0x18] sm:$0xff]
    %v1533 = vld [vmem:[%s1528 + $0x20] sm:$0xff]
    %v1534 = vld [vmem:[%s1528 + $0x28] sm:$0xff]
    %v1535 = vld [vmem:[%s1528 + $0x30] sm:$0xff]
    %v1536 = vld [vmem:[%s1528 + $0x38] sm:$0xff]
    %v1537 = vld [vmem:[%s1528 + $0x40] sm:$0xff]
    %v1538 = vld [vmem:[%s1528 + $0x48] sm:$0xff]
    %v1539 = vld [vmem:[%s1528 + $0x50] sm:$0xff]
    %v1540 = vld [vmem:[%s1528 + $0x58] sm:$0xff]
    %v1541 = vld [vmem:[%s1528 + $0x60] sm:$0xff]
    %v1542 = vld [vmem:[%s1528 + $0x68] sm:$0xff]
    %v1543 = vld [vmem:[%s1528 + $0x70] sm:$0xff]
    %v1544 = vld [vmem:[%s1528 + $0x78] sm:$0xff]
    %1545 = vmatprep.subr.mxu0 0.0
    %1546 = vmatpush1.msra.mxu0 %v1544
    %1547 = vmatprep.subr.mxu0 0.0
    %1548 = vmatpush1.msra.mxu0 %v1543
    %1549 = vmatprep.subr.mxu0 0.0
    %1550 = vmatpush1.msra.mxu0 %v1542
    %1551 = vmatprep.subr.mxu0 0.0
    %1552 = vmatpush1.msra.mxu0 %v1541
    %1553 = vmatprep.subr.mxu0 0.0
    %1554 = vmatpush1.msra.mxu0 %v1540
    %1555 = vmatprep.subr.mxu0 0.0
    %1556 = vmatpush1.msra.mxu0 %v1539
    %1557 = vmatprep.subr.mxu0 0.0
    %1558 = vmatpush1.msra.mxu0 %v1538
    %1559 = vmatprep.subr.mxu0 0.0
    %1560 = vmatpush1.msra.mxu0 %v1537
    %1561 = vmatprep.subr.mxu0 0.0
    %1562 = vmatpush1.msra.mxu0 %v1536
    %1563 = vmatprep.subr.mxu0 0.0
    %1564 = vmatpush1.msra.mxu0 %v1535
    %1565 = vmatprep.subr.mxu0 0.0
    %1566 = vmatpush1.msra.mxu0 %v1534
    %1567 = vmatprep.subr.mxu0 0.0
    %1568 = vmatpush1.msra.mxu0 %v1533
    %1569 = vmatprep.subr.mxu0 0.0
    %1570 = vmatpush1.msra.mxu0 %v1532
    %1571 = vmatprep.subr.mxu0 0.0
    %1572 = vmatpush1.msra.mxu0 %v1531
    %1573 = vmatprep.subr.mxu0 0.0
    %1574 = vmatpush1.msra.mxu0 %v1530
    %1575 = vmatprep.subr.mxu0 0.0
    %1576 = vmatpush1.msra.mxu0 %v1529
    %1577 = vmatprep.subr.mxu0 0.0
    %1578 = vmatpush2.msra.mxu0 0.0
    %1579 = vmatprep.subr.mxu0 0.0
    %1580 = vmatpush2.msra.mxu0 0.0
    %1581 = vmatprep.subr.mxu0 0.0
    %1582 = vmatpush2.msra.mxu0 0.0
    %1583 = vmatprep.subr.mxu0 0.0
    %1584 = vmatpush2.msra.mxu0 0.0
    %1585 = vmatprep.subr.mxu0 0.0
    %1586 = vmatpush2.msra.mxu0 0.0
    %1587 = vmatprep.subr.mxu0 0.0
    %1588 = vmatpush2.msra.mxu0 0.0
    %1589 = vmatprep.subr.mxu0 0.0
    %1590 = vmatpush2.msra.mxu0 0.0
    %1591 = vmatprep.subr.mxu0 0.0
    %1592 = vmatpush2.msra.mxu0 0.0
    %1593 = vmatprep.subr.mxu0 0.0
    %1594 = vmatpush2.msra.mxu0 0.0
    %1595 = vmatprep.subr.mxu0 0.0
    %1596 = vmatpush2.msra.mxu0 0.0
    %1597 = vmatprep.subr.mxu0 0.0
    %1598 = vmatpush2.msra.mxu0 0.0
    %1599 = vmatprep.subr.mxu0 0.0
    %1600 = vmatpush2.msra.mxu0 0.0
    %1601 = vmatprep.subr.mxu0 0.0
    %1602 = vmatpush2.msra.mxu0 0.0
    %1603 = vmatprep.subr.mxu0 0.0
    %1604 = vmatpush2.msra.mxu0 0.0
    %1605 = vmatprep.subr.mxu0 0.0
    %1606 = vmatpush2.msra.mxu0 0.0
    %1607 = vmatprep.subr.mxu0 0.0
    %1608 = vmatpush2.msra.mxu0 0.0
    %1609 = vmatprep.mubr.f32.mxu0 0.0
    %1610 = vmatmul.mubr.f32.gmra.mxu0 %v1505
    %v1611 = vpop.f32.mrf.mxu0
    %v1612 = vadd.f32 0.0, %v1611
    %v1613 = vpop.f32.mrf.mxu0
    %1614 = vmatprep.mubr.f32.mxu0 0.0
    %1615 = vmatmul.mubr.f32.gmra.mxu0 %v1506
    %v1616 = vpop.f32.mrf.mxu0
    %v1617 = vadd.f32 0.0, %v1616
    %v1618 = vpop.f32.mrf.mxu0
    %1619 = vmatprep.mubr.f32.mxu0 0.0
    %1620 = vmatmul.mubr.f32.gmra.mxu0 %v1507
    %v1621 = vpop.f32.mrf.mxu0
    %v1622 = vadd.f32 0.0, %v1621
    %v1623 = vpop.f32.mrf.mxu0
    %1624 = vmatprep.mubr.f32.mxu0 0.0
    %1625 = vmatmul.mubr.f32.gmra.mxu0 %v1508
    %v1626 = vpop.f32.mrf.mxu0
    %v1627 = vadd.f32 0.0, %v1626
    %v1628 = vpop.f32.mrf.mxu0
    %1629 = vmatprep.mubr.f32.mxu0 0.0
    %1630 = vmatmul.mubr.f32.gmra.mxu0 %v1509
    %v1631 = vpop.f32.mrf.mxu0
    %v1632 = vadd.f32 0.0, %v1631
    %v1633 = vpop.f32.mrf.mxu0
    %1634 = vmatprep.mubr.f32.mxu0 0.0
    %1635 = vmatmul.mubr.f32.gmra.mxu0 %v1510
    %v1636 = vpop.f32.mrf.mxu0
    %v1637 = vadd.f32 0.0, %v1636
    %v1638 = vpop.f32.mrf.mxu0
    %1639 = vmatprep.mubr.f32.mxu0 0.0
    %1640 = vmatmul.mubr.f32.gmra.mxu0 %v1511
    %v1641 = vpop.f32.mrf.mxu0
    %v1642 = vadd.f32 0.0, %v1641
    %v1643 = vpop.f32.mrf.mxu0
    %1644 = vmatprep.mubr.f32.mxu0 0.0
    %1645 = vmatmul.mubr.f32.gmra.mxu0 %v1512
    %v1646 = vpop.f32.mrf.mxu0
    %v1647 = vadd.f32 0.0, %v1646
    %v1648 = vpop.f32.mrf.mxu0
    %1649 = vmatprep.mubr.f32.mxu0 0.0
    %1650 = vmatmul.mubr.f32.gmra.mxu0 %v1513
    %v1651 = vpop.f32.mrf.mxu0
    %v1652 = vadd.f32 0.0, %v1651
    %v1653 = vpop.f32.mrf.mxu0
    %1654 = vmatprep.mubr.f32.mxu0 0.0
    %1655 = vmatmul.mubr.f32.gmra.mxu0 %v1514
    %v1656 = vpop.f32.mrf.mxu0
    %v1657 = vadd.f32 0.0, %v1656
    %v1658 = vpop.f32.mrf.mxu0
    %1659 = vmatprep.mubr.f32.mxu0 0.0
    %1660 = vmatmul.mubr.f32.gmra.mxu0 %v1515
    %v1661 = vpop.f32.mrf.mxu0
    %v1662 = vadd.f32 0.0, %v1661
    %v1663 = vpop.f32.mrf.mxu0
    %1664 = vmatprep.mubr.f32.mxu0 0.0
    %1665 = vmatmul.mubr.f32.gmra.mxu0 %v1516
    %v1666 = vpop.f32.mrf.mxu0
    %v1667 = vadd.f32 0.0, %v1666
    %v1668 = vpop.f32.mrf.mxu0
    %1669 = vmatprep.mubr.f32.mxu0 0.0
    %1670 = vmatmul.mubr.f32.gmra.mxu0 %v1517
    %v1671 = vpop.f32.mrf.mxu0
    %v1672 = vadd.f32 0.0, %v1671
    %v1673 = vpop.f32.mrf.mxu0
    %1674 = vmatprep.mubr.f32.mxu0 0.0
    %1675 = vmatmul.mubr.f32.gmra.mxu0 %v1518
    %v1676 = vpop.f32.mrf.mxu0
    %v1677 = vadd.f32 0.0, %v1676
    %v1678 = vpop.f32.mrf.mxu0
    %1679 = vmatprep.mubr.f32.mxu0 0.0
    %1680 = vmatmul.mubr.f32.gmra.mxu0 %v1519
    %v1681 = vpop.f32.mrf.mxu0
    %v1682 = vadd.f32 0.0, %v1681
    %v1683 = vpop.f32.mrf.mxu0
    %1684 = vmatprep.mubr.f32.mxu0 0.0
    %1685 = vmatmul.mubr.f32.gmra.mxu0 %v1520
    %v1686 = vpop.f32.mrf.mxu0
    %v1687 = vadd.f32 0.0, %v1686
    %v1688 = vpop.f32.mrf.mxu0
    %1689 = vmatprep.mubr.f32.mxu0 0.0
    %1690 = vmatmul.mubr.f32.gmra.mxu0 %v1521
    %v1691 = vpop.f32.mrf.mxu0
    %v1692 = vadd.f32 0.0, %v1691
    %v1693 = vpop.f32.mrf.mxu0
    %1694 = vmatprep.mubr.f32.mxu0 0.0
    %1695 = vmatmul.mubr.f32.gmra.mxu0 %v1522
    %v1696 = vpop.f32.mrf.mxu0
    %v1697 = vadd.f32 0.0, %v1696
    %v1698 = vpop.f32.mrf.mxu0
    %1699 = vmatprep.mubr.f32.mxu0 0.0
    %1700 = vmatmul.mubr.f32.gmra.mxu0 %v1523
    %v1701 = vpop.f32.mrf.mxu0
    %v1702 = vadd.f32 0.0, %v1701
    %v1703 = vpop.f32.mrf.mxu0
    %1704 = vmatprep.mubr.f32.mxu0 0.0
    %1705 = vmatmul.mubr.f32.gmra.mxu0 %v1524
    %v1706 = vpop.f32.mrf.mxu0
    %v1707 = vadd.f32 0.0, %v1706
    %v1708 = vpop.f32.mrf.mxu0
    %1709 = vmatprep.mubr.f32.mxu0 0.0
    %1710 = vmatmul.mubr.f32.gmra.mxu0 %v1525
    %v1711 = vpop.f32.mrf.mxu0
    %v1712 = vadd.f32 0.0, %v1711
    %v1713 = vpop.f32.mrf.mxu0
    %1714 = vmatprep.mubr.f32.mxu0 0.0
    %1715 = vmatmul.mubr.f32.gmra.mxu0 %v1526
    %v1716 = vpop.f32.mrf.mxu0
    %v1717 = vadd.f32 0.0, %v1716
    %v1718 = vpop.f32.mrf.mxu0
    %1719 = vmatprep.mubr.f32.mxu0 0.0
    %1720 = vmatmul.mubr.f32.gmra.mxu0 %v1527
    %v1721 = vpop.f32.mrf.mxu0
    %v1722 = vadd.f32 0.0, %v1721
    %v1723 = vpop.f32.mrf.mxu0
    %1724 = vdwg.mxu0
    %v1725 = vadd.f32 %v1482, %v1612
    %v1726 = vadd.f32 %v1483, %v1617
    %v1727 = vadd.f32 %v1484, %v1622
    %v1728 = vadd.f32 %v1485, %v1627
    %v1729 = vadd.f32 %v1486, %v1632
    %v1730 = vadd.f32 %v1487, %v1637
    %v1731 = vadd.f32 %v1488, %v1642
    %v1732 = vadd.f32 %v1489, %v1647
    %v1733 = vadd.f32 %v1490, %v1652
    %v1734 = vadd.f32 %v1491, %v1657
    %v1735 = vadd.f32 %v1492, %v1662
    %v1736 = vadd.f32 %v1493, %v1667
    %v1737 = vadd.f32 %v1494, %v1672
    %v1738 = vadd.f32 %v1495, %v1677
    %v1739 = vadd.f32 %v1496, %v1682
    %v1740 = vadd.f32 %v1497, %v1687
    %v1741 = vadd.f32 %v1498, %v1692
    %v1742 = vadd.f32 %v1499, %v1697
    %v1743 = vadd.f32 %v1500, %v1702
    %v1744 = vadd.f32 %v1501, %v1707
    %v1745 = vadd.f32 %v1502, %v1712
    %v1746 = vadd.f32 %v1503, %v1717
    %v1747 = vadd.f32 %v1504, %v1722
    %v1748 = vld [vmem:[#allocation3 + $0x15] sm:$0xff]
    %v1749 = vld [vmem:[#allocation3 + $0x1d] sm:$0xff]
    %v1750 = vld [vmem:[#allocation3 + $0x25] sm:$0xff]
    %v1751 = vld [vmem:[#allocation3 + $0x2d] sm:$0xff]
    %v1752 = vld [vmem:[#allocation3 + $0x35] sm:$0xff]
    %v1753 = vld [vmem:[#allocation3 + $0x3d] sm:$0xff]
    %v1754 = vld [vmem:[#allocation3 + $0x45] sm:$0xff]
    %v1755 = vld [vmem:[#allocation3 + $0x4d] sm:$0xff]
    %v1756 = vld [vmem:[#allocation3 + $0x55] sm:$0xff]
    %v1757 = vld [vmem:[#allocation3 + $0x5d] sm:$0xff]
    %v1758 = vld [vmem:[#allocation3 + $0x65] sm:$0xff]
    %v1759 = vld [vmem:[#allocation3 + $0x6d] sm:$0xff]
    %v1760 = vld [vmem:[#allocation3 + $0x75] sm:$0xff]
    %v1761 = vld [vmem:[#allocation3 + $0x7d] sm:$0xff]
    %v1762 = vld [vmem:[#allocation3 + $0x85] sm:$0xff]
    %v1763 = vld [vmem:[#allocation3 + $0x8d] sm:$0xff]
    %v1764 = vld [vmem:[#allocation3 + $0x95] sm:$0xff]
    %v1765 = vld [vmem:[#allocation3 + $0x9d] sm:$0xff]
    %v1766 = vld [vmem:[#allocation3 + $0xa5] sm:$0xff]
    %v1767 = vld [vmem:[#allocation3 + $0xad] sm:$0xff]
    %v1768 = vld [vmem:[#allocation3 + $0xb5] sm:$0xff]
    %v1769 = vld [vmem:[#allocation3 + $0xbd] sm:$0xff]
    %v1770 = vld [vmem:[#allocation3 + $0xc5] sm:$0x3]
    %s1771 = scalar_lea.vmem [#allocation6], 896
    %v1772 = vld [vmem:[%s1771] sm:$0xff]
    %v1773 = vld [vmem:[%s1771 + $0x8] sm:$0xff]
    %v1774 = vld [vmem:[%s1771 + $0x10] sm:$0xff]
    %v1775 = vld [vmem:[%s1771 + $0x18] sm:$0xff]
    %v1776 = vld [vmem:[%s1771 + $0x20] sm:$0xff]
    %v1777 = vld [vmem:[%s1771 + $0x28] sm:$0xff]
    %v1778 = vld [vmem:[%s1771 + $0x30] sm:$0xff]
    %v1779 = vld [vmem:[%s1771 + $0x38] sm:$0xff]
    %v1780 = vld [vmem:[%s1771 + $0x40] sm:$0xff]
    %v1781 = vld [vmem:[%s1771 + $0x48] sm:$0xff]
    %v1782 = vld [vmem:[%s1771 + $0x50] sm:$0xff]
    %v1783 = vld [vmem:[%s1771 + $0x58] sm:$0xff]
    %v1784 = vld [vmem:[%s1771 + $0x60] sm:$0xff]
    %v1785 = vld [vmem:[%s1771 + $0x68] sm:$0xff]
    %v1786 = vld [vmem:[%s1771 + $0x70] sm:$0xff]
    %v1787 = vld [vmem:[%s1771 + $0x78] sm:$0xff]
    %1788 = vmatprep.subr.mxu0 0.0
    %1789 = vmatpush1.msra.mxu0 %v1787
    %1790 = vmatprep.subr.mxu0 0.0
    %1791 = vmatpush1.msra.mxu0 %v1786
    %1792 = vmatprep.subr.mxu0 0.0
    %1793 = vmatpush1.msra.mxu0 %v1785
    %1794 = vmatprep.subr.mxu0 0.0
    %1795 = vmatpush1.msra.mxu0 %v1784
    %1796 = vmatprep.subr.mxu0 0.0
    %1797 = vmatpush1.msra.mxu0 %v1783
    %1798 = vmatprep.subr.mxu0 0.0
    %1799 = vmatpush1.msra.mxu0 %v1782
    %1800 = vmatprep.subr.mxu0 0.0
    %1801 = vmatpush1.msra.mxu0 %v1781
    %1802 = vmatprep.subr.mxu0 0.0
    %1803 = vmatpush1.msra.mxu0 %v1780
    %1804 = vmatprep.subr.mxu0 0.0
    %1805 = vmatpush1.msra.mxu0 %v1779
    %1806 = vmatprep.subr.mxu0 0.0
    %1807 = vmatpush1.msra.mxu0 %v1778
    %1808 = vmatprep.subr.mxu0 0.0
    %1809 = vmatpush1.msra.mxu0 %v1777
    %1810 = vmatprep.subr.mxu0 0.0
    %1811 = vmatpush1.msra.mxu0 %v1776
    %1812 = vmatprep.subr.mxu0 0.0
    %1813 = vmatpush1.msra.mxu0 %v1775
    %1814 = vmatprep.subr.mxu0 0.0
    %1815 = vmatpush1.msra.mxu0 %v1774
    %1816 = vmatprep.subr.mxu0 0.0
    %1817 = vmatpush1.msra.mxu0 %v1773
    %1818 = vmatprep.subr.mxu0 0.0
    %1819 = vmatpush1.msra.mxu0 %v1772
    %1820 = vmatprep.subr.mxu0 0.0
    %1821 = vmatpush2.msra.mxu0 0.0
    %1822 = vmatprep.subr.mxu0 0.0
    %1823 = vmatpush2.msra.mxu0 0.0
    %1824 = vmatprep.subr.mxu0 0.0
    %1825 = vmatpush2.msra.mxu0 0.0
    %1826 = vmatprep.subr.mxu0 0.0
    %1827 = vmatpush2.msra.mxu0 0.0
    %1828 = vmatprep.subr.mxu0 0.0
    %1829 = vmatpush2.msra.mxu0 0.0
    %1830 = vmatprep.subr.mxu0 0.0
    %1831 = vmatpush2.msra.mxu0 0.0
    %1832 = vmatprep.subr.mxu0 0.0
    %1833 = vmatpush2.msra.mxu0 0.0
    %1834 = vmatprep.subr.mxu0 0.0
    %1835 = vmatpush2.msra.mxu0 0.0
    %1836 = vmatprep.subr.mxu0 0.0
    %1837 = vmatpush2.msra.mxu0 0.0
    %1838 = vmatprep.subr.mxu0 0.0
    %1839 = vmatpush2.msra.mxu0 0.0
    %1840 = vmatprep.subr.mxu0 0.0
    %1841 = vmatpush2.msra.mxu0 0.0
    %1842 = vmatprep.subr.mxu0 0.0
    %1843 = vmatpush2.msra.mxu0 0.0
    %1844 = vmatprep.subr.mxu0 0.0
    %1845 = vmatpush2.msra.mxu0 0.0
    %1846 = vmatprep.subr.mxu0 0.0
    %1847 = vmatpush2.msra.mxu0 0.0
    %1848 = vmatprep.subr.mxu0 0.0
    %1849 = vmatpush2.msra.mxu0 0.0
    %1850 = vmatprep.subr.mxu0 0.0
    %1851 = vmatpush2.msra.mxu0 0.0
    %1852 = vmatprep.mubr.f32.mxu0 0.0
    %1853 = vmatmul.mubr.f32.gmra.mxu0 %v1748
    %v1854 = vpop.f32.mrf.mxu0
    %v1855 = vadd.f32 0.0, %v1854
    %v1856 = vpop.f32.mrf.mxu0
    %1857 = vmatprep.mubr.f32.mxu0 0.0
    %1858 = vmatmul.mubr.f32.gmra.mxu0 %v1749
    %v1859 = vpop.f32.mrf.mxu0
    %v1860 = vadd.f32 0.0, %v1859
    %v1861 = vpop.f32.mrf.mxu0
    %1862 = vmatprep.mubr.f32.mxu0 0.0
    %1863 = vmatmul.mubr.f32.gmra.mxu0 %v1750
    %v1864 = vpop.f32.mrf.mxu0
    %v1865 = vadd.f32 0.0, %v1864
    %v1866 = vpop.f32.mrf.mxu0
    %1867 = vmatprep.mubr.f32.mxu0 0.0
    %1868 = vmatmul.mubr.f32.gmra.mxu0 %v1751
    %v1869 = vpop.f32.mrf.mxu0
    %v1870 = vadd.f32 0.0, %v1869
    %v1871 = vpop.f32.mrf.mxu0
    %1872 = vmatprep.mubr.f32.mxu0 0.0
    %1873 = vmatmul.mubr.f32.gmra.mxu0 %v1752
    %v1874 = vpop.f32.mrf.mxu0
    %v1875 = vadd.f32 0.0, %v1874
    %v1876 = vpop.f32.mrf.mxu0
    %1877 = vmatprep.mubr.f32.mxu0 0.0
    %1878 = vmatmul.mubr.f32.gmra.mxu0 %v1753
    %v1879 = vpop.f32.mrf.mxu0
    %v1880 = vadd.f32 0.0, %v1879
    %v1881 = vpop.f32.mrf.mxu0
    %1882 = vmatprep.mubr.f32.mxu0 0.0
    %1883 = vmatmul.mubr.f32.gmra.mxu0 %v1754
    %v1884 = vpop.f32.mrf.mxu0
    %v1885 = vadd.f32 0.0, %v1884
    %v1886 = vpop.f32.mrf.mxu0
    %1887 = vmatprep.mubr.f32.mxu0 0.0
    %1888 = vmatmul.mubr.f32.gmra.mxu0 %v1755
    %v1889 = vpop.f32.mrf.mxu0
    %v1890 = vadd.f32 0.0, %v1889
    %v1891 = vpop.f32.mrf.mxu0
    %1892 = vmatprep.mubr.f32.mxu0 0.0
    %1893 = vmatmul.mubr.f32.gmra.mxu0 %v1756
    %v1894 = vpop.f32.mrf.mxu0
    %v1895 = vadd.f32 0.0, %v1894
    %v1896 = vpop.f32.mrf.mxu0
    %1897 = vmatprep.mubr.f32.mxu0 0.0
    %1898 = vmatmul.mubr.f32.gmra.mxu0 %v1757
    %v1899 = vpop.f32.mrf.mxu0
    %v1900 = vadd.f32 0.0, %v1899
    %v1901 = vpop.f32.mrf.mxu0
    %1902 = vmatprep.mubr.f32.mxu0 0.0
    %1903 = vmatmul.mubr.f32.gmra.mxu0 %v1758
    %v1904 = vpop.f32.mrf.mxu0
    %v1905 = vadd.f32 0.0, %v1904
    %v1906 = vpop.f32.mrf.mxu0
    %1907 = vmatprep.mubr.f32.mxu0 0.0
    %1908 = vmatmul.mubr.f32.gmra.mxu0 %v1759
    %v1909 = vpop.f32.mrf.mxu0
    %v1910 = vadd.f32 0.0, %v1909
    %v1911 = vpop.f32.mrf.mxu0
    %1912 = vmatprep.mubr.f32.mxu0 0.0
    %1913 = vmatmul.mubr.f32.gmra.mxu0 %v1760
    %v1914 = vpop.f32.mrf.mxu0
    %v1915 = vadd.f32 0.0, %v1914
    %v1916 = vpop.f32.mrf.mxu0
    %1917 = vmatprep.mubr.f32.mxu0 0.0
    %1918 = vmatmul.mubr.f32.gmra.mxu0 %v1761
    %v1919 = vpop.f32.mrf.mxu0
    %v1920 = vadd.f32 0.0, %v1919
    %v1921 = vpop.f32.mrf.mxu0
    %1922 = vmatprep.mubr.f32.mxu0 0.0
    %1923 = vmatmul.mubr.f32.gmra.mxu0 %v1762
    %v1924 = vpop.f32.mrf.mxu0
    %v1925 = vadd.f32 0.0, %v1924
    %v1926 = vpop.f32.mrf.mxu0
    %1927 = vmatprep.mubr.f32.mxu0 0.0
    %1928 = vmatmul.mubr.f32.gmra.mxu0 %v1763
    %v1929 = vpop.f32.mrf.mxu0
    %v1930 = vadd.f32 0.0, %v1929
    %v1931 = vpop.f32.mrf.mxu0
    %1932 = vmatprep.mubr.f32.mxu0 0.0
    %1933 = vmatmul.mubr.f32.gmra.mxu0 %v1764
    %v1934 = vpop.f32.mrf.mxu0
    %v1935 = vadd.f32 0.0, %v1934
    %v1936 = vpop.f32.mrf.mxu0
    %1937 = vmatprep.mubr.f32.mxu0 0.0
    %1938 = vmatmul.mubr.f32.gmra.mxu0 %v1765
    %v1939 = vpop.f32.mrf.mxu0
    %v1940 = vadd.f32 0.0, %v1939
    %v1941 = vpop.f32.mrf.mxu0
    %1942 = vmatprep.mubr.f32.mxu0 0.0
    %1943 = vmatmul.mubr.f32.gmra.mxu0 %v1766
    %v1944 = vpop.f32.mrf.mxu0
    %v1945 = vadd.f32 0.0, %v1944
    %v1946 = vpop.f32.mrf.mxu0
    %1947 = vmatprep.mubr.f32.mxu0 0.0
    %1948 = vmatmul.mubr.f32.gmra.mxu0 %v1767
    %v1949 = vpop.f32.mrf.mxu0
    %v1950 = vadd.f32 0.0, %v1949
    %v1951 = vpop.f32.mrf.mxu0
    %1952 = vmatprep.mubr.f32.mxu0 0.0
    %1953 = vmatmul.mubr.f32.gmra.mxu0 %v1768
    %v1954 = vpop.f32.mrf.mxu0
    %v1955 = vadd.f32 0.0, %v1954
    %v1956 = vpop.f32.mrf.mxu0
    %1957 = vmatprep.mubr.f32.mxu0 0.0
    %1958 = vmatmul.mubr.f32.gmra.mxu0 %v1769
    %v1959 = vpop.f32.mrf.mxu0
    %v1960 = vadd.f32 0.0, %v1959
    %v1961 = vpop.f32.mrf.mxu0
    %1962 = vmatprep.mubr.f32.mxu0 0.0
    %1963 = vmatmul.mubr.f32.gmra.mxu0 %v1770
    %v1964 = vpop.f32.mrf.mxu0
    %v1965 = vadd.f32 0.0, %v1964
    %v1966 = vpop.f32.mrf.mxu0
    %1967 = vdwg.mxu0
    %v1968 = vadd.f32 %v1725, %v1855
    %v1969 = vadd.f32 %v1726, %v1860
    %v1970 = vadd.f32 %v1727, %v1865
    %v1971 = vadd.f32 %v1728, %v1870
    %v1972 = vadd.f32 %v1729, %v1875
    %v1973 = vadd.f32 %v1730, %v1880
    %v1974 = vadd.f32 %v1731, %v1885
    %v1975 = vadd.f32 %v1732, %v1890
    %v1976 = vadd.f32 %v1733, %v1895
    %v1977 = vadd.f32 %v1734, %v1900
    %v1978 = vadd.f32 %v1735, %v1905
    %v1979 = vadd.f32 %v1736, %v1910
    %v1980 = vadd.f32 %v1737, %v1915
    %v1981 = vadd.f32 %v1738, %v1920
    %v1982 = vadd.f32 %v1739, %v1925
    %v1983 = vadd.f32 %v1740, %v1930
    %v1984 = vadd.f32 %v1741, %v1935
    %v1985 = vadd.f32 %v1742, %v1940
    %v1986 = vadd.f32 %v1743, %v1945
    %v1987 = vadd.f32 %v1744, %v1950
    %v1988 = vadd.f32 %v1745, %v1955
    %v1989 = vadd.f32 %v1746, %v1960
    %v1990 = vadd.f32 %v1747, %v1965
    %v1991 = vld [vmem:[#allocation3 + $0x16] sm:$0xff]
    %v1992 = vld [vmem:[#allocation3 + $0x1e] sm:$0xff]
    %v1993 = vld [vmem:[#allocation3 + $0x26] sm:$0xff]
    %v1994 = vld [vmem:[#allocation3 + $0x2e] sm:$0xff]
    %v1995 = vld [vmem:[#allocation3 + $0x36] sm:$0xff]
    %v1996 = vld [vmem:[#allocation3 + $0x3e] sm:$0xff]
    %v1997 = vld [vmem:[#allocation3 + $0x46] sm:$0xff]
    %v1998 = vld [vmem:[#allocation3 + $0x4e] sm:$0xff]
    %v1999 = vld [vmem:[#allocation3 + $0x56] sm:$0xff]
    %v2000 = vld [vmem:[#allocation3 + $0x5e] sm:$0xff]
    %v2001 = vld [vmem:[#allocation3 + $0x66] sm:$0xff]
    %v2002 = vld [vmem:[#allocation3 + $0x6e] sm:$0xff]
    %v2003 = vld [vmem:[#allocation3 + $0x76] sm:$0xff]
    %v2004 = vld [vmem:[#allocation3 + $0x7e] sm:$0xff]
    %v2005 = vld [vmem:[#allocation3 + $0x86] sm:$0xff]
    %v2006 = vld [vmem:[#allocation3 + $0x8e] sm:$0xff]
    %v2007 = vld [vmem:[#allocation3 + $0x96] sm:$0xff]
    %v2008 = vld [vmem:[#allocation3 + $0x9e] sm:$0xff]
    %v2009 = vld [vmem:[#allocation3 + $0xa6] sm:$0xff]
    %v2010 = vld [vmem:[#allocation3 + $0xae] sm:$0xff]
    %v2011 = vld [vmem:[#allocation3 + $0xb6] sm:$0xff]
    %v2012 = vld [vmem:[#allocation3 + $0xbe] sm:$0xff]
    %v2013 = vld [vmem:[#allocation3 + $0xc6] sm:$0x3]
    %s2014 = scalar_lea.vmem [#allocation6], 1024
    %v2015 = vld [vmem:[%s2014] sm:$0xff]
    %v2016 = vld [vmem:[%s2014 + $0x8] sm:$0xff]
    %v2017 = vld [vmem:[%s2014 + $0x10] sm:$0xff]
    %v2018 = vld [vmem:[%s2014 + $0x18] sm:$0xff]
    %v2019 = vld [vmem:[%s2014 + $0x20] sm:$0xff]
    %v2020 = vld [vmem:[%s2014 + $0x28] sm:$0xff]
    %v2021 = vld [vmem:[%s2014 + $0x30] sm:$0xff]
    %v2022 = vld [vmem:[%s2014 + $0x38] sm:$0xff]
    %v2023 = vld [vmem:[%s2014 + $0x40] sm:$0xff]
    %v2024 = vld [vmem:[%s2014 + $0x48] sm:$0xff]
    %v2025 = vld [vmem:[%s2014 + $0x50] sm:$0xff]
    %v2026 = vld [vmem:[%s2014 + $0x58] sm:$0xff]
    %v2027 = vld [vmem:[%s2014 + $0x60] sm:$0xff]
    %v2028 = vld [vmem:[%s2014 + $0x68] sm:$0xff]
    %v2029 = vld [vmem:[%s2014 + $0x70] sm:$0xff]
    %v2030 = vld [vmem:[%s2014 + $0x78] sm:$0xff]
    %2031 = vmatprep.subr.mxu0 0.0
    %2032 = vmatpush1.msra.mxu0 %v2030
    %2033 = vmatprep.subr.mxu0 0.0
    %2034 = vmatpush1.msra.mxu0 %v2029
    %2035 = vmatprep.subr.mxu0 0.0
    %2036 = vmatpush1.msra.mxu0 %v2028
    %2037 = vmatprep.subr.mxu0 0.0
    %2038 = vmatpush1.msra.mxu0 %v2027
    %2039 = vmatprep.subr.mxu0 0.0
    %2040 = vmatpush1.msra.mxu0 %v2026
    %2041 = vmatprep.subr.mxu0 0.0
    %2042 = vmatpush1.msra.mxu0 %v2025
    %2043 = vmatprep.subr.mxu0 0.0
    %2044 = vmatpush1.msra.mxu0 %v2024
    %2045 = vmatprep.subr.mxu0 0.0
    %2046 = vmatpush1.msra.mxu0 %v2023
    %2047 = vmatprep.subr.mxu0 0.0
    %2048 = vmatpush1.msra.mxu0 %v2022
    %2049 = vmatprep.subr.mxu0 0.0
    %2050 = vmatpush1.msra.mxu0 %v2021
    %2051 = vmatprep.subr.mxu0 0.0
    %2052 = vmatpush1.msra.mxu0 %v2020
    %2053 = vmatprep.subr.mxu0 0.0
    %2054 = vmatpush1.msra.mxu0 %v2019
    %2055 = vmatprep.subr.mxu0 0.0
    %2056 = vmatpush1.msra.mxu0 %v2018
    %2057 = vmatprep.subr.mxu0 0.0
    %2058 = vmatpush1.msra.mxu0 %v2017
    %2059 = vmatprep.subr.mxu0 0.0
    %2060 = vmatpush1.msra.mxu0 %v2016
    %2061 = vmatprep.subr.mxu0 0.0
    %2062 = vmatpush1.msra.mxu0 %v2015
    %2063 = vmatprep.subr.mxu0 0.0
    %2064 = vmatpush2.msra.mxu0 0.0
    %2065 = vmatprep.subr.mxu0 0.0
    %2066 = vmatpush2.msra.mxu0 0.0
    %2067 = vmatprep.subr.mxu0 0.0
    %2068 = vmatpush2.msra.mxu0 0.0
    %2069 = vmatprep.subr.mxu0 0.0
    %2070 = vmatpush2.msra.mxu0 0.0
    %2071 = vmatprep.subr.mxu0 0.0
    %2072 = vmatpush2.msra.mxu0 0.0
    %2073 = vmatprep.subr.mxu0 0.0
    %2074 = vmatpush2.msra.mxu0 0.0
    %2075 = vmatprep.subr.mxu0 0.0
    %2076 = vmatpush2.msra.mxu0 0.0
    %2077 = vmatprep.subr.mxu0 0.0
    %2078 = vmatpush2.msra.mxu0 0.0
    %2079 = vmatprep.subr.mxu0 0.0
    %2080 = vmatpush2.msra.mxu0 0.0
    %2081 = vmatprep.subr.mxu0 0.0
    %2082 = vmatpush2.msra.mxu0 0.0
    %2083 = vmatprep.subr.mxu0 0.0
    %2084 = vmatpush2.msra.mxu0 0.0
    %2085 = vmatprep.subr.mxu0 0.0
    %2086 = vmatpush2.msra.mxu0 0.0
    %2087 = vmatprep.subr.mxu0 0.0
    %2088 = vmatpush2.msra.mxu0 0.0
    %2089 = vmatprep.subr.mxu0 0.0
    %2090 = vmatpush2.msra.mxu0 0.0
    %2091 = vmatprep.subr.mxu0 0.0
    %2092 = vmatpush2.msra.mxu0 0.0
    %2093 = vmatprep.subr.mxu0 0.0
    %2094 = vmatpush2.msra.mxu0 0.0
    %2095 = vmatprep.mubr.f32.mxu0 0.0
    %2096 = vmatmul.mubr.f32.gmra.mxu0 %v1991
    %v2097 = vpop.f32.mrf.mxu0
    %v2098 = vadd.f32 0.0, %v2097
    %v2099 = vpop.f32.mrf.mxu0
    %2100 = vmatprep.mubr.f32.mxu0 0.0
    %2101 = vmatmul.mubr.f32.gmra.mxu0 %v1992
    %v2102 = vpop.f32.mrf.mxu0
    %v2103 = vadd.f32 0.0, %v2102
    %v2104 = vpop.f32.mrf.mxu0
    %2105 = vmatprep.mubr.f32.mxu0 0.0
    %2106 = vmatmul.mubr.f32.gmra.mxu0 %v1993
    %v2107 = vpop.f32.mrf.mxu0
    %v2108 = vadd.f32 0.0, %v2107
    %v2109 = vpop.f32.mrf.mxu0
    %2110 = vmatprep.mubr.f32.mxu0 0.0
    %2111 = vmatmul.mubr.f32.gmra.mxu0 %v1994
    %v2112 = vpop.f32.mrf.mxu0
    %v2113 = vadd.f32 0.0, %v2112
    %v2114 = vpop.f32.mrf.mxu0
    %2115 = vmatprep.mubr.f32.mxu0 0.0
    %2116 = vmatmul.mubr.f32.gmra.mxu0 %v1995
    %v2117 = vpop.f32.mrf.mxu0
    %v2118 = vadd.f32 0.0, %v2117
    %v2119 = vpop.f32.mrf.mxu0
    %2120 = vmatprep.mubr.f32.mxu0 0.0
    %2121 = vmatmul.mubr.f32.gmra.mxu0 %v1996
    %v2122 = vpop.f32.mrf.mxu0
    %v2123 = vadd.f32 0.0, %v2122
    %v2124 = vpop.f32.mrf.mxu0
    %2125 = vmatprep.mubr.f32.mxu0 0.0
    %2126 = vmatmul.mubr.f32.gmra.mxu0 %v1997
    %v2127 = vpop.f32.mrf.mxu0
    %v2128 = vadd.f32 0.0, %v2127
    %v2129 = vpop.f32.mrf.mxu0
    %2130 = vmatprep.mubr.f32.mxu0 0.0
    %2131 = vmatmul.mubr.f32.gmra.mxu0 %v1998
    %v2132 = vpop.f32.mrf.mxu0
    %v2133 = vadd.f32 0.0, %v2132
    %v2134 = vpop.f32.mrf.mxu0
    %2135 = vmatprep.mubr.f32.mxu0 0.0
    %2136 = vmatmul.mubr.f32.gmra.mxu0 %v1999
    %v2137 = vpop.f32.mrf.mxu0
    %v2138 = vadd.f32 0.0, %v2137
    %v2139 = vpop.f32.mrf.mxu0
    %2140 = vmatprep.mubr.f32.mxu0 0.0
    %2141 = vmatmul.mubr.f32.gmra.mxu0 %v2000
    %v2142 = vpop.f32.mrf.mxu0
    %v2143 = vadd.f32 0.0, %v2142
    %v2144 = vpop.f32.mrf.mxu0
    %2145 = vmatprep.mubr.f32.mxu0 0.0
    %2146 = vmatmul.mubr.f32.gmra.mxu0 %v2001
    %v2147 = vpop.f32.mrf.mxu0
    %v2148 = vadd.f32 0.0, %v2147
    %v2149 = vpop.f32.mrf.mxu0
    %2150 = vmatprep.mubr.f32.mxu0 0.0
    %2151 = vmatmul.mubr.f32.gmra.mxu0 %v2002
    %v2152 = vpop.f32.mrf.mxu0
    %v2153 = vadd.f32 0.0, %v2152
    %v2154 = vpop.f32.mrf.mxu0
    %2155 = vmatprep.mubr.f32.mxu0 0.0
    %2156 = vmatmul.mubr.f32.gmra.mxu0 %v2003
    %v2157 = vpop.f32.mrf.mxu0
    %v2158 = vadd.f32 0.0, %v2157
    %v2159 = vpop.f32.mrf.mxu0
    %2160 = vmatprep.mubr.f32.mxu0 0.0
    %2161 = vmatmul.mubr.f32.gmra.mxu0 %v2004
    %v2162 = vpop.f32.mrf.mxu0
    %v2163 = vadd.f32 0.0, %v2162
    %v2164 = vpop.f32.mrf.mxu0
    %2165 = vmatprep.mubr.f32.mxu0 0.0
    %2166 = vmatmul.mubr.f32.gmra.mxu0 %v2005
    %v2167 = vpop.f32.mrf.mxu0
    %v2168 = vadd.f32 0.0, %v2167
    %v2169 = vpop.f32.mrf.mxu0
    %2170 = vmatprep.mubr.f32.mxu0 0.0
    %2171 = vmatmul.mubr.f32.gmra.mxu0 %v2006
    %v2172 = vpop.f32.mrf.mxu0
    %v2173 = vadd.f32 0.0, %v2172
    %v2174 = vpop.f32.mrf.mxu0
    %2175 = vmatprep.mubr.f32.mxu0 0.0
    %2176 = vmatmul.mubr.f32.gmra.mxu0 %v2007
    %v2177 = vpop.f32.mrf.mxu0
    %v2178 = vadd.f32 0.0, %v2177
    %v2179 = vpop.f32.mrf.mxu0
    %2180 = vmatprep.mubr.f32.mxu0 0.0
    %2181 = vmatmul.mubr.f32.gmra.mxu0 %v2008
    %v2182 = vpop.f32.mrf.mxu0
    %v2183 = vadd.f32 0.0, %v2182
    %v2184 = vpop.f32.mrf.mxu0
    %2185 = vmatprep.mubr.f32.mxu0 0.0
    %2186 = vmatmul.mubr.f32.gmra.mxu0 %v2009
    %v2187 = vpop.f32.mrf.mxu0
    %v2188 = vadd.f32 0.0, %v2187
    %v2189 = vpop.f32.mrf.mxu0
    %2190 = vmatprep.mubr.f32.mxu0 0.0
    %2191 = vmatmul.mubr.f32.gmra.mxu0 %v2010
    %v2192 = vpop.f32.mrf.mxu0
    %v2193 = vadd.f32 0.0, %v2192
    %v2194 = vpop.f32.mrf.mxu0
    %2195 = vmatprep.mubr.f32.mxu0 0.0
    %2196 = vmatmul.mubr.f32.gmra.mxu0 %v2011
    %v2197 = vpop.f32.mrf.mxu0
    %v2198 = vadd.f32 0.0, %v2197
    %v2199 = vpop.f32.mrf.mxu0
    %2200 = vmatprep.mubr.f32.mxu0 0.0
    %2201 = vmatmul.mubr.f32.gmra.mxu0 %v2012
    %v2202 = vpop.f32.mrf.mxu0
    %v2203 = vadd.f32 0.0, %v2202
    %v2204 = vpop.f32.mrf.mxu0
    %2205 = vmatprep.mubr.f32.mxu0 0.0
    %2206 = vmatmul.mubr.f32.gmra.mxu0 %v2013
    %v2207 = vpop.f32.mrf.mxu0
    %v2208 = vadd.f32 0.0, %v2207
    %v2209 = vpop.f32.mrf.mxu0
    %2210 = vdwg.mxu0
    %v2211 = vadd.f32 %v1968, %v2098
    %v2212 = vadd.f32 %v1969, %v2103
    %v2213 = vadd.f32 %v1970, %v2108
    %v2214 = vadd.f32 %v1971, %v2113
    %v2215 = vadd.f32 %v1972, %v2118
    %v2216 = vadd.f32 %v1973, %v2123
    %v2217 = vadd.f32 %v1974, %v2128
    %v2218 = vadd.f32 %v1975, %v2133
    %v2219 = vadd.f32 %v1976, %v2138
    %v2220 = vadd.f32 %v1977, %v2143
    %v2221 = vadd.f32 %v1978, %v2148
    %v2222 = vadd.f32 %v1979, %v2153
    %v2223 = vadd.f32 %v1980, %v2158
    %v2224 = vadd.f32 %v1981, %v2163
    %v2225 = vadd.f32 %v1982, %v2168
    %v2226 = vadd.f32 %v1983, %v2173
    %v2227 = vadd.f32 %v1984, %v2178
    %v2228 = vadd.f32 %v1985, %v2183
    %v2229 = vadd.f32 %v1986, %v2188
    %v2230 = vadd.f32 %v1987, %v2193
    %v2231 = vadd.f32 %v1988, %v2198
    %v2232 = vadd.f32 %v1989, %v2203
    %v2233 = vadd.f32 %v1990, %v2208
    %v2234 = vld [vmem:[%s3] sm:$0x1]
    %v2235 = vld [vmem:[%s4] sm:$0x1]
    %2237 = vset.pattern.permute.xlu0 0
    %2238 = vperm.xlu0 %2237, %v71
    %v2239 = vpop.permute.xlu0 %2238
    %2242 = vset.pattern.permute.xlu0 0
    %2243 = vperm.xlu0 %2242, %v72
    %v2244 = vpop.permute.xlu0 %2243
    %2247 = vset.pattern.permute.xlu0 0
    %2248 = vperm.xlu0 %2247, %v73
    %v2249 = vpop.permute.xlu0 %2248
    %2252 = vset.pattern.permute.xlu0 0
    %2253 = vperm.xlu0 %2252, %v74
    %v2254 = vpop.permute.xlu0 %2253
    %2257 = vset.pattern.permute.xlu0 0
    %2258 = vperm.xlu0 %2257, %v75
    %v2259 = vpop.permute.xlu0 %2258
    %2262 = vset.pattern.permute.xlu0 0
    %2263 = vperm.xlu0 %2262, %v76
    %v2264 = vpop.permute.xlu0 %2263
    %2267 = vset.pattern.permute.xlu0 0
    %2268 = vperm.xlu0 %2267, %v77
    %v2269 = vpop.permute.xlu0 %2268
    %2272 = vset.pattern.permute.xlu0 0
    %2273 = vperm.xlu0 %2272, %v78
    %v2274 = vpop.permute.xlu0 %2273
    %2277 = vset.pattern.permute.xlu0 0
    %2278 = vperm.xlu0 %2277, %v79
    %v2279 = vpop.permute.xlu0 %2278
    %2282 = vset.pattern.permute.xlu0 0
    %2283 = vperm.xlu0 %2282, %v80
    %v2284 = vpop.permute.xlu0 %2283
    %2287 = vset.pattern.permute.xlu0 0
    %2288 = vperm.xlu0 %2287, %v81
    %v2289 = vpop.permute.xlu0 %2288
    %2292 = vset.pattern.permute.xlu0 0
    %2293 = vperm.xlu0 %2292, %v82
    %v2294 = vpop.permute.xlu0 %2293
    %2297 = vset.pattern.permute.xlu0 0
    %2298 = vperm.xlu0 %2297, %v83
    %v2299 = vpop.permute.xlu0 %2298
    %2302 = vset.pattern.permute.xlu0 0
    %2303 = vperm.xlu0 %2302, %v84
    %v2304 = vpop.permute.xlu0 %2303
    %2307 = vset.pattern.permute.xlu0 0
    %2308 = vperm.xlu0 %2307, %v85
    %v2309 = vpop.permute.xlu0 %2308
    %2312 = vset.pattern.permute.xlu0 0
    %2313 = vperm.xlu0 %2312, %v86
    %v2314 = vpop.permute.xlu0 %2313
    %2317 = vset.pattern.permute.xlu0 0
    %2318 = vperm.xlu0 %2317, %v87
    %v2319 = vpop.permute.xlu0 %2318
    %2322 = vset.pattern.permute.xlu0 0
    %2323 = vperm.xlu0 %2322, %v88
    %v2324 = vpop.permute.xlu0 %2323
    %2327 = vset.pattern.permute.xlu0 0
    %2328 = vperm.xlu0 %2327, %v89
    %v2329 = vpop.permute.xlu0 %2328
    %2332 = vset.pattern.permute.xlu0 0
    %2333 = vperm.xlu0 %2332, %v90
    %v2334 = vpop.permute.xlu0 %2333
    %2337 = vset.pattern.permute.xlu0 0
    %2338 = vperm.xlu0 %2337, %v91
    %v2339 = vpop.permute.xlu0 %2338
    %2342 = vset.pattern.permute.xlu0 0
    %2343 = vperm.xlu0 %2342, %v92
    %v2344 = vpop.permute.xlu0 %2343
    %2347 = vset.pattern.permute.xlu0 0
    %2348 = vperm.xlu0 %2347, %v93
    %v2349 = vpop.permute.xlu0 %2348
    %v2351 = vmul.f32 %v2211, %v2239
    %v2352 = vmul.f32 %v2212, %v2244
    %v2353 = vmul.f32 %v2213, %v2249
    %v2354 = vmul.f32 %v2214, %v2254
    %v2355 = vmul.f32 %v2215, %v2259
    %v2356 = vmul.f32 %v2216, %v2264
    %v2357 = vmul.f32 %v2217, %v2269
    %v2358 = vmul.f32 %v2218, %v2274
    %v2359 = vmul.f32 %v2219, %v2279
    %v2360 = vmul.f32 %v2220, %v2284
    %v2361 = vmul.f32 %v2221, %v2289
    %v2362 = vmul.f32 %v2222, %v2294
    %v2363 = vmul.f32 %v2223, %v2299
    %v2364 = vmul.f32 %v2224, %v2304
    %v2365 = vmul.f32 %v2225, %v2309
    %v2366 = vmul.f32 %v2226, %v2314
    %v2367 = vmul.f32 %v2227, %v2319
    %v2368 = vmul.f32 %v2228, %v2324
    %v2369 = vmul.f32 %v2229, %v2329
    %v2370 = vmul.f32 %v2230, %v2334
    %v2371 = vmul.f32 %v2231, %v2339
    %v2372 = vmul.f32 %v2232, %v2344
    %v2373 = vmul.f32 %v2233, %v2349
    %v2374 = vadd.f32 %v2351, %v2352
    %v2375 = vadd.f32 %v2374, %v2353
    %v2376 = vadd.f32 %v2375, %v2354
    %v2377 = vadd.f32 %v2376, %v2355
    %v2378 = vadd.f32 %v2377, %v2356
    %v2379 = vadd.f32 %v2378, %v2357
    %v2380 = vadd.f32 %v2379, %v2358
    %v2381 = vadd.f32 %v2380, %v2359
    %v2382 = vadd.f32 %v2381, %v2360
    %v2383 = vadd.f32 %v2382, %v2361
    %v2384 = vadd.f32 %v2383, %v2362
    %v2385 = vadd.f32 %v2384, %v2363
    %v2386 = vadd.f32 %v2385, %v2364
    %v2387 = vadd.f32 %v2386, %v2365
    %v2388 = vadd.f32 %v2387, %v2366
    %v2389 = vadd.f32 %v2388, %v2367
    %v2390 = vadd.f32 %v2389, %v2368
    %v2391 = vadd.f32 %v2390, %v2369
    %v2392 = vadd.f32 %v2391, %v2370
    %v2393 = vadd.f32 %v2392, %v2371
    %v2394 = vadd.f32 %v2393, %v2372
    %vm2395 = vcmask 1041408
    %v2396 = vsel %vm2395, %v2373, 0.0
    %v2397 = vadd.f32 %v2394, %v2396
    %v2398 = vrot.slane %v2397, 4
    %v2399 = vadd.f32 %v2397, %v2398
    %v2400 = vrot.slane %v2399, 2
    %v2401 = vadd.f32 %v2399, %v2400
    %v2402 = vrot.slane %v2401, 1
    %v2403 = vadd.f32 %v2401, %v2402
    %v2404 = vmul.f32 %v2403, 0.0078125
    %v2405 = vsub.f32 %v2211, %v2404
    %v2406 = vsub.f32 %v2212, %v2404
    %v2407 = vsub.f32 %v2213, %v2404
    %v2408 = vsub.f32 %v2214, %v2404
    %v2409 = vsub.f32 %v2215, %v2404
    %v2410 = vsub.f32 %v2216, %v2404
    %v2411 = vsub.f32 %v2217, %v2404
    %v2412 = vsub.f32 %v2218, %v2404
    %v2413 = vsub.f32 %v2219, %v2404
    %v2414 = vsub.f32 %v2220, %v2404
    %v2415 = vsub.f32 %v2221, %v2404
    %v2416 = vsub.f32 %v2222, %v2404
    %v2417 = vsub.f32 %v2223, %v2404
    %v2418 = vsub.f32 %v2224, %v2404
    %v2419 = vsub.f32 %v2225, %v2404
    %v2420 = vsub.f32 %v2226, %v2404
    %v2421 = vsub.f32 %v2227, %v2404
    %v2422 = vsub.f32 %v2228, %v2404
    %v2423 = vsub.f32 %v2229, %v2404
    %v2424 = vsub.f32 %v2230, %v2404
    %v2425 = vsub.f32 %v2231, %v2404
    %v2426 = vsub.f32 %v2232, %v2404
    %v2427 = vsub.f32 %v2233, %v2404
    %v2428 = vmul.f32 %v2405, %v2239
    %v2429 = vmul.f32 %v2406, %v2244
    %v2430 = vmul.f32 %v2407, %v2249
    %v2431 = vmul.f32 %v2408, %v2254
    %v2432 = vmul.f32 %v2409, %v2259
    %v2433 = vmul.f32 %v2410, %v2264
    %v2434 = vmul.f32 %v2411, %v2269
    %v2435 = vmul.f32 %v2412, %v2274
    %v2436 = vmul.f32 %v2413, %v2279
    %v2437 = vmul.f32 %v2414, %v2284
    %v2438 = vmul.f32 %v2415, %v2289
    %v2439 = vmul.f32 %v2416, %v2294
    %v2440 = vmul.f32 %v2417, %v2299
    %v2441 = vmul.f32 %v2418, %v2304
    %v2442 = vmul.f32 %v2419, %v2309
    %v2443 = vmul.f32 %v2420, %v2314
    %v2444 = vmul.f32 %v2421, %v2319
    %v2445 = vmul.f32 %v2422, %v2324
    %v2446 = vmul.f32 %v2423, %v2329
    %v2447 = vmul.f32 %v2424, %v2334
    %v2448 = vmul.f32 %v2425, %v2339
    %v2449 = vmul.f32 %v2426, %v2344
    %v2450 = vmul.f32 %v2427, %v2349
    %v2451 = vmul.f32 %v2428, %v2428
    %v2452 = vmul.f32 %v2429, %v2429
    %v2453 = vmul.f32 %v2430, %v2430
    %v2454 = vmul.f32 %v2431, %v2431
    %v2455 = vmul.f32 %v2432, %v2432
    %v2456 = vmul.f32 %v2433, %v2433
    %v2457 = vmul.f32 %v2434, %v2434
    %v2458 = vmul.f32 %v2435, %v2435
    %v2459 = vmul.f32 %v2436, %v2436
    %v2460 = vmul.f32 %v2437, %v2437
    %v2461 = vmul.f32 %v2438, %v2438
    %v2462 = vmul.f32 %v2439, %v2439
    %v2463 = vmul.f32 %v2440, %v2440
    %v2464 = vmul.f32 %v2441, %v2441
    %v2465 = vmul.f32 %v2442, %v2442
    %v2466 = vmul.f32 %v2443, %v2443
    %v2467 = vmul.f32 %v2444, %v2444
    %v2468 = vmul.f32 %v2445, %v2445
    %v2469 = vmul.f32 %v2446, %v2446
    %v2470 = vmul.f32 %v2447, %v2447
    %v2471 = vmul.f32 %v2448, %v2448
    %v2472 = vmul.f32 %v2449, %v2449
    %v2473 = vmul.f32 %v2450, %v2450
    %v2474 = vadd.f32 %v2451, %v2452
    %v2475 = vadd.f32 %v2474, %v2453
    %v2476 = vadd.f32 %v2475, %v2454
    %v2477 = vadd.f32 %v2476, %v2455
    %v2478 = vadd.f32 %v2477, %v2456
    %v2479 = vadd.f32 %v2478, %v2457
    %v2480 = vadd.f32 %v2479, %v2458
    %v2481 = vadd.f32 %v2480, %v2459
    %v2482 = vadd.f32 %v2481, %v2460
    %v2483 = vadd.f32 %v2482, %v2461
    %v2484 = vadd.f32 %v2483, %v2462
    %v2485 = vadd.f32 %v2484, %v2463
    %v2486 = vadd.f32 %v2485, %v2464
    %v2487 = vadd.f32 %v2486, %v2465
    %v2488 = vadd.f32 %v2487, %v2466
    %v2489 = vadd.f32 %v2488, %v2467
    %v2490 = vadd.f32 %v2489, %v2468
    %v2491 = vadd.f32 %v2490, %v2469
    %v2492 = vadd.f32 %v2491, %v2470
    %v2493 = vadd.f32 %v2492, %v2471
    %v2494 = vadd.f32 %v2493, %v2472
    %v2495 = vsel %vm2395, %v2473, 0.0
    %v2496 = vadd.f32 %v2494, %v2495
    %v2497 = vrot.slane %v2496, 4
    %v2498 = vadd.f32 %v2496, %v2497
    %v2499 = vrot.slane %v2498, 2
    %v2500 = vadd.f32 %v2498, %v2499
    %v2501 = vrot.slane %v2500, 1
    %v2502 = vadd.f32 %v2500, %v2501
    %v2503 = vmul.f32 %v2502, 0.0078125
    %v2505 = vlaneseq
    %v2506 = vshrl.u32 %v2505, 7
    %v2507 = vsub.s32 0, %v2506
    %v2508 = vrot.slane %v2234, %v2507
    %v2510 = vmul.f32 %v2508, %v2428
    %v2511 = vmul.f32 %v2508, %v2429
    %v2512 = vmul.f32 %v2508, %v2430
    %v2513 = vmul.f32 %v2508, %v2431
    %v2514 = vmul.f32 %v2508, %v2432
    %v2515 = vmul.f32 %v2508, %v2433
    %v2516 = vmul.f32 %v2508, %v2434
    %v2517 = vmul.f32 %v2508, %v2435
    %v2518 = vmul.f32 %v2508, %v2436
    %v2519 = vmul.f32 %v2508, %v2437
    %v2520 = vmul.f32 %v2508, %v2438
    %v2521 = vmul.f32 %v2508, %v2439
    %v2522 = vmul.f32 %v2508, %v2440
    %v2523 = vmul.f32 %v2508, %v2441
    %v2524 = vmul.f32 %v2508, %v2442
    %v2525 = vmul.f32 %v2508, %v2443
    %v2526 = vmul.f32 %v2508, %v2444
    %v2527 = vmul.f32 %v2508, %v2445
    %v2528 = vmul.f32 %v2508, %v2446
    %v2529 = vmul.f32 %v2508, %v2447
    %v2530 = vmul.f32 %v2508, %v2448
    %v2531 = vmul.f32 %v2508, %v2449
    %v2532 = vmul.f32 %v2508, %v2450
    %v2533 = vadd.f32 %v2503, 1e-05
    %v2534 = vrsqrt.pop %v2533
    %v2535 = vmul.f32 %v2510, %v2534
    %v2536 = vmul.f32 %v2511, %v2534
    %v2537 = vmul.f32 %v2512, %v2534
    %v2538 = vmul.f32 %v2513, %v2534
    %v2539 = vmul.f32 %v2514, %v2534
    %v2540 = vmul.f32 %v2515, %v2534
    %v2541 = vmul.f32 %v2516, %v2534
    %v2542 = vmul.f32 %v2517, %v2534
    %v2543 = vmul.f32 %v2518, %v2534
    %v2544 = vmul.f32 %v2519, %v2534
    %v2545 = vmul.f32 %v2520, %v2534
    %v2546 = vmul.f32 %v2521, %v2534
    %v2547 = vmul.f32 %v2522, %v2534
    %v2548 = vmul.f32 %v2523, %v2534
    %v2549 = vmul.f32 %v2524, %v2534
    %v2550 = vmul.f32 %v2525, %v2534
    %v2551 = vmul.f32 %v2526, %v2534
    %v2552 = vmul.f32 %v2527, %v2534
    %v2553 = vmul.f32 %v2528, %v2534
    %v2554 = vmul.f32 %v2529, %v2534
    %v2555 = vmul.f32 %v2530, %v2534
    %v2556 = vmul.f32 %v2531, %v2534
    %v2557 = vmul.f32 %v2532, %v2534
    %v2559 = vlaneseq
    %v2560 = vshrl.u32 %v2559, 7
    %v2561 = vsub.s32 0, %v2560
    %v2562 = vrot.slane %v2235, %v2561
    %v2564 = vadd.f32 %v2535, %v2562
    %v2565 = vadd.f32 %v2536, %v2562
    %v2566 = vadd.f32 %v2537, %v2562
    %v2567 = vadd.f32 %v2538, %v2562
    %v2568 = vadd.f32 %v2539, %v2562
    %v2569 = vadd.f32 %v2540, %v2562
    %v2570 = vadd.f32 %v2541, %v2562
    %v2571 = vadd.f32 %v2542, %v2562
    %v2572 = vadd.f32 %v2543, %v2562
    %v2573 = vadd.f32 %v2544, %v2562
    %v2574 = vadd.f32 %v2545, %v2562
    %v2575 = vadd.f32 %v2546, %v2562
    %v2576 = vadd.f32 %v2547, %v2562
    %v2577 = vadd.f32 %v2548, %v2562
    %v2578 = vadd.f32 %v2549, %v2562
    %v2579 = vadd.f32 %v2550, %v2562
    %v2580 = vadd.f32 %v2551, %v2562
    %v2581 = vadd.f32 %v2552, %v2562
    %v2582 = vadd.f32 %v2553, %v2562
    %v2583 = vadd.f32 %v2554, %v2562
    %v2584 = vadd.f32 %v2555, %v2562
    %v2585 = vadd.f32 %v2556, %v2562
    %v2586 = vadd.f32 %v2557, %v2562
    %v2587 = vmax.f32 %v2564, 0.0
    %v2588 = vmax.f32 %v2565, 0.0
    %v2589 = vmax.f32 %v2566, 0.0
    %v2590 = vmax.f32 %v2567, 0.0
    %v2591 = vmax.f32 %v2568, 0.0
    %v2592 = vmax.f32 %v2569, 0.0
    %v2593 = vmax.f32 %v2570, 0.0
    %v2594 = vmax.f32 %v2571, 0.0
    %v2595 = vmax.f32 %v2572, 0.0
    %v2596 = vmax.f32 %v2573, 0.0
    %v2597 = vmax.f32 %v2574, 0.0
    %v2598 = vmax.f32 %v2575, 0.0
    %v2599 = vmax.f32 %v2576, 0.0
    %v2600 = vmax.f32 %v2577, 0.0
    %v2601 = vmax.f32 %v2578, 0.0
    %v2602 = vmax.f32 %v2579, 0.0
    %v2603 = vmax.f32 %v2580, 0.0
    %v2604 = vmax.f32 %v2581, 0.0
    %v2605 = vmax.f32 %v2582, 0.0
    %v2606 = vmax.f32 %v2583, 0.0
    %v2607 = vmax.f32 %v2584, 0.0
    %v2608 = vmax.f32 %v2585, 0.0
    %v2609 = vmax.f32 %v2586, 0.0
    %v2610 = vmul.f32 %v2587, %v2239
    %v2611 = vmul.f32 %v2588, %v2244
    %v2612 = vmul.f32 %v2589, %v2249
    %v2613 = vmul.f32 %v2590, %v2254
    %v2614 = vmul.f32 %v2591, %v2259
    %v2615 = vmul.f32 %v2592, %v2264
    %v2616 = vmul.f32 %v2593, %v2269
    %v2617 = vmul.f32 %v2594, %v2274
    %v2618 = vmul.f32 %v2595, %v2279
    %v2619 = vmul.f32 %v2596, %v2284
    %v2620 = vmul.f32 %v2597, %v2289
    %v2621 = vmul.f32 %v2598, %v2294
    %v2622 = vmul.f32 %v2599, %v2299
    %v2623 = vmul.f32 %v2600, %v2304
    %v2624 = vmul.f32 %v2601, %v2309
    %v2625 = vmul.f32 %v2602, %v2314
    %v2626 = vmul.f32 %v2603, %v2319
    %v2627 = vmul.f32 %v2604, %v2324
    %v2628 = vmul.f32 %v2605, %v2329
    %v2629 = vmul.f32 %v2606, %v2334
    %v2630 = vmul.f32 %v2607, %v2339
    %v2631 = vmul.f32 %v2608, %v2344
    %v2632 = vmul.f32 %v2609, %v2349
    %2633 = vst [vmem:[#allocation2] sm:$0xff] 0.0
    %2634 = vst [vmem:[#allocation2 + $0x8] sm:$0x7] 0.0
    %2635 = vst [vmem:[#allocation2 + $0xbd] sm:$0xff] 0.0
    %2636 = vst [vmem:[#allocation2 + $0xc5] sm:$0x7] 0.0
    %2637 = vst [vmem:[#allocation2 + $0xb] sm:$0xff] %v2610
    %2638 = vst [vmem:[#allocation2 + $0x13] sm:$0xff] %v2611
    %2639 = vst [vmem:[#allocation2 + $0x1b] sm:$0xff] %v2612
    %2640 = vst [vmem:[#allocation2 + $0x23] sm:$0xff] %v2613
    %2641 = vst [vmem:[#allocation2 + $0x2b] sm:$0xff] %v2614
    %2642 = vst [vmem:[#allocation2 + $0x33] sm:$0xff] %v2615
    %2643 = vst [vmem:[#allocation2 + $0x3b] sm:$0xff] %v2616
    %2644 = vst [vmem:[#allocation2 + $0x43] sm:$0xff] %v2617
    %2645 = vst [vmem:[#allocation2 + $0x4b] sm:$0xff] %v2618
    %2646 = vst [vmem:[#allocation2 + $0x53] sm:$0xff] %v2619
    %2647 = vst [vmem:[#allocation2 + $0x5b] sm:$0xff] %v2620
    %2648 = vst [vmem:[#allocation2 + $0x63] sm:$0xff] %v2621
    %2649 = vst [vmem:[#allocation2 + $0x6b] sm:$0xff] %v2622
    %2650 = vst [vmem:[#allocation2 + $0x73] sm:$0xff] %v2623
    %2651 = vst [vmem:[#allocation2 + $0x7b] sm:$0xff] %v2624
    %2652 = vst [vmem:[#allocation2 + $0x83] sm:$0xff] %v2625
    %2653 = vst [vmem:[#allocation2 + $0x8b] sm:$0xff] %v2626
    %2654 = vst [vmem:[#allocation2 + $0x93] sm:$0xff] %v2627
    %2655 = vst [vmem:[#allocation2 + $0x9b] sm:$0xff] %v2628
    %2656 = vst [vmem:[#allocation2 + $0xa3] sm:$0xff] %v2629
    %2657 = vst [vmem:[#allocation2 + $0xab] sm:$0xff] %v2630
    %2658 = vst [vmem:[#allocation2 + $0xb3] sm:$0xff] %v2631
    %2659 = vst [vmem:[#allocation2 + $0xbb] sm:$0x3] %v2632
    %v2660 = vld [vmem:[#allocation2] sm:$0xff]
    %v2661 = vld [vmem:[#allocation2 + $0x8] sm:$0xff]
    %v2662 = vld [vmem:[#allocation2 + $0x10] sm:$0xff]
    %v2663 = vld [vmem:[#allocation2 + $0x18] sm:$0xff]
    %v2664 = vld [vmem:[#allocation2 + $0x20] sm:$0xff]
    %v2665 = vld [vmem:[#allocation2 + $0x28] sm:$0xff]
    %v2666 = vld [vmem:[#allocation2 + $0x30] sm:$0xff]
    %v2667 = vld [vmem:[#allocation2 + $0x38] sm:$0xff]
    %v2668 = vld [vmem:[#allocation2 + $0x40] sm:$0xff]
    %v2669 = vld [vmem:[#allocation2 + $0x48] sm:$0xff]
    %v2670 = vld [vmem:[#allocation2 + $0x50] sm:$0xff]
    %v2671 = vld [vmem:[#allocation2 + $0x58] sm:$0xff]
    %v2672 = vld [vmem:[#allocation2 + $0x60] sm:$0xff]
    %v2673 = vld [vmem:[#allocation2 + $0x68] sm:$0xff]
    %v2674 = vld [vmem:[#allocation2 + $0x70] sm:$0xff]
    %v2675 = vld [vmem:[#allocation2 + $0x78] sm:$0xff]
    %v2676 = vld [vmem:[#allocation2 + $0x80] sm:$0xff]
    %v2677 = vld [vmem:[#allocation2 + $0x88] sm:$0xff]
    %v2678 = vld [vmem:[#allocation2 + $0x90] sm:$0xff]
    %v2679 = vld [vmem:[#allocation2 + $0x98] sm:$0xff]
    %v2680 = vld [vmem:[#allocation2 + $0xa0] sm:$0xff]
    %v2681 = vld [vmem:[#allocation2 + $0xa8] sm:$0xff]
    %v2682 = vld [vmem:[#allocation2 + $0xb0] sm:$0x3]
    %v2683 = vld [vmem:[#allocation8] sm:$0xff]
    %v2684 = vld [vmem:[#allocation8 + $0x8] sm:$0xff]
    %v2685 = vld [vmem:[#allocation8 + $0x10] sm:$0xff]
    %v2686 = vld [vmem:[#allocation8 + $0x18] sm:$0xff]
    %v2687 = vld [vmem:[#allocation8 + $0x20] sm:$0xff]
    %v2688 = vld [vmem:[#allocation8 + $0x28] sm:$0xff]
    %v2689 = vld [vmem:[#allocation8 + $0x30] sm:$0xff]
    %v2690 = vld [vmem:[#allocation8 + $0x38] sm:$0xff]
    %v2691 = vld [vmem:[#allocation8 + $0x40] sm:$0xff]
    %v2692 = vld [vmem:[#allocation8 + $0x48] sm:$0xff]
    %v2693 = vld [vmem:[#allocation8 + $0x50] sm:$0xff]
    %v2694 = vld [vmem:[#allocation8 + $0x58] sm:$0xff]
    %v2695 = vld [vmem:[#allocation8 + $0x60] sm:$0xff]
    %v2696 = vld [vmem:[#allocation8 + $0x68] sm:$0xff]
    %v2697 = vld [vmem:[#allocation8 + $0x70] sm:$0xff]
    %v2698 = vld [vmem:[#allocation8 + $0x78] sm:$0xff]
    %v2699 = vld [vmem:[#allocation2 + $0x1] sm:$0xff]
    %v2700 = vld [vmem:[#allocation2 + $0x9] sm:$0xff]
    %v2701 = vld [vmem:[#allocation2 + $0x11] sm:$0xff]
    %v2702 = vld [vmem:[#allocation2 + $0x19] sm:$0xff]
    %v2703 = vld [vmem:[#allocation2 + $0x21] sm:$0xff]
    %v2704 = vld [vmem:[#allocation2 + $0x29] sm:$0xff]
    %v2705 = vld [vmem:[#allocation2 + $0x31] sm:$0xff]
    %v2706 = vld [vmem:[#allocation2 + $0x39] sm:$0xff]
    %v2707 = vld [vmem:[#allocation2 + $0x41] sm:$0xff]
    %v2708 = vld [vmem:[#allocation2 + $0x49] sm:$0xff]
    %v2709 = vld [vmem:[#allocation2 + $0x51] sm:$0xff]
    %v2710 = vld [vmem:[#allocation2 + $0x59] sm:$0xff]
    %v2711 = vld [vmem:[#allocation2 + $0x61] sm:$0xff]
    %v2712 = vld [vmem:[#allocation2 + $0x69] sm:$0xff]
    %v2713 = vld [vmem:[#allocation2 + $0x71] sm:$0xff]
    %v2714 = vld [vmem:[#allocation2 + $0x79] sm:$0xff]
    %v2715 = vld [vmem:[#allocation2 + $0x81] sm:$0xff]
    %v2716 = vld [vmem:[#allocation2 + $0x89] sm:$0xff]
    %v2717 = vld [vmem:[#allocation2 + $0x91] sm:$0xff]
    %v2718 = vld [vmem:[#allocation2 + $0x99] sm:$0xff]
    %v2719 = vld [vmem:[#allocation2 + $0xa1] sm:$0xff]
    %v2720 = vld [vmem:[#allocation2 + $0xa9] sm:$0xff]
    %v2721 = vld [vmem:[#allocation2 + $0xb1] sm:$0x3]
    %s2722 = scalar_lea.vmem [#allocation8], 128
    %v2723 = vld [vmem:[%s2722] sm:$0xff]
    %v2724 = vld [vmem:[%s2722 + $0x8] sm:$0xff]
    %v2725 = vld [vmem:[%s2722 + $0x10] sm:$0xff]
    %v2726 = vld [vmem:[%s2722 + $0x18] sm:$0xff]
    %v2727 = vld [vmem:[%s2722 + $0x20] sm:$0xff]
    %v2728 = vld [vmem:[%s2722 + $0x28] sm:$0xff]
    %v2729 = vld [vmem:[%s2722 + $0x30] sm:$0xff]
    %v2730 = vld [vmem:[%s2722 + $0x38] sm:$0xff]
    %v2731 = vld [vmem:[%s2722 + $0x40] sm:$0xff]
    %v2732 = vld [vmem:[%s2722 + $0x48] sm:$0xff]
    %v2733 = vld [vmem:[%s2722 + $0x50] sm:$0xff]
    %v2734 = vld [vmem:[%s2722 + $0x58] sm:$0xff]
    %v2735 = vld [vmem:[%s2722 + $0x60] sm:$0xff]
    %v2736 = vld [vmem:[%s2722 + $0x68] sm:$0xff]
    %v2737 = vld [vmem:[%s2722 + $0x70] sm:$0xff]
    %v2738 = vld [vmem:[%s2722 + $0x78] sm:$0xff]
    %2739 = vmatprep.subr.mxu0 0.0
    %2740 = vmatpush1.msra.mxu0 %v2738
    %2741 = vmatprep.subr.mxu0 0.0
    %2742 = vmatpush1.msra.mxu0 %v2737
    %2743 = vmatprep.subr.mxu0 0.0
    %2744 = vmatpush1.msra.mxu0 %v2736
    %2745 = vmatprep.subr.mxu0 0.0
    %2746 = vmatpush1.msra.mxu0 %v2735
    %2747 = vmatprep.subr.mxu0 0.0
    %2748 = vmatpush1.msra.mxu0 %v2734
    %2749 = vmatprep.subr.mxu0 0.0
    %2750 = vmatpush1.msra.mxu0 %v2733
    %2751 = vmatprep.subr.mxu0 0.0
    %2752 = vmatpush1.msra.mxu0 %v2732
    %2753 = vmatprep.subr.mxu0 0.0
    %2754 = vmatpush1.msra.mxu0 %v2731
    %2755 = vmatprep.subr.mxu0 0.0
    %2756 = vmatpush1.msra.mxu0 %v2730
    %2757 = vmatprep.subr.mxu0 0.0
    %2758 = vmatpush1.msra.mxu0 %v2729
    %2759 = vmatprep.subr.mxu0 0.0
    %2760 = vmatpush1.msra.mxu0 %v2728
    %2761 = vmatprep.subr.mxu0 0.0
    %2762 = vmatpush1.msra.mxu0 %v2727
    %2763 = vmatprep.subr.mxu0 0.0
    %2764 = vmatpush1.msra.mxu0 %v2726
    %2765 = vmatprep.subr.mxu0 0.0
    %2766 = vmatpush1.msra.mxu0 %v2725
    %2767 = vmatprep.subr.mxu0 0.0
    %2768 = vmatpush1.msra.mxu0 %v2724
    %2769 = vmatprep.subr.mxu0 0.0
    %2770 = vmatpush1.msra.mxu0 %v2723
    %2771 = vmatprep.subr.mxu0 0.0
    %2772 = vmatpush2.msra.mxu0 0.0
    %2773 = vmatprep.subr.mxu0 0.0
    %2774 = vmatpush2.msra.mxu0 0.0
    %2775 = vmatprep.subr.mxu0 0.0
    %2776 = vmatpush2.msra.mxu0 0.0
    %2777 = vmatprep.subr.mxu0 0.0
    %2778 = vmatpush2.msra.mxu0 0.0
    %2779 = vmatprep.subr.mxu0 0.0
    %2780 = vmatpush2.msra.mxu0 0.0
    %2781 = vmatprep.subr.mxu0 0.0
    %2782 = vmatpush2.msra.mxu0 0.0
    %2783 = vmatprep.subr.mxu0 0.0
    %2784 = vmatpush2.msra.mxu0 0.0
    %2785 = vmatprep.subr.mxu0 0.0
    %2786 = vmatpush2.msra.mxu0 0.0
    %2787 = vmatprep.subr.mxu0 0.0
    %2788 = vmatpush2.msra.mxu0 0.0
    %2789 = vmatprep.subr.mxu0 0.0
    %2790 = vmatpush2.msra.mxu0 0.0
    %2791 = vmatprep.subr.mxu0 0.0
    %2792 = vmatpush2.msra.mxu0 0.0
    %2793 = vmatprep.subr.mxu0 0.0
    %2794 = vmatpush2.msra.mxu0 0.0
    %2795 = vmatprep.subr.mxu0 0.0
    %2796 = vmatpush2.msra.mxu0 0.0
    %2797 = vmatprep.subr.mxu0 0.0
    %2798 = vmatpush2.msra.mxu0 0.0
    %2799 = vmatprep.subr.mxu0 0.0
    %2800 = vmatpush2.msra.mxu0 0.0
    %2801 = vmatprep.subr.mxu0 0.0
    %2802 = vmatpush2.msra.mxu0 0.0
    %2803 = vmatprep.mubr.f32.mxu0 0.0
    %2804 = vmatmul.mubr.f32.gmra.mxu0 %v2699
    %v2805 = vpop.f32.mrf.mxu0
    %v2806 = vadd.f32 0.0, %v2805
    %v2807 = vpop.f32.mrf.mxu0
    %2808 = vmatprep.mubr.f32.mxu0 0.0
    %2809 = vmatmul.mubr.f32.gmra.mxu0 %v2700
    %v2810 = vpop.f32.mrf.mxu0
    %v2811 = vadd.f32 0.0, %v2810
    %v2812 = vpop.f32.mrf.mxu0
    %2813 = vmatprep.mubr.f32.mxu0 0.0
    %2814 = vmatmul.mubr.f32.gmra.mxu0 %v2701
    %v2815 = vpop.f32.mrf.mxu0
    %v2816 = vadd.f32 0.0, %v2815
    %v2817 = vpop.f32.mrf.mxu0
    %2818 = vmatprep.mubr.f32.mxu0 0.0
    %2819 = vmatmul.mubr.f32.gmra.mxu0 %v2702
    %v2820 = vpop.f32.mrf.mxu0
    %v2821 = vadd.f32 0.0, %v2820
    %v2822 = vpop.f32.mrf.mxu0
    %2823 = vmatprep.mubr.f32.mxu0 0.0
    %2824 = vmatmul.mubr.f32.gmra.mxu0 %v2703
    %v2825 = vpop.f32.mrf.mxu0
    %v2826 = vadd.f32 0.0, %v2825
    %v2827 = vpop.f32.mrf.mxu0
    %2828 = vmatprep.mubr.f32.mxu0 0.0
    %2829 = vmatmul.mubr.f32.gmra.mxu0 %v2704
    %v2830 = vpop.f32.mrf.mxu0
    %v2831 = vadd.f32 0.0, %v2830
    %v2832 = vpop.f32.mrf.mxu0
    %2833 = vmatprep.mubr.f32.mxu0 0.0
    %2834 = vmatmul.mubr.f32.gmra.mxu0 %v2705
    %v2835 = vpop.f32.mrf.mxu0
    %v2836 = vadd.f32 0.0, %v2835
    %v2837 = vpop.f32.mrf.mxu0
    %2838 = vmatprep.mubr.f32.mxu0 0.0
    %2839 = vmatmul.mubr.f32.gmra.mxu0 %v2706
    %v2840 = vpop.f32.mrf.mxu0
    %v2841 = vadd.f32 0.0, %v2840
    %v2842 = vpop.f32.mrf.mxu0
    %2843 = vmatprep.mubr.f32.mxu0 0.0
    %2844 = vmatmul.mubr.f32.gmra.mxu0 %v2707
    %v2845 = vpop.f32.mrf.mxu0
    %v2846 = vadd.f32 0.0, %v2845
    %v2847 = vpop.f32.mrf.mxu0
    %2848 = vmatprep.mubr.f32.mxu0 0.0
    %2849 = vmatmul.mubr.f32.gmra.mxu0 %v2708
    %v2850 = vpop.f32.mrf.mxu0
    %v2851 = vadd.f32 0.0, %v2850
    %v2852 = vpop.f32.mrf.mxu0
    %2853 = vmatprep.mubr.f32.mxu0 0.0
    %2854 = vmatmul.mubr.f32.gmra.mxu0 %v2709
    %v2855 = vpop.f32.mrf.mxu0
    %v2856 = vadd.f32 0.0, %v2855
    %v2857 = vpop.f32.mrf.mxu0
    %2858 = vmatprep.mubr.f32.mxu0 0.0
    %2859 = vmatmul.mubr.f32.gmra.mxu0 %v2710
    %v2860 = vpop.f32.mrf.mxu0
    %v2861 = vadd.f32 0.0, %v2860
    %v2862 = vpop.f32.mrf.mxu0
    %2863 = vmatprep.mubr.f32.mxu0 0.0
    %2864 = vmatmul.mubr.f32.gmra.mxu0 %v2711
    %v2865 = vpop.f32.mrf.mxu0
    %v2866 = vadd.f32 0.0, %v2865
    %v2867 = vpop.f32.mrf.mxu0
    %2868 = vmatprep.mubr.f32.mxu0 0.0
    %2869 = vmatmul.mubr.f32.gmra.mxu0 %v2712
    %v2870 = vpop.f32.mrf.mxu0
    %v2871 = vadd.f32 0.0, %v2870
    %v2872 = vpop.f32.mrf.mxu0
    %2873 = vmatprep.mubr.f32.mxu0 0.0
    %2874 = vmatmul.mubr.f32.gmra.mxu0 %v2713
    %v2875 = vpop.f32.mrf.mxu0
    %v2876 = vadd.f32 0.0, %v2875
    %v2877 = vpop.f32.mrf.mxu0
    %2878 = vmatprep.mubr.f32.mxu0 0.0
    %2879 = vmatmul.mubr.f32.gmra.mxu0 %v2714
    %v2880 = vpop.f32.mrf.mxu0
    %v2881 = vadd.f32 0.0, %v2880
    %v2882 = vpop.f32.mrf.mxu0
    %2883 = vmatprep.mubr.f32.mxu0 0.0
    %2884 = vmatmul.mubr.f32.gmra.mxu0 %v2715
    %v2885 = vpop.f32.mrf.mxu0
    %v2886 = vadd.f32 0.0, %v2885
    %v2887 = vpop.f32.mrf.mxu0
    %2888 = vmatprep.mubr.f32.mxu0 0.0
    %2889 = vmatmul.mubr.f32.gmra.mxu0 %v2716
    %v2890 = vpop.f32.mrf.mxu0
    %v2891 = vadd.f32 0.0, %v2890
    %v2892 = vpop.f32.mrf.mxu0
    %2893 = vmatprep.mubr.f32.mxu0 0.0
    %2894 = vmatmul.mubr.f32.gmra.mxu0 %v2717
    %v2895 = vpop.f32.mrf.mxu0
    %v2896 = vadd.f32 0.0, %v2895
    %v2897 = vpop.f32.mrf.mxu0
    %2898 = vmatprep.mubr.f32.mxu0 0.0
    %2899 = vmatmul.mubr.f32.gmra.mxu0 %v2718
    %v2900 = vpop.f32.mrf.mxu0
    %v2901 = vadd.f32 0.0, %v2900
    %v2902 = vpop.f32.mrf.mxu0
    %2903 = vmatprep.mubr.f32.mxu0 0.0
    %2904 = vmatmul.mubr.f32.gmra.mxu0 %v2719
    %v2905 = vpop.f32.mrf.mxu0
    %v2906 = vadd.f32 0.0, %v2905
    %v2907 = vpop.f32.mrf.mxu0
    %2908 = vmatprep.mubr.f32.mxu0 0.0
    %2909 = vmatmul.mubr.f32.gmra.mxu0 %v2720
    %v2910 = vpop.f32.mrf.mxu0
    %v2911 = vadd.f32 0.0, %v2910
    %v2912 = vpop.f32.mrf.mxu0
    %2913 = vmatprep.mubr.f32.mxu0 0.0
    %2914 = vmatmul.mubr.f32.gmra.mxu0 %v2721
    %v2915 = vpop.f32.mrf.mxu0
    %v2916 = vadd.f32 0.0, %v2915
    %v2917 = vpop.f32.mrf.mxu0
    %2918 = vdwg.mxu0
    %2919 = vmatprep.subr.mxu0 0.0
    %2920 = vmatpush1.msra.mxu0 %v2698
    %2921 = vmatprep.subr.mxu0 0.0
    %2922 = vmatpush1.msra.mxu0 %v2697
    %2923 = vmatprep.subr.mxu0 0.0
    %2924 = vmatpush1.msra.mxu0 %v2696
    %2925 = vmatprep.subr.mxu0 0.0
    %2926 = vmatpush1.msra.mxu0 %v2695
    %2927 = vmatprep.subr.mxu0 0.0
    %2928 = vmatpush1.msra.mxu0 %v2694
    %2929 = vmatprep.subr.mxu0 0.0
    %2930 = vmatpush1.msra.mxu0 %v2693
    %2931 = vmatprep.subr.mxu0 0.0
    %2932 = vmatpush1.msra.mxu0 %v2692
    %2933 = vmatprep.subr.mxu0 0.0
    %2934 = vmatpush1.msra.mxu0 %v2691
    %2935 = vmatprep.subr.mxu0 0.0
    %2936 = vmatpush1.msra.mxu0 %v2690
    %2937 = vmatprep.subr.mxu0 0.0
    %2938 = vmatpush1.msra.mxu0 %v2689
    %2939 = vmatprep.subr.mxu0 0.0
    %2940 = vmatpush1.msra.mxu0 %v2688
    %2941 = vmatprep.subr.mxu0 0.0
    %2942 = vmatpush1.msra.mxu0 %v2687
    %2943 = vmatprep.subr.mxu0 0.0
    %2944 = vmatpush1.msra.mxu0 %v2686
    %2945 = vmatprep.subr.mxu0 0.0
    %2946 = vmatpush1.msra.mxu0 %v2685
    %2947 = vmatprep.subr.mxu0 0.0
    %2948 = vmatpush1.msra.mxu0 %v2684
    %2949 = vmatprep.subr.mxu0 0.0
    %2950 = vmatpush1.msra.mxu0 %v2683
    %2951 = vmatprep.subr.mxu0 0.0
    %2952 = vmatpush2.msra.mxu0 0.0
    %2953 = vmatprep.subr.mxu0 0.0
    %2954 = vmatpush2.msra.mxu0 0.0
    %2955 = vmatprep.subr.mxu0 0.0
    %2956 = vmatpush2.msra.mxu0 0.0
    %2957 = vmatprep.subr.mxu0 0.0
    %2958 = vmatpush2.msra.mxu0 0.0
    %2959 = vmatprep.subr.mxu0 0.0
    %2960 = vmatpush2.msra.mxu0 0.0
    %2961 = vmatprep.subr.mxu0 0.0
    %2962 = vmatpush2.msra.mxu0 0.0
    %2963 = vmatprep.subr.mxu0 0.0
    %2964 = vmatpush2.msra.mxu0 0.0
    %2965 = vmatprep.subr.mxu0 0.0
    %2966 = vmatpush2.msra.mxu0 0.0
    %2967 = vmatprep.subr.mxu0 0.0
    %2968 = vmatpush2.msra.mxu0 0.0
    %2969 = vmatprep.subr.mxu0 0.0
    %2970 = vmatpush2.msra.mxu0 0.0
    %2971 = vmatprep.subr.mxu0 0.0
    %2972 = vmatpush2.msra.mxu0 0.0
    %2973 = vmatprep.subr.mxu0 0.0
    %2974 = vmatpush2.msra.mxu0 0.0
    %2975 = vmatprep.subr.mxu0 0.0
    %2976 = vmatpush2.msra.mxu0 0.0
    %2977 = vmatprep.subr.mxu0 0.0
    %2978 = vmatpush2.msra.mxu0 0.0
    %2979 = vmatprep.subr.mxu0 0.0
    %2980 = vmatpush2.msra.mxu0 0.0
    %2981 = vmatprep.subr.mxu0 0.0
    %2982 = vmatpush2.msra.mxu0 0.0
    %2983 = vmatprep.mubr.f32.mxu0 0.0
    %2984 = vmatmul.mubr.f32.gmra.mxu0 %v2660
    %v2985 = vpop.f32.mrf.mxu0
    %v2986 = vadd.f32 %v2806, %v2985
    %v2987 = vpop.f32.mrf.mxu0
    %2988 = vmatprep.mubr.f32.mxu0 0.0
    %2989 = vmatmul.mubr.f32.gmra.mxu0 %v2661
    %v2990 = vpop.f32.mrf.mxu0
    %v2991 = vadd.f32 %v2811, %v2990
    %v2992 = vpop.f32.mrf.mxu0
    %2993 = vmatprep.mubr.f32.mxu0 0.0
    %2994 = vmatmul.mubr.f32.gmra.mxu0 %v2662
    %v2995 = vpop.f32.mrf.mxu0
    %v2996 = vadd.f32 %v2816, %v2995
    %v2997 = vpop.f32.mrf.mxu0
    %2998 = vmatprep.mubr.f32.mxu0 0.0
    %2999 = vmatmul.mubr.f32.gmra.mxu0 %v2663
    %v3000 = vpop.f32.mrf.mxu0
    %v3001 = vadd.f32 %v2821, %v3000
    %v3002 = vpop.f32.mrf.mxu0
    %3003 = vmatprep.mubr.f32.mxu0 0.0
    %3004 = vmatmul.mubr.f32.gmra.mxu0 %v2664
    %v3005 = vpop.f32.mrf.mxu0
    %v3006 = vadd.f32 %v2826, %v3005
    %v3007 = vpop.f32.mrf.mxu0
    %3008 = vmatprep.mubr.f32.mxu0 0.0
    %3009 = vmatmul.mubr.f32.gmra.mxu0 %v2665
    %v3010 = vpop.f32.mrf.mxu0
    %v3011 = vadd.f32 %v2831, %v3010
    %v3012 = vpop.f32.mrf.mxu0
    %3013 = vmatprep.mubr.f32.mxu0 0.0
    %3014 = vmatmul.mubr.f32.gmra.mxu0 %v2666
    %v3015 = vpop.f32.mrf.mxu0
    %v3016 = vadd.f32 %v2836, %v3015
    %v3017 = vpop.f32.mrf.mxu0
    %3018 = vmatprep.mubr.f32.mxu0 0.0
    %3019 = vmatmul.mubr.f32.gmra.mxu0 %v2667
    %v3020 = vpop.f32.mrf.mxu0
    %v3021 = vadd.f32 %v2841, %v3020
    %v3022 = vpop.f32.mrf.mxu0
    %3023 = vmatprep.mubr.f32.mxu0 0.0
    %3024 = vmatmul.mubr.f32.gmra.mxu0 %v2668
    %v3025 = vpop.f32.mrf.mxu0
    %v3026 = vadd.f32 %v2846, %v3025
    %v3027 = vpop.f32.mrf.mxu0
    %3028 = vmatprep.mubr.f32.mxu0 0.0
    %3029 = vmatmul.mubr.f32.gmra.mxu0 %v2669
    %v3030 = vpop.f32.mrf.mxu0
    %v3031 = vadd.f32 %v2851, %v3030
    %v3032 = vpop.f32.mrf.mxu0
    %3033 = vmatprep.mubr.f32.mxu0 0.0
    %3034 = vmatmul.mubr.f32.gmra.mxu0 %v2670
    %v3035 = vpop.f32.mrf.mxu0
    %v3036 = vadd.f32 %v2856, %v3035
    %v3037 = vpop.f32.mrf.mxu0
    %3038 = vmatprep.mubr.f32.mxu0 0.0
    %3039 = vmatmul.mubr.f32.gmra.mxu0 %v2671
    %v3040 = vpop.f32.mrf.mxu0
    %v3041 = vadd.f32 %v2861, %v3040
    %v3042 = vpop.f32.mrf.mxu0
    %3043 = vmatprep.mubr.f32.mxu0 0.0
    %3044 = vmatmul.mubr.f32.gmra.mxu0 %v2672
    %v3045 = vpop.f32.mrf.mxu0
    %v3046 = vadd.f32 %v2866, %v3045
    %v3047 = vpop.f32.mrf.mxu0
    %3048 = vmatprep.mubr.f32.mxu0 0.0
    %3049 = vmatmul.mubr.f32.gmra.mxu0 %v2673
    %v3050 = vpop.f32.mrf.mxu0
    %v3051 = vadd.f32 %v2871, %v3050
    %v3052 = vpop.f32.mrf.mxu0
    %3053 = vmatprep.mubr.f32.mxu0 0.0
    %3054 = vmatmul.mubr.f32.gmra.mxu0 %v2674
    %v3055 = vpop.f32.mrf.mxu0
    %v3056 = vadd.f32 %v2876, %v3055
    %v3057 = vpop.f32.mrf.mxu0
    %3058 = vmatprep.mubr.f32.mxu0 0.0
    %3059 = vmatmul.mubr.f32.gmra.mxu0 %v2675
    %v3060 = vpop.f32.mrf.mxu0
    %v3061 = vadd.f32 %v2881, %v3060
    %v3062 = vpop.f32.mrf.mxu0
    %3063 = vmatprep.mubr.f32.mxu0 0.0
    %3064 = vmatmul.mubr.f32.gmra.mxu0 %v2676
    %v3065 = vpop.f32.mrf.mxu0
    %v3066 = vadd.f32 %v2886, %v3065
    %v3067 = vpop.f32.mrf.mxu0
    %3068 = vmatprep.mubr.f32.mxu0 0.0
    %3069 = vmatmul.mubr.f32.gmra.mxu0 %v2677
    %v3070 = vpop.f32.mrf.mxu0
    %v3071 = vadd.f32 %v2891, %v3070
    %v3072 = vpop.f32.mrf.mxu0
    %3073 = vmatprep.mubr.f32.mxu0 0.0
    %3074 = vmatmul.mubr.f32.gmra.mxu0 %v2678
    %v3075 = vpop.f32.mrf.mxu0
    %v3076 = vadd.f32 %v2896, %v3075
    %v3077 = vpop.f32.mrf.mxu0
    %3078 = vmatprep.mubr.f32.mxu0 0.0
    %3079 = vmatmul.mubr.f32.gmra.mxu0 %v2679
    %v3080 = vpop.f32.mrf.mxu0
    %v3081 = vadd.f32 %v2901, %v3080
    %v3082 = vpop.f32.mrf.mxu0
    %3083 = vmatprep.mubr.f32.mxu0 0.0
    %3084 = vmatmul.mubr.f32.gmra.mxu0 %v2680
    %v3085 = vpop.f32.mrf.mxu0
    %v3086 = vadd.f32 %v2906, %v3085
    %v3087 = vpop.f32.mrf.mxu0
    %3088 = vmatprep.mubr.f32.mxu0 0.0
    %3089 = vmatmul.mubr.f32.gmra.mxu0 %v2681
    %v3090 = vpop.f32.mrf.mxu0
    %v3091 = vadd.f32 %v2911, %v3090
    %v3092 = vpop.f32.mrf.mxu0
    %3093 = vmatprep.mubr.f32.mxu0 0.0
    %3094 = vmatmul.mubr.f32.gmra.mxu0 %v2682
    %v3095 = vpop.f32.mrf.mxu0
    %v3096 = vadd.f32 %v2916, %v3095
    %v3097 = vpop.f32.mrf.mxu0
    %3098 = vdwg.mxu0
    %v3099 = vld [vmem:[#allocation2 + $0x2] sm:$0xff]
    %v3100 = vld [vmem:[#allocation2 + $0xa] sm:$0xff]
    %v3101 = vld [vmem:[#allocation2 + $0x12] sm:$0xff]
    %v3102 = vld [vmem:[#allocation2 + $0x1a] sm:$0xff]
    %v3103 = vld [vmem:[#allocation2 + $0x22] sm:$0xff]
    %v3104 = vld [vmem:[#allocation2 + $0x2a] sm:$0xff]
    %v3105 = vld [vmem:[#allocation2 + $0x32] sm:$0xff]
    %v3106 = vld [vmem:[#allocation2 + $0x3a] sm:$0xff]
    %v3107 = vld [vmem:[#allocation2 + $0x42] sm:$0xff]
    %v3108 = vld [vmem:[#allocation2 + $0x4a] sm:$0xff]
    %v3109 = vld [vmem:[#allocation2 + $0x52] sm:$0xff]
    %v3110 = vld [vmem:[#allocation2 + $0x5a] sm:$0xff]
    %v3111 = vld [vmem:[#allocation2 + $0x62] sm:$0xff]
    %v3112 = vld [vmem:[#allocation2 + $0x6a] sm:$0xff]
    %v3113 = vld [vmem:[#allocation2 + $0x72] sm:$0xff]
    %v3114 = vld [vmem:[#allocation2 + $0x7a] sm:$0xff]
    %v3115 = vld [vmem:[#allocation2 + $0x82] sm:$0xff]
    %v3116 = vld [vmem:[#allocation2 + $0x8a] sm:$0xff]
    %v3117 = vld [vmem:[#allocation2 + $0x92] sm:$0xff]
    %v3118 = vld [vmem:[#allocation2 + $0x9a] sm:$0xff]
    %v3119 = vld [vmem:[#allocation2 + $0xa2] sm:$0xff]
    %v3120 = vld [vmem:[#allocation2 + $0xaa] sm:$0xff]
    %v3121 = vld [vmem:[#allocation2 + $0xb2] sm:$0x3]
    %s3122 = scalar_lea.vmem [#allocation8], 256
    %v3123 = vld [vmem:[%s3122] sm:$0xff]
    %v3124 = vld [vmem:[%s3122 + $0x8] sm:$0xff]
    %v3125 = vld [vmem:[%s3122 + $0x10] sm:$0xff]
    %v3126 = vld [vmem:[%s3122 + $0x18] sm:$0xff]
    %v3127 = vld [vmem:[%s3122 + $0x20] sm:$0xff]
    %v3128 = vld [vmem:[%s3122 + $0x28] sm:$0xff]
    %v3129 = vld [vmem:[%s3122 + $0x30] sm:$0xff]
    %v3130 = vld [vmem:[%s3122 + $0x38] sm:$0xff]
    %v3131 = vld [vmem:[%s3122 + $0x40] sm:$0xff]
    %v3132 = vld [vmem:[%s3122 + $0x48] sm:$0xff]
    %v3133 = vld [vmem:[%s3122 + $0x50] sm:$0xff]
    %v3134 = vld [vmem:[%s3122 + $0x58] sm:$0xff]
    %v3135 = vld [vmem:[%s3122 + $0x60] sm:$0xff]
    %v3136 = vld [vmem:[%s3122 + $0x68] sm:$0xff]
    %v3137 = vld [vmem:[%s3122 + $0x70] sm:$0xff]
    %v3138 = vld [vmem:[%s3122 + $0x78] sm:$0xff]
    %3139 = vmatprep.subr.mxu0 0.0
    %3140 = vmatpush1.msra.mxu0 %v3138
    %3141 = vmatprep.subr.mxu0 0.0
    %3142 = vmatpush1.msra.mxu0 %v3137
    %3143 = vmatprep.subr.mxu0 0.0
    %3144 = vmatpush1.msra.mxu0 %v3136
    %3145 = vmatprep.subr.mxu0 0.0
    %3146 = vmatpush1.msra.mxu0 %v3135
    %3147 = vmatprep.subr.mxu0 0.0
    %3148 = vmatpush1.msra.mxu0 %v3134
    %3149 = vmatprep.subr.mxu0 0.0
    %3150 = vmatpush1.msra.mxu0 %v3133
    %3151 = vmatprep.subr.mxu0 0.0
    %3152 = vmatpush1.msra.mxu0 %v3132
    %3153 = vmatprep.subr.mxu0 0.0
    %3154 = vmatpush1.msra.mxu0 %v3131
    %3155 = vmatprep.subr.mxu0 0.0
    %3156 = vmatpush1.msra.mxu0 %v3130
    %3157 = vmatprep.subr.mxu0 0.0
    %3158 = vmatpush1.msra.mxu0 %v3129
    %3159 = vmatprep.subr.mxu0 0.0
    %3160 = vmatpush1.msra.mxu0 %v3128
    %3161 = vmatprep.subr.mxu0 0.0
    %3162 = vmatpush1.msra.mxu0 %v3127
    %3163 = vmatprep.subr.mxu0 0.0
    %3164 = vmatpush1.msra.mxu0 %v3126
    %3165 = vmatprep.subr.mxu0 0.0
    %3166 = vmatpush1.msra.mxu0 %v3125
    %3167 = vmatprep.subr.mxu0 0.0
    %3168 = vmatpush1.msra.mxu0 %v3124
    %3169 = vmatprep.subr.mxu0 0.0
    %3170 = vmatpush1.msra.mxu0 %v3123
    %3171 = vmatprep.subr.mxu0 0.0
    %3172 = vmatpush2.msra.mxu0 0.0
    %3173 = vmatprep.subr.mxu0 0.0
    %3174 = vmatpush2.msra.mxu0 0.0
    %3175 = vmatprep.subr.mxu0 0.0
    %3176 = vmatpush2.msra.mxu0 0.0
    %3177 = vmatprep.subr.mxu0 0.0
    %3178 = vmatpush2.msra.mxu0 0.0
    %3179 = vmatprep.subr.mxu0 0.0
    %3180 = vmatpush2.msra.mxu0 0.0
    %3181 = vmatprep.subr.mxu0 0.0
    %3182 = vmatpush2.msra.mxu0 0.0
    %3183 = vmatprep.subr.mxu0 0.0
    %3184 = vmatpush2.msra.mxu0 0.0
    %3185 = vmatprep.subr.mxu0 0.0
    %3186 = vmatpush2.msra.mxu0 0.0
    %3187 = vmatprep.subr.mxu0 0.0
    %3188 = vmatpush2.msra.mxu0 0.0
    %3189 = vmatprep.subr.mxu0 0.0
    %3190 = vmatpush2.msra.mxu0 0.0
    %3191 = vmatprep.subr.mxu0 0.0
    %3192 = vmatpush2.msra.mxu0 0.0
    %3193 = vmatprep.subr.mxu0 0.0
    %3194 = vmatpush2.msra.mxu0 0.0
    %3195 = vmatprep.subr.mxu0 0.0
    %3196 = vmatpush2.msra.mxu0 0.0
    %3197 = vmatprep.subr.mxu0 0.0
    %3198 = vmatpush2.msra.mxu0 0.0
    %3199 = vmatprep.subr.mxu0 0.0
    %3200 = vmatpush2.msra.mxu0 0.0
    %3201 = vmatprep.subr.mxu0 0.0
    %3202 = vmatpush2.msra.mxu0 0.0
    %3203 = vmatprep.mubr.f32.mxu0 0.0
    %3204 = vmatmul.mubr.f32.gmra.mxu0 %v3099
    %v3205 = vpop.f32.mrf.mxu0
    %v3206 = vadd.f32 0.0, %v3205
    %v3207 = vpop.f32.mrf.mxu0
    %3208 = vmatprep.mubr.f32.mxu0 0.0
    %3209 = vmatmul.mubr.f32.gmra.mxu0 %v3100
    %v3210 = vpop.f32.mrf.mxu0
    %v3211 = vadd.f32 0.0, %v3210
    %v3212 = vpop.f32.mrf.mxu0
    %3213 = vmatprep.mubr.f32.mxu0 0.0
    %3214 = vmatmul.mubr.f32.gmra.mxu0 %v3101
    %v3215 = vpop.f32.mrf.mxu0
    %v3216 = vadd.f32 0.0, %v3215
    %v3217 = vpop.f32.mrf.mxu0
    %3218 = vmatprep.mubr.f32.mxu0 0.0
    %3219 = vmatmul.mubr.f32.gmra.mxu0 %v3102
    %v3220 = vpop.f32.mrf.mxu0
    %v3221 = vadd.f32 0.0, %v3220
    %v3222 = vpop.f32.mrf.mxu0
    %3223 = vmatprep.mubr.f32.mxu0 0.0
    %3224 = vmatmul.mubr.f32.gmra.mxu0 %v3103
    %v3225 = vpop.f32.mrf.mxu0
    %v3226 = vadd.f32 0.0, %v3225
    %v3227 = vpop.f32.mrf.mxu0
    %3228 = vmatprep.mubr.f32.mxu0 0.0
    %3229 = vmatmul.mubr.f32.gmra.mxu0 %v3104
    %v3230 = vpop.f32.mrf.mxu0
    %v3231 = vadd.f32 0.0, %v3230
    %v3232 = vpop.f32.mrf.mxu0
    %3233 = vmatprep.mubr.f32.mxu0 0.0
    %3234 = vmatmul.mubr.f32.gmra.mxu0 %v3105
    %v3235 = vpop.f32.mrf.mxu0
    %v3236 = vadd.f32 0.0, %v3235
    %v3237 = vpop.f32.mrf.mxu0
    %3238 = vmatprep.mubr.f32.mxu0 0.0
    %3239 = vmatmul.mubr.f32.gmra.mxu0 %v3106
    %v3240 = vpop.f32.mrf.mxu0
    %v3241 = vadd.f32 0.0, %v3240
    %v3242 = vpop.f32.mrf.mxu0
    %3243 = vmatprep.mubr.f32.mxu0 0.0
    %3244 = vmatmul.mubr.f32.gmra.mxu0 %v3107
    %v3245 = vpop.f32.mrf.mxu0
    %v3246 = vadd.f32 0.0, %v3245
    %v3247 = vpop.f32.mrf.mxu0
    %3248 = vmatprep.mubr.f32.mxu0 0.0
    %3249 = vmatmul.mubr.f32.gmra.mxu0 %v3108
    %v3250 = vpop.f32.mrf.mxu0
    %v3251 = vadd.f32 0.0, %v3250
    %v3252 = vpop.f32.mrf.mxu0
    %3253 = vmatprep.mubr.f32.mxu0 0.0
    %3254 = vmatmul.mubr.f32.gmra.mxu0 %v3109
    %v3255 = vpop.f32.mrf.mxu0
    %v3256 = vadd.f32 0.0, %v3255
    %v3257 = vpop.f32.mrf.mxu0
    %3258 = vmatprep.mubr.f32.mxu0 0.0
    %3259 = vmatmul.mubr.f32.gmra.mxu0 %v3110
    %v3260 = vpop.f32.mrf.mxu0
    %v3261 = vadd.f32 0.0, %v3260
    %v3262 = vpop.f32.mrf.mxu0
    %3263 = vmatprep.mubr.f32.mxu0 0.0
    %3264 = vmatmul.mubr.f32.gmra.mxu0 %v3111
    %v3265 = vpop.f32.mrf.mxu0
    %v3266 = vadd.f32 0.0, %v3265
    %v3267 = vpop.f32.mrf.mxu0
    %3268 = vmatprep.mubr.f32.mxu0 0.0
    %3269 = vmatmul.mubr.f32.gmra.mxu0 %v3112
    %v3270 = vpop.f32.mrf.mxu0
    %v3271 = vadd.f32 0.0, %v3270
    %v3272 = vpop.f32.mrf.mxu0
    %3273 = vmatprep.mubr.f32.mxu0 0.0
    %3274 = vmatmul.mubr.f32.gmra.mxu0 %v3113
    %v3275 = vpop.f32.mrf.mxu0
    %v3276 = vadd.f32 0.0, %v3275
    %v3277 = vpop.f32.mrf.mxu0
    %3278 = vmatprep.mubr.f32.mxu0 0.0
    %3279 = vmatmul.mubr.f32.gmra.mxu0 %v3114
    %v3280 = vpop.f32.mrf.mxu0
    %v3281 = vadd.f32 0.0, %v3280
    %v3282 = vpop.f32.mrf.mxu0
    %3283 = vmatprep.mubr.f32.mxu0 0.0
    %3284 = vmatmul.mubr.f32.gmra.mxu0 %v3115
    %v3285 = vpop.f32.mrf.mxu0
    %v3286 = vadd.f32 0.0, %v3285
    %v3287 = vpop.f32.mrf.mxu0
    %3288 = vmatprep.mubr.f32.mxu0 0.0
    %3289 = vmatmul.mubr.f32.gmra.mxu0 %v3116
    %v3290 = vpop.f32.mrf.mxu0
    %v3291 = vadd.f32 0.0, %v3290
    %v3292 = vpop.f32.mrf.mxu0
    %3293 = vmatprep.mubr.f32.mxu0 0.0
    %3294 = vmatmul.mubr.f32.gmra.mxu0 %v3117
    %v3295 = vpop.f32.mrf.mxu0
    %v3296 = vadd.f32 0.0, %v3295
    %v3297 = vpop.f32.mrf.mxu0
    %3298 = vmatprep.mubr.f32.mxu0 0.0
    %3299 = vmatmul.mubr.f32.gmra.mxu0 %v3118
    %v3300 = vpop.f32.mrf.mxu0
    %v3301 = vadd.f32 0.0, %v3300
    %v3302 = vpop.f32.mrf.mxu0
    %3303 = vmatprep.mubr.f32.mxu0 0.0
    %3304 = vmatmul.mubr.f32.gmra.mxu0 %v3119
    %v3305 = vpop.f32.mrf.mxu0
    %v3306 = vadd.f32 0.0, %v3305
    %v3307 = vpop.f32.mrf.mxu0
    %3308 = vmatprep.mubr.f32.mxu0 0.0
    %3309 = vmatmul.mubr.f32.gmra.mxu0 %v3120
    %v3310 = vpop.f32.mrf.mxu0
    %v3311 = vadd.f32 0.0, %v3310
    %v3312 = vpop.f32.mrf.mxu0
    %3313 = vmatprep.mubr.f32.mxu0 0.0
    %3314 = vmatmul.mubr.f32.gmra.mxu0 %v3121
    %v3315 = vpop.f32.mrf.mxu0
    %v3316 = vadd.f32 0.0, %v3315
    %v3317 = vpop.f32.mrf.mxu0
    %3318 = vdwg.mxu0
    %v3319 = vadd.f32 %v2986, %v3206
    %v3320 = vadd.f32 %v2991, %v3211
    %v3321 = vadd.f32 %v2996, %v3216
    %v3322 = vadd.f32 %v3001, %v3221
    %v3323 = vadd.f32 %v3006, %v3226
    %v3324 = vadd.f32 %v3011, %v3231
    %v3325 = vadd.f32 %v3016, %v3236
    %v3326 = vadd.f32 %v3021, %v3241
    %v3327 = vadd.f32 %v3026, %v3246
    %v3328 = vadd.f32 %v3031, %v3251
    %v3329 = vadd.f32 %v3036, %v3256
    %v3330 = vadd.f32 %v3041, %v3261
    %v3331 = vadd.f32 %v3046, %v3266
    %v3332 = vadd.f32 %v3051, %v3271
    %v3333 = vadd.f32 %v3056, %v3276
    %v3334 = vadd.f32 %v3061, %v3281
    %v3335 = vadd.f32 %v3066, %v3286
    %v3336 = vadd.f32 %v3071, %v3291
    %v3337 = vadd.f32 %v3076, %v3296
    %v3338 = vadd.f32 %v3081, %v3301
    %v3339 = vadd.f32 %v3086, %v3306
    %v3340 = vadd.f32 %v3091, %v3311
    %v3341 = vadd.f32 %v3096, %v3316
    %v3342 = vld [vmem:[#allocation2 + $0xa] sm:$0xff]
    %v3343 = vld [vmem:[#allocation2 + $0x12] sm:$0xff]
    %v3344 = vld [vmem:[#allocation2 + $0x1a] sm:$0xff]
    %v3345 = vld [vmem:[#allocation2 + $0x22] sm:$0xff]
    %v3346 = vld [vmem:[#allocation2 + $0x2a] sm:$0xff]
    %v3347 = vld [vmem:[#allocation2 + $0x32] sm:$0xff]
    %v3348 = vld [vmem:[#allocation2 + $0x3a] sm:$0xff]
    %v3349 = vld [vmem:[#allocation2 + $0x42] sm:$0xff]
    %v3350 = vld [vmem:[#allocation2 + $0x4a] sm:$0xff]
    %v3351 = vld [vmem:[#allocation2 + $0x52] sm:$0xff]
    %v3352 = vld [vmem:[#allocation2 + $0x5a] sm:$0xff]
    %v3353 = vld [vmem:[#allocation2 + $0x62] sm:$0xff]
    %v3354 = vld [vmem:[#allocation2 + $0x6a] sm:$0xff]
    %v3355 = vld [vmem:[#allocation2 + $0x72] sm:$0xff]
    %v3356 = vld [vmem:[#allocation2 + $0x7a] sm:$0xff]
    %v3357 = vld [vmem:[#allocation2 + $0x82] sm:$0xff]
    %v3358 = vld [vmem:[#allocation2 + $0x8a] sm:$0xff]
    %v3359 = vld [vmem:[#allocation2 + $0x92] sm:$0xff]
    %v3360 = vld [vmem:[#allocation2 + $0x9a] sm:$0xff]
    %v3361 = vld [vmem:[#allocation2 + $0xa2] sm:$0xff]
    %v3362 = vld [vmem:[#allocation2 + $0xaa] sm:$0xff]
    %v3363 = vld [vmem:[#allocation2 + $0xb2] sm:$0xff]
    %v3364 = vld [vmem:[#allocation2 + $0xba] sm:$0x3]
    %s3365 = scalar_lea.vmem [#allocation8], 384
    %v3366 = vld [vmem:[%s3365] sm:$0xff]
    %v3367 = vld [vmem:[%s3365 + $0x8] sm:$0xff]
    %v3368 = vld [vmem:[%s3365 + $0x10] sm:$0xff]
    %v3369 = vld [vmem:[%s3365 + $0x18] sm:$0xff]
    %v3370 = vld [vmem:[%s3365 + $0x20] sm:$0xff]
    %v3371 = vld [vmem:[%s3365 + $0x28] sm:$0xff]
    %v3372 = vld [vmem:[%s3365 + $0x30] sm:$0xff]
    %v3373 = vld [vmem:[%s3365 + $0x38] sm:$0xff]
    %v3374 = vld [vmem:[%s3365 + $0x40] sm:$0xff]
    %v3375 = vld [vmem:[%s3365 + $0x48] sm:$0xff]
    %v3376 = vld [vmem:[%s3365 + $0x50] sm:$0xff]
    %v3377 = vld [vmem:[%s3365 + $0x58] sm:$0xff]
    %v3378 = vld [vmem:[%s3365 + $0x60] sm:$0xff]
    %v3379 = vld [vmem:[%s3365 + $0x68] sm:$0xff]
    %v3380 = vld [vmem:[%s3365 + $0x70] sm:$0xff]
    %v3381 = vld [vmem:[%s3365 + $0x78] sm:$0xff]
    %3382 = vmatprep.subr.mxu0 0.0
    %3383 = vmatpush1.msra.mxu0 %v3381
    %3384 = vmatprep.subr.mxu0 0.0
    %3385 = vmatpush1.msra.mxu0 %v3380
    %3386 = vmatprep.subr.mxu0 0.0
    %3387 = vmatpush1.msra.mxu0 %v3379
    %3388 = vmatprep.subr.mxu0 0.0
    %3389 = vmatpush1.msra.mxu0 %v3378
    %3390 = vmatprep.subr.mxu0 0.0
    %3391 = vmatpush1.msra.mxu0 %v3377
    %3392 = vmatprep.subr.mxu0 0.0
    %3393 = vmatpush1.msra.mxu0 %v3376
    %3394 = vmatprep.subr.mxu0 0.0
    %3395 = vmatpush1.msra.mxu0 %v3375
    %3396 = vmatprep.subr.mxu0 0.0
    %3397 = vmatpush1.msra.mxu0 %v3374
    %3398 = vmatprep.subr.mxu0 0.0
    %3399 = vmatpush1.msra.mxu0 %v3373
    %3400 = vmatprep.subr.mxu0 0.0
    %3401 = vmatpush1.msra.mxu0 %v3372
    %3402 = vmatprep.subr.mxu0 0.0
    %3403 = vmatpush1.msra.mxu0 %v3371
    %3404 = vmatprep.subr.mxu0 0.0
    %3405 = vmatpush1.msra.mxu0 %v3370
    %3406 = vmatprep.subr.mxu0 0.0
    %3407 = vmatpush1.msra.mxu0 %v3369
    %3408 = vmatprep.subr.mxu0 0.0
    %3409 = vmatpush1.msra.mxu0 %v3368
    %3410 = vmatprep.subr.mxu0 0.0
    %3411 = vmatpush1.msra.mxu0 %v3367
    %3412 = vmatprep.subr.mxu0 0.0
    %3413 = vmatpush1.msra.mxu0 %v3366
    %3414 = vmatprep.subr.mxu0 0.0
    %3415 = vmatpush2.msra.mxu0 0.0
    %3416 = vmatprep.subr.mxu0 0.0
    %3417 = vmatpush2.msra.mxu0 0.0
    %3418 = vmatprep.subr.mxu0 0.0
    %3419 = vmatpush2.msra.mxu0 0.0
    %3420 = vmatprep.subr.mxu0 0.0
    %3421 = vmatpush2.msra.mxu0 0.0
    %3422 = vmatprep.subr.mxu0 0.0
    %3423 = vmatpush2.msra.mxu0 0.0
    %3424 = vmatprep.subr.mxu0 0.0
    %3425 = vmatpush2.msra.mxu0 0.0
    %3426 = vmatprep.subr.mxu0 0.0
    %3427 = vmatpush2.msra.mxu0 0.0
    %3428 = vmatprep.subr.mxu0 0.0
    %3429 = vmatpush2.msra.mxu0 0.0
    %3430 = vmatprep.subr.mxu0 0.0
    %3431 = vmatpush2.msra.mxu0 0.0
    %3432 = vmatprep.subr.mxu0 0.0
    %3433 = vmatpush2.msra.mxu0 0.0
    %3434 = vmatprep.subr.mxu0 0.0
    %3435 = vmatpush2.msra.mxu0 0.0
    %3436 = vmatprep.subr.mxu0 0.0
    %3437 = vmatpush2.msra.mxu0 0.0
    %3438 = vmatprep.subr.mxu0 0.0
    %3439 = vmatpush2.msra.mxu0 0.0
    %3440 = vmatprep.subr.mxu0 0.0
    %3441 = vmatpush2.msra.mxu0 0.0
    %3442 = vmatprep.subr.mxu0 0.0
    %3443 = vmatpush2.msra.mxu0 0.0
    %3444 = vmatprep.subr.mxu0 0.0
    %3445 = vmatpush2.msra.mxu0 0.0
    %3446 = vmatprep.mubr.f32.mxu0 0.0
    %3447 = vmatmul.mubr.f32.gmra.mxu0 %v3342
    %v3448 = vpop.f32.mrf.mxu0
    %v3449 = vadd.f32 0.0, %v3448
    %v3450 = vpop.f32.mrf.mxu0
    %3451 = vmatprep.mubr.f32.mxu0 0.0
    %3452 = vmatmul.mubr.f32.gmra.mxu0 %v3343
    %v3453 = vpop.f32.mrf.mxu0
    %v3454 = vadd.f32 0.0, %v3453
    %v3455 = vpop.f32.mrf.mxu0
    %3456 = vmatprep.mubr.f32.mxu0 0.0
    %3457 = vmatmul.mubr.f32.gmra.mxu0 %v3344
    %v3458 = vpop.f32.mrf.mxu0
    %v3459 = vadd.f32 0.0, %v3458
    %v3460 = vpop.f32.mrf.mxu0
    %3461 = vmatprep.mubr.f32.mxu0 0.0
    %3462 = vmatmul.mubr.f32.gmra.mxu0 %v3345
    %v3463 = vpop.f32.mrf.mxu0
    %v3464 = vadd.f32 0.0, %v3463
    %v3465 = vpop.f32.mrf.mxu0
    %3466 = vmatprep.mubr.f32.mxu0 0.0
    %3467 = vmatmul.mubr.f32.gmra.mxu0 %v3346
    %v3468 = vpop.f32.mrf.mxu0
    %v3469 = vadd.f32 0.0, %v3468
    %v3470 = vpop.f32.mrf.mxu0
    %3471 = vmatprep.mubr.f32.mxu0 0.0
    %3472 = vmatmul.mubr.f32.gmra.mxu0 %v3347
    %v3473 = vpop.f32.mrf.mxu0
    %v3474 = vadd.f32 0.0, %v3473
    %v3475 = vpop.f32.mrf.mxu0
    %3476 = vmatprep.mubr.f32.mxu0 0.0
    %3477 = vmatmul.mubr.f32.gmra.mxu0 %v3348
    %v3478 = vpop.f32.mrf.mxu0
    %v3479 = vadd.f32 0.0, %v3478
    %v3480 = vpop.f32.mrf.mxu0
    %3481 = vmatprep.mubr.f32.mxu0 0.0
    %3482 = vmatmul.mubr.f32.gmra.mxu0 %v3349
    %v3483 = vpop.f32.mrf.mxu0
    %v3484 = vadd.f32 0.0, %v3483
    %v3485 = vpop.f32.mrf.mxu0
    %3486 = vmatprep.mubr.f32.mxu0 0.0
    %3487 = vmatmul.mubr.f32.gmra.mxu0 %v3350
    %v3488 = vpop.f32.mrf.mxu0
    %v3489 = vadd.f32 0.0, %v3488
    %v3490 = vpop.f32.mrf.mxu0
    %3491 = vmatprep.mubr.f32.mxu0 0.0
    %3492 = vmatmul.mubr.f32.gmra.mxu0 %v3351
    %v3493 = vpop.f32.mrf.mxu0
    %v3494 = vadd.f32 0.0, %v3493
    %v3495 = vpop.f32.mrf.mxu0
    %3496 = vmatprep.mubr.f32.mxu0 0.0
    %3497 = vmatmul.mubr.f32.gmra.mxu0 %v3352
    %v3498 = vpop.f32.mrf.mxu0
    %v3499 = vadd.f32 0.0, %v3498
    %v3500 = vpop.f32.mrf.mxu0
    %3501 = vmatprep.mubr.f32.mxu0 0.0
    %3502 = vmatmul.mubr.f32.gmra.mxu0 %v3353
    %v3503 = vpop.f32.mrf.mxu0
    %v3504 = vadd.f32 0.0, %v3503
    %v3505 = vpop.f32.mrf.mxu0
    %3506 = vmatprep.mubr.f32.mxu0 0.0
    %3507 = vmatmul.mubr.f32.gmra.mxu0 %v3354
    %v3508 = vpop.f32.mrf.mxu0
    %v3509 = vadd.f32 0.0, %v3508
    %v3510 = vpop.f32.mrf.mxu0
    %3511 = vmatprep.mubr.f32.mxu0 0.0
    %3512 = vmatmul.mubr.f32.gmra.mxu0 %v3355
    %v3513 = vpop.f32.mrf.mxu0
    %v3514 = vadd.f32 0.0, %v3513
    %v3515 = vpop.f32.mrf.mxu0
    %3516 = vmatprep.mubr.f32.mxu0 0.0
    %3517 = vmatmul.mubr.f32.gmra.mxu0 %v3356
    %v3518 = vpop.f32.mrf.mxu0
    %v3519 = vadd.f32 0.0, %v3518
    %v3520 = vpop.f32.mrf.mxu0
    %3521 = vmatprep.mubr.f32.mxu0 0.0
    %3522 = vmatmul.mubr.f32.gmra.mxu0 %v3357
    %v3523 = vpop.f32.mrf.mxu0
    %v3524 = vadd.f32 0.0, %v3523
    %v3525 = vpop.f32.mrf.mxu0
    %3526 = vmatprep.mubr.f32.mxu0 0.0
    %3527 = vmatmul.mubr.f32.gmra.mxu0 %v3358
    %v3528 = vpop.f32.mrf.mxu0
    %v3529 = vadd.f32 0.0, %v3528
    %v3530 = vpop.f32.mrf.mxu0
    %3531 = vmatprep.mubr.f32.mxu0 0.0
    %3532 = vmatmul.mubr.f32.gmra.mxu0 %v3359
    %v3533 = vpop.f32.mrf.mxu0
    %v3534 = vadd.f32 0.0, %v3533
    %v3535 = vpop.f32.mrf.mxu0
    %3536 = vmatprep.mubr.f32.mxu0 0.0
    %3537 = vmatmul.mubr.f32.gmra.mxu0 %v3360
    %v3538 = vpop.f32.mrf.mxu0
    %v3539 = vadd.f32 0.0, %v3538
    %v3540 = vpop.f32.mrf.mxu0
    %3541 = vmatprep.mubr.f32.mxu0 0.0
    %3542 = vmatmul.mubr.f32.gmra.mxu0 %v3361
    %v3543 = vpop.f32.mrf.mxu0
    %v3544 = vadd.f32 0.0, %v3543
    %v3545 = vpop.f32.mrf.mxu0
    %3546 = vmatprep.mubr.f32.mxu0 0.0
    %3547 = vmatmul.mubr.f32.gmra.mxu0 %v3362
    %v3548 = vpop.f32.mrf.mxu0
    %v3549 = vadd.f32 0.0, %v3548
    %v3550 = vpop.f32.mrf.mxu0
    %3551 = vmatprep.mubr.f32.mxu0 0.0
    %3552 = vmatmul.mubr.f32.gmra.mxu0 %v3363
    %v3553 = vpop.f32.mrf.mxu0
    %v3554 = vadd.f32 0.0, %v3553
    %v3555 = vpop.f32.mrf.mxu0
    %3556 = vmatprep.mubr.f32.mxu0 0.0
    %3557 = vmatmul.mubr.f32.gmra.mxu0 %v3364
    %v3558 = vpop.f32.mrf.mxu0
    %v3559 = vadd.f32 0.0, %v3558
    %v3560 = vpop.f32.mrf.mxu0
    %3561 = vdwg.mxu0
    %v3562 = vadd.f32 %v3319, %v3449
    %v3563 = vadd.f32 %v3320, %v3454
    %v3564 = vadd.f32 %v3321, %v3459
    %v3565 = vadd.f32 %v3322, %v3464
    %v3566 = vadd.f32 %v3323, %v3469
    %v3567 = vadd.f32 %v3324, %v3474
    %v3568 = vadd.f32 %v3325, %v3479
    %v3569 = vadd.f32 %v3326, %v3484
    %v3570 = vadd.f32 %v3327, %v3489
    %v3571 = vadd.f32 %v3328, %v3494
    %v3572 = vadd.f32 %v3329, %v3499
    %v3573 = vadd.f32 %v3330, %v3504
    %v3574 = vadd.f32 %v3331, %v3509
    %v3575 = vadd.f32 %v3332, %v3514
    %v3576 = vadd.f32 %v3333, %v3519
    %v3577 = vadd.f32 %v3334, %v3524
    %v3578 = vadd.f32 %v3335, %v3529
    %v3579 = vadd.f32 %v3336, %v3534
    %v3580 = vadd.f32 %v3337, %v3539
    %v3581 = vadd.f32 %v3338, %v3544
    %v3582 = vadd.f32 %v3339, %v3549
    %v3583 = vadd.f32 %v3340, %v3554
    %v3584 = vadd.f32 %v3341, %v3559
    %v3585 = vld [vmem:[#allocation2 + $0xb] sm:$0xff]
    %v3586 = vld [vmem:[#allocation2 + $0x13] sm:$0xff]
    %v3587 = vld [vmem:[#allocation2 + $0x1b] sm:$0xff]
    %v3588 = vld [vmem:[#allocation2 + $0x23] sm:$0xff]
    %v3589 = vld [vmem:[#allocation2 + $0x2b] sm:$0xff]
    %v3590 = vld [vmem:[#allocation2 + $0x33] sm:$0xff]
    %v3591 = vld [vmem:[#allocation2 + $0x3b] sm:$0xff]
    %v3592 = vld [vmem:[#allocation2 + $0x43] sm:$0xff]
    %v3593 = vld [vmem:[#allocation2 + $0x4b] sm:$0xff]
    %v3594 = vld [vmem:[#allocation2 + $0x53] sm:$0xff]
    %v3595 = vld [vmem:[#allocation2 + $0x5b] sm:$0xff]
    %v3596 = vld [vmem:[#allocation2 + $0x63] sm:$0xff]
    %v3597 = vld [vmem:[#allocation2 + $0x6b] sm:$0xff]
    %v3598 = vld [vmem:[#allocation2 + $0x73] sm:$0xff]
    %v3599 = vld [vmem:[#allocation2 + $0x7b] sm:$0xff]
    %v3600 = vld [vmem:[#allocation2 + $0x83] sm:$0xff]
    %v3601 = vld [vmem:[#allocation2 + $0x8b] sm:$0xff]
    %v3602 = vld [vmem:[#allocation2 + $0x93] sm:$0xff]
    %v3603 = vld [vmem:[#allocation2 + $0x9b] sm:$0xff]
    %v3604 = vld [vmem:[#allocation2 + $0xa3] sm:$0xff]
    %v3605 = vld [vmem:[#allocation2 + $0xab] sm:$0xff]
    %v3606 = vld [vmem:[#allocation2 + $0xb3] sm:$0xff]
    %v3607 = vld [vmem:[#allocation2 + $0xbb] sm:$0x3]
    %s3608 = scalar_lea.vmem [#allocation8], 512
    %v3609 = vld [vmem:[%s3608] sm:$0xff]
    %v3610 = vld [vmem:[%s3608 + $0x8] sm:$0xff]
    %v3611 = vld [vmem:[%s3608 + $0x10] sm:$0xff]
    %v3612 = vld [vmem:[%s3608 + $0x18] sm:$0xff]
    %v3613 = vld [vmem:[%s3608 + $0x20] sm:$0xff]
    %v3614 = vld [vmem:[%s3608 + $0x28] sm:$0xff]
    %v3615 = vld [vmem:[%s3608 + $0x30] sm:$0xff]
    %v3616 = vld [vmem:[%s3608 + $0x38] sm:$0xff]
    %v3617 = vld [vmem:[%s3608 + $0x40] sm:$0xff]
    %v3618 = vld [vmem:[%s3608 + $0x48] sm:$0xff]
    %v3619 = vld [vmem:[%s3608 + $0x50] sm:$0xff]
    %v3620 = vld [vmem:[%s3608 + $0x58] sm:$0xff]
    %v3621 = vld [vmem:[%s3608 + $0x60] sm:$0xff]
    %v3622 = vld [vmem:[%s3608 + $0x68] sm:$0xff]
    %v3623 = vld [vmem:[%s3608 + $0x70] sm:$0xff]
    %v3624 = vld [vmem:[%s3608 + $0x78] sm:$0xff]
    %3625 = vmatprep.subr.mxu0 0.0
    %3626 = vmatpush1.msra.mxu0 %v3624
    %3627 = vmatprep.subr.mxu0 0.0
    %3628 = vmatpush1.msra.mxu0 %v3623
    %3629 = vmatprep.subr.mxu0 0.0
    %3630 = vmatpush1.msra.mxu0 %v3622
    %3631 = vmatprep.subr.mxu0 0.0
    %3632 = vmatpush1.msra.mxu0 %v3621
    %3633 = vmatprep.subr.mxu0 0.0
    %3634 = vmatpush1.msra.mxu0 %v3620
    %3635 = vmatprep.subr.mxu0 0.0
    %3636 = vmatpush1.msra.mxu0 %v3619
    %3637 = vmatprep.subr.mxu0 0.0
    %3638 = vmatpush1.msra.mxu0 %v3618
    %3639 = vmatprep.subr.mxu0 0.0
    %3640 = vmatpush1.msra.mxu0 %v3617
    %3641 = vmatprep.subr.mxu0 0.0
    %3642 = vmatpush1.msra.mxu0 %v3616
    %3643 = vmatprep.subr.mxu0 0.0
    %3644 = vmatpush1.msra.mxu0 %v3615
    %3645 = vmatprep.subr.mxu0 0.0
    %3646 = vmatpush1.msra.mxu0 %v3614
    %3647 = vmatprep.subr.mxu0 0.0
    %3648 = vmatpush1.msra.mxu0 %v3613
    %3649 = vmatprep.subr.mxu0 0.0
    %3650 = vmatpush1.msra.mxu0 %v3612
    %3651 = vmatprep.subr.mxu0 0.0
    %3652 = vmatpush1.msra.mxu0 %v3611
    %3653 = vmatprep.subr.mxu0 0.0
    %3654 = vmatpush1.msra.mxu0 %v3610
    %3655 = vmatprep.subr.mxu0 0.0
    %3656 = vmatpush1.msra.mxu0 %v3609
    %3657 = vmatprep.subr.mxu0 0.0
    %3658 = vmatpush2.msra.mxu0 0.0
    %3659 = vmatprep.subr.mxu0 0.0
    %3660 = vmatpush2.msra.mxu0 0.0
    %3661 = vmatprep.subr.mxu0 0.0
    %3662 = vmatpush2.msra.mxu0 0.0
    %3663 = vmatprep.subr.mxu0 0.0
    %3664 = vmatpush2.msra.mxu0 0.0
    %3665 = vmatprep.subr.mxu0 0.0
    %3666 = vmatpush2.msra.mxu0 0.0
    %3667 = vmatprep.subr.mxu0 0.0
    %3668 = vmatpush2.msra.mxu0 0.0
    %3669 = vmatprep.subr.mxu0 0.0
    %3670 = vmatpush2.msra.mxu0 0.0
    %3671 = vmatprep.subr.mxu0 0.0
    %3672 = vmatpush2.msra.mxu0 0.0
    %3673 = vmatprep.subr.mxu0 0.0
    %3674 = vmatpush2.msra.mxu0 0.0
    %3675 = vmatprep.subr.mxu0 0.0
    %3676 = vmatpush2.msra.mxu0 0.0
    %3677 = vmatprep.subr.mxu0 0.0
    %3678 = vmatpush2.msra.mxu0 0.0
    %3679 = vmatprep.subr.mxu0 0.0
    %3680 = vmatpush2.msra.mxu0 0.0
    %3681 = vmatprep.subr.mxu0 0.0
    %3682 = vmatpush2.msra.mxu0 0.0
    %3683 = vmatprep.subr.mxu0 0.0
    %3684 = vmatpush2.msra.mxu0 0.0
    %3685 = vmatprep.subr.mxu0 0.0
    %3686 = vmatpush2.msra.mxu0 0.0
    %3687 = vmatprep.subr.mxu0 0.0
    %3688 = vmatpush2.msra.mxu0 0.0
    %3689 = vmatprep.mubr.f32.mxu0 0.0
    %3690 = vmatmul.mubr.f32.gmra.mxu0 %v3585
    %v3691 = vpop.f32.mrf.mxu0
    %v3692 = vadd.f32 0.0, %v3691
    %v3693 = vpop.f32.mrf.mxu0
    %3694 = vmatprep.mubr.f32.mxu0 0.0
    %3695 = vmatmul.mubr.f32.gmra.mxu0 %v3586
    %v3696 = vpop.f32.mrf.mxu0
    %v3697 = vadd.f32 0.0, %v3696
    %v3698 = vpop.f32.mrf.mxu0
    %3699 = vmatprep.mubr.f32.mxu0 0.0
    %3700 = vmatmul.mubr.f32.gmra.mxu0 %v3587
    %v3701 = vpop.f32.mrf.mxu0
    %v3702 = vadd.f32 0.0, %v3701
    %v3703 = vpop.f32.mrf.mxu0
    %3704 = vmatprep.mubr.f32.mxu0 0.0
    %3705 = vmatmul.mubr.f32.gmra.mxu0 %v3588
    %v3706 = vpop.f32.mrf.mxu0
    %v3707 = vadd.f32 0.0, %v3706
    %v3708 = vpop.f32.mrf.mxu0
    %3709 = vmatprep.mubr.f32.mxu0 0.0
    %3710 = vmatmul.mubr.f32.gmra.mxu0 %v3589
    %v3711 = vpop.f32.mrf.mxu0
    %v3712 = vadd.f32 0.0, %v3711
    %v3713 = vpop.f32.mrf.mxu0
    %3714 = vmatprep.mubr.f32.mxu0 0.0
    %3715 = vmatmul.mubr.f32.gmra.mxu0 %v3590
    %v3716 = vpop.f32.mrf.mxu0
    %v3717 = vadd.f32 0.0, %v3716
    %v3718 = vpop.f32.mrf.mxu0
    %3719 = vmatprep.mubr.f32.mxu0 0.0
    %3720 = vmatmul.mubr.f32.gmra.mxu0 %v3591
    %v3721 = vpop.f32.mrf.mxu0
    %v3722 = vadd.f32 0.0, %v3721
    %v3723 = vpop.f32.mrf.mxu0
    %3724 = vmatprep.mubr.f32.mxu0 0.0
    %3725 = vmatmul.mubr.f32.gmra.mxu0 %v3592
    %v3726 = vpop.f32.mrf.mxu0
    %v3727 = vadd.f32 0.0, %v3726
    %v3728 = vpop.f32.mrf.mxu0
    %3729 = vmatprep.mubr.f32.mxu0 0.0
    %3730 = vmatmul.mubr.f32.gmra.mxu0 %v3593
    %v3731 = vpop.f32.mrf.mxu0
    %v3732 = vadd.f32 0.0, %v3731
    %v3733 = vpop.f32.mrf.mxu0
    %3734 = vmatprep.mubr.f32.mxu0 0.0
    %3735 = vmatmul.mubr.f32.gmra.mxu0 %v3594
    %v3736 = vpop.f32.mrf.mxu0
    %v3737 = vadd.f32 0.0, %v3736
    %v3738 = vpop.f32.mrf.mxu0
    %3739 = vmatprep.mubr.f32.mxu0 0.0
    %3740 = vmatmul.mubr.f32.gmra.mxu0 %v3595
    %v3741 = vpop.f32.mrf.mxu0
    %v3742 = vadd.f32 0.0, %v3741
    %v3743 = vpop.f32.mrf.mxu0
    %3744 = vmatprep.mubr.f32.mxu0 0.0
    %3745 = vmatmul.mubr.f32.gmra.mxu0 %v3596
    %v3746 = vpop.f32.mrf.mxu0
    %v3747 = vadd.f32 0.0, %v3746
    %v3748 = vpop.f32.mrf.mxu0
    %3749 = vmatprep.mubr.f32.mxu0 0.0
    %3750 = vmatmul.mubr.f32.gmra.mxu0 %v3597
    %v3751 = vpop.f32.mrf.mxu0
    %v3752 = vadd.f32 0.0, %v3751
    %v3753 = vpop.f32.mrf.mxu0
    %3754 = vmatprep.mubr.f32.mxu0 0.0
    %3755 = vmatmul.mubr.f32.gmra.mxu0 %v3598
    %v3756 = vpop.f32.mrf.mxu0
    %v3757 = vadd.f32 0.0, %v3756
    %v3758 = vpop.f32.mrf.mxu0
    %3759 = vmatprep.mubr.f32.mxu0 0.0
    %3760 = vmatmul.mubr.f32.gmra.mxu0 %v3599
    %v3761 = vpop.f32.mrf.mxu0
    %v3762 = vadd.f32 0.0, %v3761
    %v3763 = vpop.f32.mrf.mxu0
    %3764 = vmatprep.mubr.f32.mxu0 0.0
    %3765 = vmatmul.mubr.f32.gmra.mxu0 %v3600
    %v3766 = vpop.f32.mrf.mxu0
    %v3767 = vadd.f32 0.0, %v3766
    %v3768 = vpop.f32.mrf.mxu0
    %3769 = vmatprep.mubr.f32.mxu0 0.0
    %3770 = vmatmul.mubr.f32.gmra.mxu0 %v3601
    %v3771 = vpop.f32.mrf.mxu0
    %v3772 = vadd.f32 0.0, %v3771
    %v3773 = vpop.f32.mrf.mxu0
    %3774 = vmatprep.mubr.f32.mxu0 0.0
    %3775 = vmatmul.mubr.f32.gmra.mxu0 %v3602
    %v3776 = vpop.f32.mrf.mxu0
    %v3777 = vadd.f32 0.0, %v3776
    %v3778 = vpop.f32.mrf.mxu0
    %3779 = vmatprep.mubr.f32.mxu0 0.0
    %3780 = vmatmul.mubr.f32.gmra.mxu0 %v3603
    %v3781 = vpop.f32.mrf.mxu0
    %v3782 = vadd.f32 0.0, %v3781
    %v3783 = vpop.f32.mrf.mxu0
    %3784 = vmatprep.mubr.f32.mxu0 0.0
    %3785 = vmatmul.mubr.f32.gmra.mxu0 %v3604
    %v3786 = vpop.f32.mrf.mxu0
    %v3787 = vadd.f32 0.0, %v3786
    %v3788 = vpop.f32.mrf.mxu0
    %3789 = vmatprep.mubr.f32.mxu0 0.0
    %3790 = vmatmul.mubr.f32.gmra.mxu0 %v3605
    %v3791 = vpop.f32.mrf.mxu0
    %v3792 = vadd.f32 0.0, %v3791
    %v3793 = vpop.f32.mrf.mxu0
    %3794 = vmatprep.mubr.f32.mxu0 0.0
    %3795 = vmatmul.mubr.f32.gmra.mxu0 %v3606
    %v3796 = vpop.f32.mrf.mxu0
    %v3797 = vadd.f32 0.0, %v3796
    %v3798 = vpop.f32.mrf.mxu0
    %3799 = vmatprep.mubr.f32.mxu0 0.0
    %3800 = vmatmul.mubr.f32.gmra.mxu0 %v3607
    %v3801 = vpop.f32.mrf.mxu0
    %v3802 = vadd.f32 0.0, %v3801
    %v3803 = vpop.f32.mrf.mxu0
    %3804 = vdwg.mxu0
    %v3805 = vadd.f32 %v3562, %v3692
    %v3806 = vadd.f32 %v3563, %v3697
    %v3807 = vadd.f32 %v3564, %v3702
    %v3808 = vadd.f32 %v3565, %v3707
    %v3809 = vadd.f32 %v3566, %v3712
    %v3810 = vadd.f32 %v3567, %v3717
    %v3811 = vadd.f32 %v3568, %v3722
    %v3812 = vadd.f32 %v3569, %v3727
    %v3813 = vadd.f32 %v3570, %v3732
    %v3814 = vadd.f32 %v3571, %v3737
    %v3815 = vadd.f32 %v3572, %v3742
    %v3816 = vadd.f32 %v3573, %v3747
    %v3817 = vadd.f32 %v3574, %v3752
    %v3818 = vadd.f32 %v3575, %v3757
    %v3819 = vadd.f32 %v3576, %v3762
    %v3820 = vadd.f32 %v3577, %v3767
    %v3821 = vadd.f32 %v3578, %v3772
    %v3822 = vadd.f32 %v3579, %v3777
    %v3823 = vadd.f32 %v3580, %v3782
    %v3824 = vadd.f32 %v3581, %v3787
    %v3825 = vadd.f32 %v3582, %v3792
    %v3826 = vadd.f32 %v3583, %v3797
    %v3827 = vadd.f32 %v3584, %v3802
    %v3828 = vld [vmem:[#allocation2 + $0xc] sm:$0xff]
    %v3829 = vld [vmem:[#allocation2 + $0x14] sm:$0xff]
    %v3830 = vld [vmem:[#allocation2 + $0x1c] sm:$0xff]
    %v3831 = vld [vmem:[#allocation2 + $0x24] sm:$0xff]
    %v3832 = vld [vmem:[#allocation2 + $0x2c] sm:$0xff]
    %v3833 = vld [vmem:[#allocation2 + $0x34] sm:$0xff]
    %v3834 = vld [vmem:[#allocation2 + $0x3c] sm:$0xff]
    %v3835 = vld [vmem:[#allocation2 + $0x44] sm:$0xff]
    %v3836 = vld [vmem:[#allocation2 + $0x4c] sm:$0xff]
    %v3837 = vld [vmem:[#allocation2 + $0x54] sm:$0xff]
    %v3838 = vld [vmem:[#allocation2 + $0x5c] sm:$0xff]
    %v3839 = vld [vmem:[#allocation2 + $0x64] sm:$0xff]
    %v3840 = vld [vmem:[#allocation2 + $0x6c] sm:$0xff]
    %v3841 = vld [vmem:[#allocation2 + $0x74] sm:$0xff]
    %v3842 = vld [vmem:[#allocation2 + $0x7c] sm:$0xff]
    %v3843 = vld [vmem:[#allocation2 + $0x84] sm:$0xff]
    %v3844 = vld [vmem:[#allocation2 + $0x8c] sm:$0xff]
    %v3845 = vld [vmem:[#allocation2 + $0x94] sm:$0xff]
    %v3846 = vld [vmem:[#allocation2 + $0x9c] sm:$0xff]
    %v3847 = vld [vmem:[#allocation2 + $0xa4] sm:$0xff]
    %v3848 = vld [vmem:[#allocation2 + $0xac] sm:$0xff]
    %v3849 = vld [vmem:[#allocation2 + $0xb4] sm:$0xff]
    %v3850 = vld [vmem:[#allocation2 + $0xbc] sm:$0x3]
    %s3851 = scalar_lea.vmem [#allocation8], 640
    %v3852 = vld [vmem:[%s3851] sm:$0xff]
    %v3853 = vld [vmem:[%s3851 + $0x8] sm:$0xff]
    %v3854 = vld [vmem:[%s3851 + $0x10] sm:$0xff]
    %v3855 = vld [vmem:[%s3851 + $0x18] sm:$0xff]
    %v3856 = vld [vmem:[%s3851 + $0x20] sm:$0xff]
    %v3857 = vld [vmem:[%s3851 + $0x28] sm:$0xff]
    %v3858 = vld [vmem:[%s3851 + $0x30] sm:$0xff]
    %v3859 = vld [vmem:[%s3851 + $0x38] sm:$0xff]
    %v3860 = vld [vmem:[%s3851 + $0x40] sm:$0xff]
    %v3861 = vld [vmem:[%s3851 + $0x48] sm:$0xff]
    %v3862 = vld [vmem:[%s3851 + $0x50] sm:$0xff]
    %v3863 = vld [vmem:[%s3851 + $0x58] sm:$0xff]
    %v3864 = vld [vmem:[%s3851 + $0x60] sm:$0xff]
    %v3865 = vld [vmem:[%s3851 + $0x68] sm:$0xff]
    %v3866 = vld [vmem:[%s3851 + $0x70] sm:$0xff]
    %v3867 = vld [vmem:[%s3851 + $0x78] sm:$0xff]
    %3868 = vmatprep.subr.mxu0 0.0
    %3869 = vmatpush1.msra.mxu0 %v3867
    %3870 = vmatprep.subr.mxu0 0.0
    %3871 = vmatpush1.msra.mxu0 %v3866
    %3872 = vmatprep.subr.mxu0 0.0
    %3873 = vmatpush1.msra.mxu0 %v3865
    %3874 = vmatprep.subr.mxu0 0.0
    %3875 = vmatpush1.msra.mxu0 %v3864
    %3876 = vmatprep.subr.mxu0 0.0
    %3877 = vmatpush1.msra.mxu0 %v3863
    %3878 = vmatprep.subr.mxu0 0.0
    %3879 = vmatpush1.msra.mxu0 %v3862
    %3880 = vmatprep.subr.mxu0 0.0
    %3881 = vmatpush1.msra.mxu0 %v3861
    %3882 = vmatprep.subr.mxu0 0.0
    %3883 = vmatpush1.msra.mxu0 %v3860
    %3884 = vmatprep.subr.mxu0 0.0
    %3885 = vmatpush1.msra.mxu0 %v3859
    %3886 = vmatprep.subr.mxu0 0.0
    %3887 = vmatpush1.msra.mxu0 %v3858
    %3888 = vmatprep.subr.mxu0 0.0
    %3889 = vmatpush1.msra.mxu0 %v3857
    %3890 = vmatprep.subr.mxu0 0.0
    %3891 = vmatpush1.msra.mxu0 %v3856
    %3892 = vmatprep.subr.mxu0 0.0
    %3893 = vmatpush1.msra.mxu0 %v3855
    %3894 = vmatprep.subr.mxu0 0.0
    %3895 = vmatpush1.msra.mxu0 %v3854
    %3896 = vmatprep.subr.mxu0 0.0
    %3897 = vmatpush1.msra.mxu0 %v3853
    %3898 = vmatprep.subr.mxu0 0.0
    %3899 = vmatpush1.msra.mxu0 %v3852
    %3900 = vmatprep.subr.mxu0 0.0
    %3901 = vmatpush2.msra.mxu0 0.0
    %3902 = vmatprep.subr.mxu0 0.0
    %3903 = vmatpush2.msra.mxu0 0.0
    %3904 = vmatprep.subr.mxu0 0.0
    %3905 = vmatpush2.msra.mxu0 0.0
    %3906 = vmatprep.subr.mxu0 0.0
    %3907 = vmatpush2.msra.mxu0 0.0
    %3908 = vmatprep.subr.mxu0 0.0
    %3909 = vmatpush2.msra.mxu0 0.0
    %3910 = vmatprep.subr.mxu0 0.0
    %3911 = vmatpush2.msra.mxu0 0.0
    %3912 = vmatprep.subr.mxu0 0.0
    %3913 = vmatpush2.msra.mxu0 0.0
    %3914 = vmatprep.subr.mxu0 0.0
    %3915 = vmatpush2.msra.mxu0 0.0
    %3916 = vmatprep.subr.mxu0 0.0
    %3917 = vmatpush2.msra.mxu0 0.0
    %3918 = vmatprep.subr.mxu0 0.0
    %3919 = vmatpush2.msra.mxu0 0.0
    %3920 = vmatprep.subr.mxu0 0.0
    %3921 = vmatpush2.msra.mxu0 0.0
    %3922 = vmatprep.subr.mxu0 0.0
    %3923 = vmatpush2.msra.mxu0 0.0
    %3924 = vmatprep.subr.mxu0 0.0
    %3925 = vmatpush2.msra.mxu0 0.0
    %3926 = vmatprep.subr.mxu0 0.0
    %3927 = vmatpush2.msra.mxu0 0.0
    %3928 = vmatprep.subr.mxu0 0.0
    %3929 = vmatpush2.msra.mxu0 0.0
    %3930 = vmatprep.subr.mxu0 0.0
    %3931 = vmatpush2.msra.mxu0 0.0
    %3932 = vmatprep.mubr.f32.mxu0 0.0
    %3933 = vmatmul.mubr.f32.gmra.mxu0 %v3828
    %v3934 = vpop.f32.mrf.mxu0
    %v3935 = vadd.f32 0.0, %v3934
    %v3936 = vpop.f32.mrf.mxu0
    %3937 = vmatprep.mubr.f32.mxu0 0.0
    %3938 = vmatmul.mubr.f32.gmra.mxu0 %v3829
    %v3939 = vpop.f32.mrf.mxu0
    %v3940 = vadd.f32 0.0, %v3939
    %v3941 = vpop.f32.mrf.mxu0
    %3942 = vmatprep.mubr.f32.mxu0 0.0
    %3943 = vmatmul.mubr.f32.gmra.mxu0 %v3830
    %v3944 = vpop.f32.mrf.mxu0
    %v3945 = vadd.f32 0.0, %v3944
    %v3946 = vpop.f32.mrf.mxu0
    %3947 = vmatprep.mubr.f32.mxu0 0.0
    %3948 = vmatmul.mubr.f32.gmra.mxu0 %v3831
    %v3949 = vpop.f32.mrf.mxu0
    %v3950 = vadd.f32 0.0, %v3949
    %v3951 = vpop.f32.mrf.mxu0
    %3952 = vmatprep.mubr.f32.mxu0 0.0
    %3953 = vmatmul.mubr.f32.gmra.mxu0 %v3832
    %v3954 = vpop.f32.mrf.mxu0
    %v3955 = vadd.f32 0.0, %v3954
    %v3956 = vpop.f32.mrf.mxu0
    %3957 = vmatprep.mubr.f32.mxu0 0.0
    %3958 = vmatmul.mubr.f32.gmra.mxu0 %v3833
    %v3959 = vpop.f32.mrf.mxu0
    %v3960 = vadd.f32 0.0, %v3959
    %v3961 = vpop.f32.mrf.mxu0
    %3962 = vmatprep.mubr.f32.mxu0 0.0
    %3963 = vmatmul.mubr.f32.gmra.mxu0 %v3834
    %v3964 = vpop.f32.mrf.mxu0
    %v3965 = vadd.f32 0.0, %v3964
    %v3966 = vpop.f32.mrf.mxu0
    %3967 = vmatprep.mubr.f32.mxu0 0.0
    %3968 = vmatmul.mubr.f32.gmra.mxu0 %v3835
    %v3969 = vpop.f32.mrf.mxu0
    %v3970 = vadd.f32 0.0, %v3969
    %v3971 = vpop.f32.mrf.mxu0
    %3972 = vmatprep.mubr.f32.mxu0 0.0
    %3973 = vmatmul.mubr.f32.gmra.mxu0 %v3836
    %v3974 = vpop.f32.mrf.mxu0
    %v3975 = vadd.f32 0.0, %v3974
    %v3976 = vpop.f32.mrf.mxu0
    %3977 = vmatprep.mubr.f32.mxu0 0.0
    %3978 = vmatmul.mubr.f32.gmra.mxu0 %v3837
    %v3979 = vpop.f32.mrf.mxu0
    %v3980 = vadd.f32 0.0, %v3979
    %v3981 = vpop.f32.mrf.mxu0
    %3982 = vmatprep.mubr.f32.mxu0 0.0
    %3983 = vmatmul.mubr.f32.gmra.mxu0 %v3838
    %v3984 = vpop.f32.mrf.mxu0
    %v3985 = vadd.f32 0.0, %v3984
    %v3986 = vpop.f32.mrf.mxu0
    %3987 = vmatprep.mubr.f32.mxu0 0.0
    %3988 = vmatmul.mubr.f32.gmra.mxu0 %v3839
    %v3989 = vpop.f32.mrf.mxu0
    %v3990 = vadd.f32 0.0, %v3989
    %v3991 = vpop.f32.mrf.mxu0
    %3992 = vmatprep.mubr.f32.mxu0 0.0
    %3993 = vmatmul.mubr.f32.gmra.mxu0 %v3840
    %v3994 = vpop.f32.mrf.mxu0
    %v3995 = vadd.f32 0.0, %v3994
    %v3996 = vpop.f32.mrf.mxu0
    %3997 = vmatprep.mubr.f32.mxu0 0.0
    %3998 = vmatmul.mubr.f32.gmra.mxu0 %v3841
    %v3999 = vpop.f32.mrf.mxu0
    %v4000 = vadd.f32 0.0, %v3999
    %v4001 = vpop.f32.mrf.mxu0
    %4002 = vmatprep.mubr.f32.mxu0 0.0
    %4003 = vmatmul.mubr.f32.gmra.mxu0 %v3842
    %v4004 = vpop.f32.mrf.mxu0
    %v4005 = vadd.f32 0.0, %v4004
    %v4006 = vpop.f32.mrf.mxu0
    %4007 = vmatprep.mubr.f32.mxu0 0.0
    %4008 = vmatmul.mubr.f32.gmra.mxu0 %v3843
    %v4009 = vpop.f32.mrf.mxu0
    %v4010 = vadd.f32 0.0, %v4009
    %v4011 = vpop.f32.mrf.mxu0
    %4012 = vmatprep.mubr.f32.mxu0 0.0
    %4013 = vmatmul.mubr.f32.gmra.mxu0 %v3844
    %v4014 = vpop.f32.mrf.mxu0
    %v4015 = vadd.f32 0.0, %v4014
    %v4016 = vpop.f32.mrf.mxu0
    %4017 = vmatprep.mubr.f32.mxu0 0.0
    %4018 = vmatmul.mubr.f32.gmra.mxu0 %v3845
    %v4019 = vpop.f32.mrf.mxu0
    %v4020 = vadd.f32 0.0, %v4019
    %v4021 = vpop.f32.mrf.mxu0
    %4022 = vmatprep.mubr.f32.mxu0 0.0
    %4023 = vmatmul.mubr.f32.gmra.mxu0 %v3846
    %v4024 = vpop.f32.mrf.mxu0
    %v4025 = vadd.f32 0.0, %v4024
    %v4026 = vpop.f32.mrf.mxu0
    %4027 = vmatprep.mubr.f32.mxu0 0.0
    %4028 = vmatmul.mubr.f32.gmra.mxu0 %v3847
    %v4029 = vpop.f32.mrf.mxu0
    %v4030 = vadd.f32 0.0, %v4029
    %v4031 = vpop.f32.mrf.mxu0
    %4032 = vmatprep.mubr.f32.mxu0 0.0
    %4033 = vmatmul.mubr.f32.gmra.mxu0 %v3848
    %v4034 = vpop.f32.mrf.mxu0
    %v4035 = vadd.f32 0.0, %v4034
    %v4036 = vpop.f32.mrf.mxu0
    %4037 = vmatprep.mubr.f32.mxu0 0.0
    %4038 = vmatmul.mubr.f32.gmra.mxu0 %v3849
    %v4039 = vpop.f32.mrf.mxu0
    %v4040 = vadd.f32 0.0, %v4039
    %v4041 = vpop.f32.mrf.mxu0
    %4042 = vmatprep.mubr.f32.mxu0 0.0
    %4043 = vmatmul.mubr.f32.gmra.mxu0 %v3850
    %v4044 = vpop.f32.mrf.mxu0
    %v4045 = vadd.f32 0.0, %v4044
    %v4046 = vpop.f32.mrf.mxu0
    %4047 = vdwg.mxu0
    %v4048 = vadd.f32 %v3805, %v3935
    %v4049 = vadd.f32 %v3806, %v3940
    %v4050 = vadd.f32 %v3807, %v3945
    %v4051 = vadd.f32 %v3808, %v3950
    %v4052 = vadd.f32 %v3809, %v3955
    %v4053 = vadd.f32 %v3810, %v3960
    %v4054 = vadd.f32 %v3811, %v3965
    %v4055 = vadd.f32 %v3812, %v3970
    %v4056 = vadd.f32 %v3813, %v3975
    %v4057 = vadd.f32 %v3814, %v3980
    %v4058 = vadd.f32 %v3815, %v3985
    %v4059 = vadd.f32 %v3816, %v3990
    %v4060 = vadd.f32 %v3817, %v3995
    %v4061 = vadd.f32 %v3818, %v4000
    %v4062 = vadd.f32 %v3819, %v4005
    %v4063 = vadd.f32 %v3820, %v4010
    %v4064 = vadd.f32 %v3821, %v4015
    %v4065 = vadd.f32 %v3822, %v4020
    %v4066 = vadd.f32 %v3823, %v4025
    %v4067 = vadd.f32 %v3824, %v4030
    %v4068 = vadd.f32 %v3825, %v4035
    %v4069 = vadd.f32 %v3826, %v4040
    %v4070 = vadd.f32 %v3827, %v4045
    %v4071 = vld [vmem:[#allocation2 + $0x14] sm:$0xff]
    %v4072 = vld [vmem:[#allocation2 + $0x1c] sm:$0xff]
    %v4073 = vld [vmem:[#allocation2 + $0x24] sm:$0xff]
    %v4074 = vld [vmem:[#allocation2 + $0x2c] sm:$0xff]
    %v4075 = vld [vmem:[#allocation2 + $0x34] sm:$0xff]
    %v4076 = vld [vmem:[#allocation2 + $0x3c] sm:$0xff]
    %v4077 = vld [vmem:[#allocation2 + $0x44] sm:$0xff]
    %v4078 = vld [vmem:[#allocation2 + $0x4c] sm:$0xff]
    %v4079 = vld [vmem:[#allocation2 + $0x54] sm:$0xff]
    %v4080 = vld [vmem:[#allocation2 + $0x5c] sm:$0xff]
    %v4081 = vld [vmem:[#allocation2 + $0x64] sm:$0xff]
    %v4082 = vld [vmem:[#allocation2 + $0x6c] sm:$0xff]
    %v4083 = vld [vmem:[#allocation2 + $0x74] sm:$0xff]
    %v4084 = vld [vmem:[#allocation2 + $0x7c] sm:$0xff]
    %v4085 = vld [vmem:[#allocation2 + $0x84] sm:$0xff]
    %v4086 = vld [vmem:[#allocation2 + $0x8c] sm:$0xff]
    %v4087 = vld [vmem:[#allocation2 + $0x94] sm:$0xff]
    %v4088 = vld [vmem:[#allocation2 + $0x9c] sm:$0xff]
    %v4089 = vld [vmem:[#allocation2 + $0xa4] sm:$0xff]
    %v4090 = vld [vmem:[#allocation2 + $0xac] sm:$0xff]
    %v4091 = vld [vmem:[#allocation2 + $0xb4] sm:$0xff]
    %v4092 = vld [vmem:[#allocation2 + $0xbc] sm:$0xff]
    %v4093 = vld [vmem:[#allocation2 + $0xc4] sm:$0x3]
    %s4094 = scalar_lea.vmem [#allocation8], 768
    %v4095 = vld [vmem:[%s4094] sm:$0xff]
    %v4096 = vld [vmem:[%s4094 + $0x8] sm:$0xff]
    %v4097 = vld [vmem:[%s4094 + $0x10] sm:$0xff]
    %v4098 = vld [vmem:[%s4094 + $0x18] sm:$0xff]
    %v4099 = vld [vmem:[%s4094 + $0x20] sm:$0xff]
    %v4100 = vld [vmem:[%s4094 + $0x28] sm:$0xff]
    %v4101 = vld [vmem:[%s4094 + $0x30] sm:$0xff]
    %v4102 = vld [vmem:[%s4094 + $0x38] sm:$0xff]
    %v4103 = vld [vmem:[%s4094 + $0x40] sm:$0xff]
    %v4104 = vld [vmem:[%s4094 + $0x48] sm:$0xff]
    %v4105 = vld [vmem:[%s4094 + $0x50] sm:$0xff]
    %v4106 = vld [vmem:[%s4094 + $0x58] sm:$0xff]
    %v4107 = vld [vmem:[%s4094 + $0x60] sm:$0xff]
    %v4108 = vld [vmem:[%s4094 + $0x68] sm:$0xff]
    %v4109 = vld [vmem:[%s4094 + $0x70] sm:$0xff]
    %v4110 = vld [vmem:[%s4094 + $0x78] sm:$0xff]
    %4111 = vmatprep.subr.mxu0 0.0
    %4112 = vmatpush1.msra.mxu0 %v4110
    %4113 = vmatprep.subr.mxu0 0.0
    %4114 = vmatpush1.msra.mxu0 %v4109
    %4115 = vmatprep.subr.mxu0 0.0
    %4116 = vmatpush1.msra.mxu0 %v4108
    %4117 = vmatprep.subr.mxu0 0.0
    %4118 = vmatpush1.msra.mxu0 %v4107
    %4119 = vmatprep.subr.mxu0 0.0
    %4120 = vmatpush1.msra.mxu0 %v4106
    %4121 = vmatprep.subr.mxu0 0.0
    %4122 = vmatpush1.msra.mxu0 %v4105
    %4123 = vmatprep.subr.mxu0 0.0
    %4124 = vmatpush1.msra.mxu0 %v4104
    %4125 = vmatprep.subr.mxu0 0.0
    %4126 = vmatpush1.msra.mxu0 %v4103
    %4127 = vmatprep.subr.mxu0 0.0
    %4128 = vmatpush1.msra.mxu0 %v4102
    %4129 = vmatprep.subr.mxu0 0.0
    %4130 = vmatpush1.msra.mxu0 %v4101
    %4131 = vmatprep.subr.mxu0 0.0
    %4132 = vmatpush1.msra.mxu0 %v4100
    %4133 = vmatprep.subr.mxu0 0.0
    %4134 = vmatpush1.msra.mxu0 %v4099
    %4135 = vmatprep.subr.mxu0 0.0
    %4136 = vmatpush1.msra.mxu0 %v4098
    %4137 = vmatprep.subr.mxu0 0.0
    %4138 = vmatpush1.msra.mxu0 %v4097
    %4139 = vmatprep.subr.mxu0 0.0
    %4140 = vmatpush1.msra.mxu0 %v4096
    %4141 = vmatprep.subr.mxu0 0.0
    %4142 = vmatpush1.msra.mxu0 %v4095
    %4143 = vmatprep.subr.mxu0 0.0
    %4144 = vmatpush2.msra.mxu0 0.0
    %4145 = vmatprep.subr.mxu0 0.0
    %4146 = vmatpush2.msra.mxu0 0.0
    %4147 = vmatprep.subr.mxu0 0.0
    %4148 = vmatpush2.msra.mxu0 0.0
    %4149 = vmatprep.subr.mxu0 0.0
    %4150 = vmatpush2.msra.mxu0 0.0
    %4151 = vmatprep.subr.mxu0 0.0
    %4152 = vmatpush2.msra.mxu0 0.0
    %4153 = vmatprep.subr.mxu0 0.0
    %4154 = vmatpush2.msra.mxu0 0.0
    %4155 = vmatprep.subr.mxu0 0.0
    %4156 = vmatpush2.msra.mxu0 0.0
    %4157 = vmatprep.subr.mxu0 0.0
    %4158 = vmatpush2.msra.mxu0 0.0
    %4159 = vmatprep.subr.mxu0 0.0
    %4160 = vmatpush2.msra.mxu0 0.0
    %4161 = vmatprep.subr.mxu0 0.0
    %4162 = vmatpush2.msra.mxu0 0.0
    %4163 = vmatprep.subr.mxu0 0.0
    %4164 = vmatpush2.msra.mxu0 0.0
    %4165 = vmatprep.subr.mxu0 0.0
    %4166 = vmatpush2.msra.mxu0 0.0
    %4167 = vmatprep.subr.mxu0 0.0
    %4168 = vmatpush2.msra.mxu0 0.0
    %4169 = vmatprep.subr.mxu0 0.0
    %4170 = vmatpush2.msra.mxu0 0.0
    %4171 = vmatprep.subr.mxu0 0.0
    %4172 = vmatpush2.msra.mxu0 0.0
    %4173 = vmatprep.subr.mxu0 0.0
    %4174 = vmatpush2.msra.mxu0 0.0
    %4175 = vmatprep.mubr.f32.mxu0 0.0
    %4176 = vmatmul.mubr.f32.gmra.mxu0 %v4071
    %v4177 = vpop.f32.mrf.mxu0
    %v4178 = vadd.f32 0.0, %v4177
    %v4179 = vpop.f32.mrf.mxu0
    %4180 = vmatprep.mubr.f32.mxu0 0.0
    %4181 = vmatmul.mubr.f32.gmra.mxu0 %v4072
    %v4182 = vpop.f32.mrf.mxu0
    %v4183 = vadd.f32 0.0, %v4182
    %v4184 = vpop.f32.mrf.mxu0
    %4185 = vmatprep.mubr.f32.mxu0 0.0
    %4186 = vmatmul.mubr.f32.gmra.mxu0 %v4073
    %v4187 = vpop.f32.mrf.mxu0
    %v4188 = vadd.f32 0.0, %v4187
    %v4189 = vpop.f32.mrf.mxu0
    %4190 = vmatprep.mubr.f32.mxu0 0.0
    %4191 = vmatmul.mubr.f32.gmra.mxu0 %v4074
    %v4192 = vpop.f32.mrf.mxu0
    %v4193 = vadd.f32 0.0, %v4192
    %v4194 = vpop.f32.mrf.mxu0
    %4195 = vmatprep.mubr.f32.mxu0 0.0
    %4196 = vmatmul.mubr.f32.gmra.mxu0 %v4075
    %v4197 = vpop.f32.mrf.mxu0
    %v4198 = vadd.f32 0.0, %v4197
    %v4199 = vpop.f32.mrf.mxu0
    %4200 = vmatprep.mubr.f32.mxu0 0.0
    %4201 = vmatmul.mubr.f32.gmra.mxu0 %v4076
    %v4202 = vpop.f32.mrf.mxu0
    %v4203 = vadd.f32 0.0, %v4202
    %v4204 = vpop.f32.mrf.mxu0
    %4205 = vmatprep.mubr.f32.mxu0 0.0
    %4206 = vmatmul.mubr.f32.gmra.mxu0 %v4077
    %v4207 = vpop.f32.mrf.mxu0
    %v4208 = vadd.f32 0.0, %v4207
    %v4209 = vpop.f32.mrf.mxu0
    %4210 = vmatprep.mubr.f32.mxu0 0.0
    %4211 = vmatmul.mubr.f32.gmra.mxu0 %v4078
    %v4212 = vpop.f32.mrf.mxu0
    %v4213 = vadd.f32 0.0, %v4212
    %v4214 = vpop.f32.mrf.mxu0
    %4215 = vmatprep.mubr.f32.mxu0 0.0
    %4216 = vmatmul.mubr.f32.gmra.mxu0 %v4079
    %v4217 = vpop.f32.mrf.mxu0
    %v4218 = vadd.f32 0.0, %v4217
    %v4219 = vpop.f32.mrf.mxu0
    %4220 = vmatprep.mubr.f32.mxu0 0.0
    %4221 = vmatmul.mubr.f32.gmra.mxu0 %v4080
    %v4222 = vpop.f32.mrf.mxu0
    %v4223 = vadd.f32 0.0, %v4222
    %v4224 = vpop.f32.mrf.mxu0
    %4225 = vmatprep.mubr.f32.mxu0 0.0
    %4226 = vmatmul.mubr.f32.gmra.mxu0 %v4081
    %v4227 = vpop.f32.mrf.mxu0
    %v4228 = vadd.f32 0.0, %v4227
    %v4229 = vpop.f32.mrf.mxu0
    %4230 = vmatprep.mubr.f32.mxu0 0.0
    %4231 = vmatmul.mubr.f32.gmra.mxu0 %v4082
    %v4232 = vpop.f32.mrf.mxu0
    %v4233 = vadd.f32 0.0, %v4232
    %v4234 = vpop.f32.mrf.mxu0
    %4235 = vmatprep.mubr.f32.mxu0 0.0
    %4236 = vmatmul.mubr.f32.gmra.mxu0 %v4083
    %v4237 = vpop.f32.mrf.mxu0
    %v4238 = vadd.f32 0.0, %v4237
    %v4239 = vpop.f32.mrf.mxu0
    %4240 = vmatprep.mubr.f32.mxu0 0.0
    %4241 = vmatmul.mubr.f32.gmra.mxu0 %v4084
    %v4242 = vpop.f32.mrf.mxu0
    %v4243 = vadd.f32 0.0, %v4242
    %v4244 = vpop.f32.mrf.mxu0
    %4245 = vmatprep.mubr.f32.mxu0 0.0
    %4246 = vmatmul.mubr.f32.gmra.mxu0 %v4085
    %v4247 = vpop.f32.mrf.mxu0
    %v4248 = vadd.f32 0.0, %v4247
    %v4249 = vpop.f32.mrf.mxu0
    %4250 = vmatprep.mubr.f32.mxu0 0.0
    %4251 = vmatmul.mubr.f32.gmra.mxu0 %v4086
    %v4252 = vpop.f32.mrf.mxu0
    %v4253 = vadd.f32 0.0, %v4252
    %v4254 = vpop.f32.mrf.mxu0
    %4255 = vmatprep.mubr.f32.mxu0 0.0
    %4256 = vmatmul.mubr.f32.gmra.mxu0 %v4087
    %v4257 = vpop.f32.mrf.mxu0
    %v4258 = vadd.f32 0.0, %v4257
    %v4259 = vpop.f32.mrf.mxu0
    %4260 = vmatprep.mubr.f32.mxu0 0.0
    %4261 = vmatmul.mubr.f32.gmra.mxu0 %v4088
    %v4262 = vpop.f32.mrf.mxu0
    %v4263 = vadd.f32 0.0, %v4262
    %v4264 = vpop.f32.mrf.mxu0
    %4265 = vmatprep.mubr.f32.mxu0 0.0
    %4266 = vmatmul.mubr.f32.gmra.mxu0 %v4089
    %v4267 = vpop.f32.mrf.mxu0
    %v4268 = vadd.f32 0.0, %v4267
    %v4269 = vpop.f32.mrf.mxu0
    %4270 = vmatprep.mubr.f32.mxu0 0.0
    %4271 = vmatmul.mubr.f32.gmra.mxu0 %v4090
    %v4272 = vpop.f32.mrf.mxu0
    %v4273 = vadd.f32 0.0, %v4272
    %v4274 = vpop.f32.mrf.mxu0
    %4275 = vmatprep.mubr.f32.mxu0 0.0
    %4276 = vmatmul.mubr.f32.gmra.mxu0 %v4091
    %v4277 = vpop.f32.mrf.mxu0
    %v4278 = vadd.f32 0.0, %v4277
    %v4279 = vpop.f32.mrf.mxu0
    %4280 = vmatprep.mubr.f32.mxu0 0.0
    %4281 = vmatmul.mubr.f32.gmra.mxu0 %v4092
    %v4282 = vpop.f32.mrf.mxu0
    %v4283 = vadd.f32 0.0, %v4282
    %v4284 = vpop.f32.mrf.mxu0
    %4285 = vmatprep.mubr.f32.mxu0 0.0
    %4286 = vmatmul.mubr.f32.gmra.mxu0 %v4093
    %v4287 = vpop.f32.mrf.mxu0
    %v4288 = vadd.f32 0.0, %v4287
    %v4289 = vpop.f32.mrf.mxu0
    %4290 = vdwg.mxu0
    %v4291 = vadd.f32 %v4048, %v4178
    %v4292 = vadd.f32 %v4049, %v4183
    %v4293 = vadd.f32 %v4050, %v4188
    %v4294 = vadd.f32 %v4051, %v4193
    %v4295 = vadd.f32 %v4052, %v4198
    %v4296 = vadd.f32 %v4053, %v4203
    %v4297 = vadd.f32 %v4054, %v4208
    %v4298 = vadd.f32 %v4055, %v4213
    %v4299 = vadd.f32 %v4056, %v4218
    %v4300 = vadd.f32 %v4057, %v4223
    %v4301 = vadd.f32 %v4058, %v4228
    %v4302 = vadd.f32 %v4059, %v4233
    %v4303 = vadd.f32 %v4060, %v4238
    %v4304 = vadd.f32 %v4061, %v4243
    %v4305 = vadd.f32 %v4062, %v4248
    %v4306 = vadd.f32 %v4063, %v4253
    %v4307 = vadd.f32 %v4064, %v4258
    %v4308 = vadd.f32 %v4065, %v4263
    %v4309 = vadd.f32 %v4066, %v4268
    %v4310 = vadd.f32 %v4067, %v4273
    %v4311 = vadd.f32 %v4068, %v4278
    %v4312 = vadd.f32 %v4069, %v4283
    %v4313 = vadd.f32 %v4070, %v4288
    %v4314 = vld [vmem:[#allocation2 + $0x15] sm:$0xff]
    %v4315 = vld [vmem:[#allocation2 + $0x1d] sm:$0xff]
    %v4316 = vld [vmem:[#allocation2 + $0x25] sm:$0xff]
    %v4317 = vld [vmem:[#allocation2 + $0x2d] sm:$0xff]
    %v4318 = vld [vmem:[#allocation2 + $0x35] sm:$0xff]
    %v4319 = vld [vmem:[#allocation2 + $0x3d] sm:$0xff]
    %v4320 = vld [vmem:[#allocation2 + $0x45] sm:$0xff]
    %v4321 = vld [vmem:[#allocation2 + $0x4d] sm:$0xff]
    %v4322 = vld [vmem:[#allocation2 + $0x55] sm:$0xff]
    %v4323 = vld [vmem:[#allocation2 + $0x5d] sm:$0xff]
    %v4324 = vld [vmem:[#allocation2 + $0x65] sm:$0xff]
    %v4325 = vld [vmem:[#allocation2 + $0x6d] sm:$0xff]
    %v4326 = vld [vmem:[#allocation2 + $0x75] sm:$0xff]
    %v4327 = vld [vmem:[#allocation2 + $0x7d] sm:$0xff]
    %v4328 = vld [vmem:[#allocation2 + $0x85] sm:$0xff]
    %v4329 = vld [vmem:[#allocation2 + $0x8d] sm:$0xff]
    %v4330 = vld [vmem:[#allocation2 + $0x95] sm:$0xff]
    %v4331 = vld [vmem:[#allocation2 + $0x9d] sm:$0xff]
    %v4332 = vld [vmem:[#allocation2 + $0xa5] sm:$0xff]
    %v4333 = vld [vmem:[#allocation2 + $0xad] sm:$0xff]
    %v4334 = vld [vmem:[#allocation2 + $0xb5] sm:$0xff]
    %v4335 = vld [vmem:[#allocation2 + $0xbd] sm:$0xff]
    %v4336 = vld [vmem:[#allocation2 + $0xc5] sm:$0x3]
    %s4337 = scalar_lea.vmem [#allocation8], 896
    %v4338 = vld [vmem:[%s4337] sm:$0xff]
    %v4339 = vld [vmem:[%s4337 + $0x8] sm:$0xff]
    %v4340 = vld [vmem:[%s4337 + $0x10] sm:$0xff]
    %v4341 = vld [vmem:[%s4337 + $0x18] sm:$0xff]
    %v4342 = vld [vmem:[%s4337 + $0x20] sm:$0xff]
    %v4343 = vld [vmem:[%s4337 + $0x28] sm:$0xff]
    %v4344 = vld [vmem:[%s4337 + $0x30] sm:$0xff]
    %v4345 = vld [vmem:[%s4337 + $0x38] sm:$0xff]
    %v4346 = vld [vmem:[%s4337 + $0x40] sm:$0xff]
    %v4347 = vld [vmem:[%s4337 + $0x48] sm:$0xff]
    %v4348 = vld [vmem:[%s4337 + $0x50] sm:$0xff]
    %v4349 = vld [vmem:[%s4337 + $0x58] sm:$0xff]
    %v4350 = vld [vmem:[%s4337 + $0x60] sm:$0xff]
    %v4351 = vld [vmem:[%s4337 + $0x68] sm:$0xff]
    %v4352 = vld [vmem:[%s4337 + $0x70] sm:$0xff]
    %v4353 = vld [vmem:[%s4337 + $0x78] sm:$0xff]
    %4354 = vmatprep.subr.mxu0 0.0
    %4355 = vmatpush1.msra.mxu0 %v4353
    %4356 = vmatprep.subr.mxu0 0.0
    %4357 = vmatpush1.msra.mxu0 %v4352
    %4358 = vmatprep.subr.mxu0 0.0
    %4359 = vmatpush1.msra.mxu0 %v4351
    %4360 = vmatprep.subr.mxu0 0.0
    %4361 = vmatpush1.msra.mxu0 %v4350
    %4362 = vmatprep.subr.mxu0 0.0
    %4363 = vmatpush1.msra.mxu0 %v4349
    %4364 = vmatprep.subr.mxu0 0.0
    %4365 = vmatpush1.msra.mxu0 %v4348
    %4366 = vmatprep.subr.mxu0 0.0
    %4367 = vmatpush1.msra.mxu0 %v4347
    %4368 = vmatprep.subr.mxu0 0.0
    %4369 = vmatpush1.msra.mxu0 %v4346
    %4370 = vmatprep.subr.mxu0 0.0
    %4371 = vmatpush1.msra.mxu0 %v4345
    %4372 = vmatprep.subr.mxu0 0.0
    %4373 = vmatpush1.msra.mxu0 %v4344
    %4374 = vmatprep.subr.mxu0 0.0
    %4375 = vmatpush1.msra.mxu0 %v4343
    %4376 = vmatprep.subr.mxu0 0.0
    %4377 = vmatpush1.msra.mxu0 %v4342
    %4378 = vmatprep.subr.mxu0 0.0
    %4379 = vmatpush1.msra.mxu0 %v4341
    %4380 = vmatprep.subr.mxu0 0.0
    %4381 = vmatpush1.msra.mxu0 %v4340
    %4382 = vmatprep.subr.mxu0 0.0
    %4383 = vmatpush1.msra.mxu0 %v4339
    %4384 = vmatprep.subr.mxu0 0.0
    %4385 = vmatpush1.msra.mxu0 %v4338
    %4386 = vmatprep.subr.mxu0 0.0
    %4387 = vmatpush2.msra.mxu0 0.0
    %4388 = vmatprep.subr.mxu0 0.0
    %4389 = vmatpush2.msra.mxu0 0.0
    %4390 = vmatprep.subr.mxu0 0.0
    %4391 = vmatpush2.msra.mxu0 0.0
    %4392 = vmatprep.subr.mxu0 0.0
    %4393 = vmatpush2.msra.mxu0 0.0
    %4394 = vmatprep.subr.mxu0 0.0
    %4395 = vmatpush2.msra.mxu0 0.0
    %4396 = vmatprep.subr.mxu0 0.0
    %4397 = vmatpush2.msra.mxu0 0.0
    %4398 = vmatprep.subr.mxu0 0.0
    %4399 = vmatpush2.msra.mxu0 0.0
    %4400 = vmatprep.subr.mxu0 0.0
    %4401 = vmatpush2.msra.mxu0 0.0
    %4402 = vmatprep.subr.mxu0 0.0
    %4403 = vmatpush2.msra.mxu0 0.0
    %4404 = vmatprep.subr.mxu0 0.0
    %4405 = vmatpush2.msra.mxu0 0.0
    %4406 = vmatprep.subr.mxu0 0.0
    %4407 = vmatpush2.msra.mxu0 0.0
    %4408 = vmatprep.subr.mxu0 0.0
    %4409 = vmatpush2.msra.mxu0 0.0
    %4410 = vmatprep.subr.mxu0 0.0
    %4411 = vmatpush2.msra.mxu0 0.0
    %4412 = vmatprep.subr.mxu0 0.0
    %4413 = vmatpush2.msra.mxu0 0.0
    %4414 = vmatprep.subr.mxu0 0.0
    %4415 = vmatpush2.msra.mxu0 0.0
    %4416 = vmatprep.subr.mxu0 0.0
    %4417 = vmatpush2.msra.mxu0 0.0
    %4418 = vmatprep.mubr.f32.mxu0 0.0
    %4419 = vmatmul.mubr.f32.gmra.mxu0 %v4314
    %v4420 = vpop.f32.mrf.mxu0
    %v4421 = vadd.f32 0.0, %v4420
    %v4422 = vpop.f32.mrf.mxu0
    %4423 = vmatprep.mubr.f32.mxu0 0.0
    %4424 = vmatmul.mubr.f32.gmra.mxu0 %v4315
    %v4425 = vpop.f32.mrf.mxu0
    %v4426 = vadd.f32 0.0, %v4425
    %v4427 = vpop.f32.mrf.mxu0
    %4428 = vmatprep.mubr.f32.mxu0 0.0
    %4429 = vmatmul.mubr.f32.gmra.mxu0 %v4316
    %v4430 = vpop.f32.mrf.mxu0
    %v4431 = vadd.f32 0.0, %v4430
    %v4432 = vpop.f32.mrf.mxu0
    %4433 = vmatprep.mubr.f32.mxu0 0.0
    %4434 = vmatmul.mubr.f32.gmra.mxu0 %v4317
    %v4435 = vpop.f32.mrf.mxu0
    %v4436 = vadd.f32 0.0, %v4435
    %v4437 = vpop.f32.mrf.mxu0
    %4438 = vmatprep.mubr.f32.mxu0 0.0
    %4439 = vmatmul.mubr.f32.gmra.mxu0 %v4318
    %v4440 = vpop.f32.mrf.mxu0
    %v4441 = vadd.f32 0.0, %v4440
    %v4442 = vpop.f32.mrf.mxu0
    %4443 = vmatprep.mubr.f32.mxu0 0.0
    %4444 = vmatmul.mubr.f32.gmra.mxu0 %v4319
    %v4445 = vpop.f32.mrf.mxu0
    %v4446 = vadd.f32 0.0, %v4445
    %v4447 = vpop.f32.mrf.mxu0
    %4448 = vmatprep.mubr.f32.mxu0 0.0
    %4449 = vmatmul.mubr.f32.gmra.mxu0 %v4320
    %v4450 = vpop.f32.mrf.mxu0
    %v4451 = vadd.f32 0.0, %v4450
    %v4452 = vpop.f32.mrf.mxu0
    %4453 = vmatprep.mubr.f32.mxu0 0.0
    %4454 = vmatmul.mubr.f32.gmra.mxu0 %v4321
    %v4455 = vpop.f32.mrf.mxu0
    %v4456 = vadd.f32 0.0, %v4455
    %v4457 = vpop.f32.mrf.mxu0
    %4458 = vmatprep.mubr.f32.mxu0 0.0
    %4459 = vmatmul.mubr.f32.gmra.mxu0 %v4322
    %v4460 = vpop.f32.mrf.mxu0
    %v4461 = vadd.f32 0.0, %v4460
    %v4462 = vpop.f32.mrf.mxu0
    %4463 = vmatprep.mubr.f32.mxu0 0.0
    %4464 = vmatmul.mubr.f32.gmra.mxu0 %v4323
    %v4465 = vpop.f32.mrf.mxu0
    %v4466 = vadd.f32 0.0, %v4465
    %v4467 = vpop.f32.mrf.mxu0
    %4468 = vmatprep.mubr.f32.mxu0 0.0
    %4469 = vmatmul.mubr.f32.gmra.mxu0 %v4324
    %v4470 = vpop.f32.mrf.mxu0
    %v4471 = vadd.f32 0.0, %v4470
    %v4472 = vpop.f32.mrf.mxu0
    %4473 = vmatprep.mubr.f32.mxu0 0.0
    %4474 = vmatmul.mubr.f32.gmra.mxu0 %v4325
    %v4475 = vpop.f32.mrf.mxu0
    %v4476 = vadd.f32 0.0, %v4475
    %v4477 = vpop.f32.mrf.mxu0
    %4478 = vmatprep.mubr.f32.mxu0 0.0
    %4479 = vmatmul.mubr.f32.gmra.mxu0 %v4326
    %v4480 = vpop.f32.mrf.mxu0
    %v4481 = vadd.f32 0.0, %v4480
    %v4482 = vpop.f32.mrf.mxu0
    %4483 = vmatprep.mubr.f32.mxu0 0.0
    %4484 = vmatmul.mubr.f32.gmra.mxu0 %v4327
    %v4485 = vpop.f32.mrf.mxu0
    %v4486 = vadd.f32 0.0, %v4485
    %v4487 = vpop.f32.mrf.mxu0
    %4488 = vmatprep.mubr.f32.mxu0 0.0
    %4489 = vmatmul.mubr.f32.gmra.mxu0 %v4328
    %v4490 = vpop.f32.mrf.mxu0
    %v4491 = vadd.f32 0.0, %v4490
    %v4492 = vpop.f32.mrf.mxu0
    %4493 = vmatprep.mubr.f32.mxu0 0.0
    %4494 = vmatmul.mubr.f32.gmra.mxu0 %v4329
    %v4495 = vpop.f32.mrf.mxu0
    %v4496 = vadd.f32 0.0, %v4495
    %v4497 = vpop.f32.mrf.mxu0
    %4498 = vmatprep.mubr.f32.mxu0 0.0
    %4499 = vmatmul.mubr.f32.gmra.mxu0 %v4330
    %v4500 = vpop.f32.mrf.mxu0
    %v4501 = vadd.f32 0.0, %v4500
    %v4502 = vpop.f32.mrf.mxu0
    %4503 = vmatprep.mubr.f32.mxu0 0.0
    %4504 = vmatmul.mubr.f32.gmra.mxu0 %v4331
    %v4505 = vpop.f32.mrf.mxu0
    %v4506 = vadd.f32 0.0, %v4505
    %v4507 = vpop.f32.mrf.mxu0
    %4508 = vmatprep.mubr.f32.mxu0 0.0
    %4509 = vmatmul.mubr.f32.gmra.mxu0 %v4332
    %v4510 = vpop.f32.mrf.mxu0
    %v4511 = vadd.f32 0.0, %v4510
    %v4512 = vpop.f32.mrf.mxu0
    %4513 = vmatprep.mubr.f32.mxu0 0.0
    %4514 = vmatmul.mubr.f32.gmra.mxu0 %v4333
    %v4515 = vpop.f32.mrf.mxu0
    %v4516 = vadd.f32 0.0, %v4515
    %v4517 = vpop.f32.mrf.mxu0
    %4518 = vmatprep.mubr.f32.mxu0 0.0
    %4519 = vmatmul.mubr.f32.gmra.mxu0 %v4334
    %v4520 = vpop.f32.mrf.mxu0
    %v4521 = vadd.f32 0.0, %v4520
    %v4522 = vpop.f32.mrf.mxu0
    %4523 = vmatprep.mubr.f32.mxu0 0.0
    %4524 = vmatmul.mubr.f32.gmra.mxu0 %v4335
    %v4525 = vpop.f32.mrf.mxu0
    %v4526 = vadd.f32 0.0, %v4525
    %v4527 = vpop.f32.mrf.mxu0
    %4528 = vmatprep.mubr.f32.mxu0 0.0
    %4529 = vmatmul.mubr.f32.gmra.mxu0 %v4336
    %v4530 = vpop.f32.mrf.mxu0
    %v4531 = vadd.f32 0.0, %v4530
    %v4532 = vpop.f32.mrf.mxu0
    %4533 = vdwg.mxu0
    %v4534 = vadd.f32 %v4291, %v4421
    %v4535 = vadd.f32 %v4292, %v4426
    %v4536 = vadd.f32 %v4293, %v4431
    %v4537 = vadd.f32 %v4294, %v4436
    %v4538 = vadd.f32 %v4295, %v4441
    %v4539 = vadd.f32 %v4296, %v4446
    %v4540 = vadd.f32 %v4297, %v4451
    %v4541 = vadd.f32 %v4298, %v4456
    %v4542 = vadd.f32 %v4299, %v4461
    %v4543 = vadd.f32 %v4300, %v4466
    %v4544 = vadd.f32 %v4301, %v4471
    %v4545 = vadd.f32 %v4302, %v4476
    %v4546 = vadd.f32 %v4303, %v4481
    %v4547 = vadd.f32 %v4304, %v4486
    %v4548 = vadd.f32 %v4305, %v4491
    %v4549 = vadd.f32 %v4306, %v4496
    %v4550 = vadd.f32 %v4307, %v4501
    %v4551 = vadd.f32 %v4308, %v4506
    %v4552 = vadd.f32 %v4309, %v4511
    %v4553 = vadd.f32 %v4310, %v4516
    %v4554 = vadd.f32 %v4311, %v4521
    %v4555 = vadd.f32 %v4312, %v4526
    %v4556 = vadd.f32 %v4313, %v4531
    %v4557 = vld [vmem:[#allocation2 + $0x16] sm:$0xff]
    %v4558 = vld [vmem:[#allocation2 + $0x1e] sm:$0xff]
    %v4559 = vld [vmem:[#allocation2 + $0x26] sm:$0xff]
    %v4560 = vld [vmem:[#allocation2 + $0x2e] sm:$0xff]
    %v4561 = vld [vmem:[#allocation2 + $0x36] sm:$0xff]
    %v4562 = vld [vmem:[#allocation2 + $0x3e] sm:$0xff]
    %v4563 = vld [vmem:[#allocation2 + $0x46] sm:$0xff]
    %v4564 = vld [vmem:[#allocation2 + $0x4e] sm:$0xff]
    %v4565 = vld [vmem:[#allocation2 + $0x56] sm:$0xff]
    %v4566 = vld [vmem:[#allocation2 + $0x5e] sm:$0xff]
    %v4567 = vld [vmem:[#allocation2 + $0x66] sm:$0xff]
    %v4568 = vld [vmem:[#allocation2 + $0x6e] sm:$0xff]
    %v4569 = vld [vmem:[#allocation2 + $0x76] sm:$0xff]
    %v4570 = vld [vmem:[#allocation2 + $0x7e] sm:$0xff]
    %v4571 = vld [vmem:[#allocation2 + $0x86] sm:$0xff]
    %v4572 = vld [vmem:[#allocation2 + $0x8e] sm:$0xff]
    %v4573 = vld [vmem:[#allocation2 + $0x96] sm:$0xff]
    %v4574 = vld [vmem:[#allocation2 + $0x9e] sm:$0xff]
    %v4575 = vld [vmem:[#allocation2 + $0xa6] sm:$0xff]
    %v4576 = vld [vmem:[#allocation2 + $0xae] sm:$0xff]
    %v4577 = vld [vmem:[#allocation2 + $0xb6] sm:$0xff]
    %v4578 = vld [vmem:[#allocation2 + $0xbe] sm:$0xff]
    %v4579 = vld [vmem:[#allocation2 + $0xc6] sm:$0x3]
    %s4580 = scalar_lea.vmem [#allocation8], 1024
    %v4581 = vld [vmem:[%s4580] sm:$0xff]
    %v4582 = vld [vmem:[%s4580 + $0x8] sm:$0xff]
    %v4583 = vld [vmem:[%s4580 + $0x10] sm:$0xff]
    %v4584 = vld [vmem:[%s4580 + $0x18] sm:$0xff]
    %v4585 = vld [vmem:[%s4580 + $0x20] sm:$0xff]
    %v4586 = vld [vmem:[%s4580 + $0x28] sm:$0xff]
    %v4587 = vld [vmem:[%s4580 + $0x30] sm:$0xff]
    %v4588 = vld [vmem:[%s4580 + $0x38] sm:$0xff]
    %v4589 = vld [vmem:[%s4580 + $0x40] sm:$0xff]
    %v4590 = vld [vmem:[%s4580 + $0x48] sm:$0xff]
    %v4591 = vld [vmem:[%s4580 + $0x50] sm:$0xff]
    %v4592 = vld [vmem:[%s4580 + $0x58] sm:$0xff]
    %v4593 = vld [vmem:[%s4580 + $0x60] sm:$0xff]
    %v4594 = vld [vmem:[%s4580 + $0x68] sm:$0xff]
    %v4595 = vld [vmem:[%s4580 + $0x70] sm:$0xff]
    %v4596 = vld [vmem:[%s4580 + $0x78] sm:$0xff]
    %4597 = vmatprep.subr.mxu0 0.0
    %4598 = vmatpush1.msra.mxu0 %v4596
    %4599 = vmatprep.subr.mxu0 0.0
    %4600 = vmatpush1.msra.mxu0 %v4595
    %4601 = vmatprep.subr.mxu0 0.0
    %4602 = vmatpush1.msra.mxu0 %v4594
    %4603 = vmatprep.subr.mxu0 0.0
    %4604 = vmatpush1.msra.mxu0 %v4593
    %4605 = vmatprep.subr.mxu0 0.0
    %4606 = vmatpush1.msra.mxu0 %v4592
    %4607 = vmatprep.subr.mxu0 0.0
    %4608 = vmatpush1.msra.mxu0 %v4591
    %4609 = vmatprep.subr.mxu0 0.0
    %4610 = vmatpush1.msra.mxu0 %v4590
    %4611 = vmatprep.subr.mxu0 0.0
    %4612 = vmatpush1.msra.mxu0 %v4589
    %4613 = vmatprep.subr.mxu0 0.0
    %4614 = vmatpush1.msra.mxu0 %v4588
    %4615 = vmatprep.subr.mxu0 0.0
    %4616 = vmatpush1.msra.mxu0 %v4587
    %4617 = vmatprep.subr.mxu0 0.0
    %4618 = vmatpush1.msra.mxu0 %v4586
    %4619 = vmatprep.subr.mxu0 0.0
    %4620 = vmatpush1.msra.mxu0 %v4585
    %4621 = vmatprep.subr.mxu0 0.0
    %4622 = vmatpush1.msra.mxu0 %v4584
    %4623 = vmatprep.subr.mxu0 0.0
    %4624 = vmatpush1.msra.mxu0 %v4583
    %4625 = vmatprep.subr.mxu0 0.0
    %4626 = vmatpush1.msra.mxu0 %v4582
    %4627 = vmatprep.subr.mxu0 0.0
    %4628 = vmatpush1.msra.mxu0 %v4581
    %4629 = vmatprep.subr.mxu0 0.0
    %4630 = vmatpush2.msra.mxu0 0.0
    %4631 = vmatprep.subr.mxu0 0.0
    %4632 = vmatpush2.msra.mxu0 0.0
    %4633 = vmatprep.subr.mxu0 0.0
    %4634 = vmatpush2.msra.mxu0 0.0
    %4635 = vmatprep.subr.mxu0 0.0
    %4636 = vmatpush2.msra.mxu0 0.0
    %4637 = vmatprep.subr.mxu0 0.0
    %4638 = vmatpush2.msra.mxu0 0.0
    %4639 = vmatprep.subr.mxu0 0.0
    %4640 = vmatpush2.msra.mxu0 0.0
    %4641 = vmatprep.subr.mxu0 0.0
    %4642 = vmatpush2.msra.mxu0 0.0
    %4643 = vmatprep.subr.mxu0 0.0
    %4644 = vmatpush2.msra.mxu0 0.0
    %4645 = vmatprep.subr.mxu0 0.0
    %4646 = vmatpush2.msra.mxu0 0.0
    %4647 = vmatprep.subr.mxu0 0.0
    %4648 = vmatpush2.msra.mxu0 0.0
    %4649 = vmatprep.subr.mxu0 0.0
    %4650 = vmatpush2.msra.mxu0 0.0
    %4651 = vmatprep.subr.mxu0 0.0
    %4652 = vmatpush2.msra.mxu0 0.0
    %4653 = vmatprep.subr.mxu0 0.0
    %4654 = vmatpush2.msra.mxu0 0.0
    %4655 = vmatprep.subr.mxu0 0.0
    %4656 = vmatpush2.msra.mxu0 0.0
    %4657 = vmatprep.subr.mxu0 0.0
    %4658 = vmatpush2.msra.mxu0 0.0
    %4659 = vmatprep.subr.mxu0 0.0
    %4660 = vmatpush2.msra.mxu0 0.0
    %4661 = vmatprep.mubr.f32.mxu0 0.0
    %4662 = vmatmul.mubr.f32.gmra.mxu0 %v4557
    %v4663 = vpop.f32.mrf.mxu0
    %v4664 = vadd.f32 0.0, %v4663
    %v4665 = vpop.f32.mrf.mxu0
    %4666 = vmatprep.mubr.f32.mxu0 0.0
    %4667 = vmatmul.mubr.f32.gmra.mxu0 %v4558
    %v4668 = vpop.f32.mrf.mxu0
    %v4669 = vadd.f32 0.0, %v4668
    %v4670 = vpop.f32.mrf.mxu0
    %4671 = vmatprep.mubr.f32.mxu0 0.0
    %4672 = vmatmul.mubr.f32.gmra.mxu0 %v4559
    %v4673 = vpop.f32.mrf.mxu0
    %v4674 = vadd.f32 0.0, %v4673
    %v4675 = vpop.f32.mrf.mxu0
    %4676 = vmatprep.mubr.f32.mxu0 0.0
    %4677 = vmatmul.mubr.f32.gmra.mxu0 %v4560
    %v4678 = vpop.f32.mrf.mxu0
    %v4679 = vadd.f32 0.0, %v4678
    %v4680 = vpop.f32.mrf.mxu0
    %4681 = vmatprep.mubr.f32.mxu0 0.0
    %4682 = vmatmul.mubr.f32.gmra.mxu0 %v4561
    %v4683 = vpop.f32.mrf.mxu0
    %v4684 = vadd.f32 0.0, %v4683
    %v4685 = vpop.f32.mrf.mxu0
    %4686 = vmatprep.mubr.f32.mxu0 0.0
    %4687 = vmatmul.mubr.f32.gmra.mxu0 %v4562
    %v4688 = vpop.f32.mrf.mxu0
    %v4689 = vadd.f32 0.0, %v4688
    %v4690 = vpop.f32.mrf.mxu0
    %4691 = vmatprep.mubr.f32.mxu0 0.0
    %4692 = vmatmul.mubr.f32.gmra.mxu0 %v4563
    %v4693 = vpop.f32.mrf.mxu0
    %v4694 = vadd.f32 0.0, %v4693
    %v4695 = vpop.f32.mrf.mxu0
    %4696 = vmatprep.mubr.f32.mxu0 0.0
    %4697 = vmatmul.mubr.f32.gmra.mxu0 %v4564
    %v4698 = vpop.f32.mrf.mxu0
    %v4699 = vadd.f32 0.0, %v4698
    %v4700 = vpop.f32.mrf.mxu0
    %4701 = vmatprep.mubr.f32.mxu0 0.0
    %4702 = vmatmul.mubr.f32.gmra.mxu0 %v4565
    %v4703 = vpop.f32.mrf.mxu0
    %v4704 = vadd.f32 0.0, %v4703
    %v4705 = vpop.f32.mrf.mxu0
    %4706 = vmatprep.mubr.f32.mxu0 0.0
    %4707 = vmatmul.mubr.f32.gmra.mxu0 %v4566
    %v4708 = vpop.f32.mrf.mxu0
    %v4709 = vadd.f32 0.0, %v4708
    %v4710 = vpop.f32.mrf.mxu0
    %4711 = vmatprep.mubr.f32.mxu0 0.0
    %4712 = vmatmul.mubr.f32.gmra.mxu0 %v4567
    %v4713 = vpop.f32.mrf.mxu0
    %v4714 = vadd.f32 0.0, %v4713
    %v4715 = vpop.f32.mrf.mxu0
    %4716 = vmatprep.mubr.f32.mxu0 0.0
    %4717 = vmatmul.mubr.f32.gmra.mxu0 %v4568
    %v4718 = vpop.f32.mrf.mxu0
    %v4719 = vadd.f32 0.0, %v4718
    %v4720 = vpop.f32.mrf.mxu0
    %4721 = vmatprep.mubr.f32.mxu0 0.0
    %4722 = vmatmul.mubr.f32.gmra.mxu0 %v4569
    %v4723 = vpop.f32.mrf.mxu0
    %v4724 = vadd.f32 0.0, %v4723
    %v4725 = vpop.f32.mrf.mxu0
    %4726 = vmatprep.mubr.f32.mxu0 0.0
    %4727 = vmatmul.mubr.f32.gmra.mxu0 %v4570
    %v4728 = vpop.f32.mrf.mxu0
    %v4729 = vadd.f32 0.0, %v4728
    %v4730 = vpop.f32.mrf.mxu0
    %4731 = vmatprep.mubr.f32.mxu0 0.0
    %4732 = vmatmul.mubr.f32.gmra.mxu0 %v4571
    %v4733 = vpop.f32.mrf.mxu0
    %v4734 = vadd.f32 0.0, %v4733
    %v4735 = vpop.f32.mrf.mxu0
    %4736 = vmatprep.mubr.f32.mxu0 0.0
    %4737 = vmatmul.mubr.f32.gmra.mxu0 %v4572
    %v4738 = vpop.f32.mrf.mxu0
    %v4739 = vadd.f32 0.0, %v4738
    %v4740 = vpop.f32.mrf.mxu0
    %4741 = vmatprep.mubr.f32.mxu0 0.0
    %4742 = vmatmul.mubr.f32.gmra.mxu0 %v4573
    %v4743 = vpop.f32.mrf.mxu0
    %v4744 = vadd.f32 0.0, %v4743
    %v4745 = vpop.f32.mrf.mxu0
    %4746 = vmatprep.mubr.f32.mxu0 0.0
    %4747 = vmatmul.mubr.f32.gmra.mxu0 %v4574
    %v4748 = vpop.f32.mrf.mxu0
    %v4749 = vadd.f32 0.0, %v4748
    %v4750 = vpop.f32.mrf.mxu0
    %4751 = vmatprep.mubr.f32.mxu0 0.0
    %4752 = vmatmul.mubr.f32.gmra.mxu0 %v4575
    %v4753 = vpop.f32.mrf.mxu0
    %v4754 = vadd.f32 0.0, %v4753
    %v4755 = vpop.f32.mrf.mxu0
    %4756 = vmatprep.mubr.f32.mxu0 0.0
    %4757 = vmatmul.mubr.f32.gmra.mxu0 %v4576
    %v4758 = vpop.f32.mrf.mxu0
    %v4759 = vadd.f32 0.0, %v4758
    %v4760 = vpop.f32.mrf.mxu0
    %4761 = vmatprep.mubr.f32.mxu0 0.0
    %4762 = vmatmul.mubr.f32.gmra.mxu0 %v4577
    %v4763 = vpop.f32.mrf.mxu0
    %v4764 = vadd.f32 0.0, %v4763
    %v4765 = vpop.f32.mrf.mxu0
    %4766 = vmatprep.mubr.f32.mxu0 0.0
    %4767 = vmatmul.mubr.f32.gmra.mxu0 %v4578
    %v4768 = vpop.f32.mrf.mxu0
    %v4769 = vadd.f32 0.0, %v4768
    %v4770 = vpop.f32.mrf.mxu0
    %4771 = vmatprep.mubr.f32.mxu0 0.0
    %4772 = vmatmul.mubr.f32.gmra.mxu0 %v4579
    %v4773 = vpop.f32.mrf.mxu0
    %v4774 = vadd.f32 0.0, %v4773
    %v4775 = vpop.f32.mrf.mxu0
    %4776 = vdwg.mxu0
    %v4777 = vadd.f32 %v4534, %v4664
    %v4778 = vadd.f32 %v4535, %v4669
    %v4779 = vadd.f32 %v4536, %v4674
    %v4780 = vadd.f32 %v4537, %v4679
    %v4781 = vadd.f32 %v4538, %v4684
    %v4782 = vadd.f32 %v4539, %v4689
    %v4783 = vadd.f32 %v4540, %v4694
    %v4784 = vadd.f32 %v4541, %v4699
    %v4785 = vadd.f32 %v4542, %v4704
    %v4786 = vadd.f32 %v4543, %v4709
    %v4787 = vadd.f32 %v4544, %v4714
    %v4788 = vadd.f32 %v4545, %v4719
    %v4789 = vadd.f32 %v4546, %v4724
    %v4790 = vadd.f32 %v4547, %v4729
    %v4791 = vadd.f32 %v4548, %v4734
    %v4792 = vadd.f32 %v4549, %v4739
    %v4793 = vadd.f32 %v4550, %v4744
    %v4794 = vadd.f32 %v4551, %v4749
    %v4795 = vadd.f32 %v4552, %v4754
    %v4796 = vadd.f32 %v4553, %v4759
    %v4797 = vadd.f32 %v4554, %v4764
    %v4798 = vadd.f32 %v4555, %v4769
    %v4799 = vadd.f32 %v4556, %v4774
    %v4800 = vld [vmem:[#allocation3 + $0xb] sm:$0xff]
    %v4801 = vld [vmem:[#allocation3 + $0x13] sm:$0xff]
    %v4802 = vld [vmem:[#allocation3 + $0x1b] sm:$0xff]
    %v4803 = vld [vmem:[#allocation3 + $0x23] sm:$0xff]
    %v4804 = vld [vmem:[#allocation3 + $0x2b] sm:$0xff]
    %v4805 = vld [vmem:[#allocation3 + $0x33] sm:$0xff]
    %v4806 = vld [vmem:[#allocation3 + $0x3b] sm:$0xff]
    %v4807 = vld [vmem:[#allocation3 + $0x43] sm:$0xff]
    %v4808 = vld [vmem:[#allocation3 + $0x4b] sm:$0xff]
    %v4809 = vld [vmem:[#allocation3 + $0x53] sm:$0xff]
    %v4810 = vld [vmem:[#allocation3 + $0x5b] sm:$0xff]
    %v4811 = vld [vmem:[#allocation3 + $0x63] sm:$0xff]
    %v4812 = vld [vmem:[#allocation3 + $0x6b] sm:$0xff]
    %v4813 = vld [vmem:[#allocation3 + $0x73] sm:$0xff]
    %v4814 = vld [vmem:[#allocation3 + $0x7b] sm:$0xff]
    %v4815 = vld [vmem:[#allocation3 + $0x83] sm:$0xff]
    %v4816 = vld [vmem:[#allocation3 + $0x8b] sm:$0xff]
    %v4817 = vld [vmem:[#allocation3 + $0x93] sm:$0xff]
    %v4818 = vld [vmem:[#allocation3 + $0x9b] sm:$0xff]
    %v4819 = vld [vmem:[#allocation3 + $0xa3] sm:$0xff]
    %v4820 = vld [vmem:[#allocation3 + $0xab] sm:$0xff]
    %v4821 = vld [vmem:[#allocation3 + $0xb3] sm:$0xff]
    %v4822 = vld [vmem:[#allocation3 + $0xbb] sm:$0x3]
    %v4823 = vld [vmem:[%s6] sm:$0x1]
    %v4824 = vld [vmem:[%s7] sm:$0x1]
    %v4825 = vmul.f32 %v4777, %v2239
    %v4826 = vmul.f32 %v4778, %v2244
    %v4827 = vmul.f32 %v4779, %v2249
    %v4828 = vmul.f32 %v4780, %v2254
    %v4829 = vmul.f32 %v4781, %v2259
    %v4830 = vmul.f32 %v4782, %v2264
    %v4831 = vmul.f32 %v4783, %v2269
    %v4832 = vmul.f32 %v4784, %v2274
    %v4833 = vmul.f32 %v4785, %v2279
    %v4834 = vmul.f32 %v4786, %v2284
    %v4835 = vmul.f32 %v4787, %v2289
    %v4836 = vmul.f32 %v4788, %v2294
    %v4837 = vmul.f32 %v4789, %v2299
    %v4838 = vmul.f32 %v4790, %v2304
    %v4839 = vmul.f32 %v4791, %v2309
    %v4840 = vmul.f32 %v4792, %v2314
    %v4841 = vmul.f32 %v4793, %v2319
    %v4842 = vmul.f32 %v4794, %v2324
    %v4843 = vmul.f32 %v4795, %v2329
    %v4844 = vmul.f32 %v4796, %v2334
    %v4845 = vmul.f32 %v4797, %v2339
    %v4846 = vmul.f32 %v4798, %v2344
    %v4847 = vmul.f32 %v4799, %v2349
    %v4848 = vadd.f32 %v4825, %v4826
    %v4849 = vadd.f32 %v4848, %v4827
    %v4850 = vadd.f32 %v4849, %v4828
    %v4851 = vadd.f32 %v4850, %v4829
    %v4852 = vadd.f32 %v4851, %v4830
    %v4853 = vadd.f32 %v4852, %v4831
    %v4854 = vadd.f32 %v4853, %v4832
    %v4855 = vadd.f32 %v4854, %v4833
    %v4856 = vadd.f32 %v4855, %v4834
    %v4857 = vadd.f32 %v4856, %v4835
    %v4858 = vadd.f32 %v4857, %v4836
    %v4859 = vadd.f32 %v4858, %v4837
    %v4860 = vadd.f32 %v4859, %v4838
    %v4861 = vadd.f32 %v4860, %v4839
    %v4862 = vadd.f32 %v4861, %v4840
    %v4863 = vadd.f32 %v4862, %v4841
    %v4864 = vadd.f32 %v4863, %v4842
    %v4865 = vadd.f32 %v4864, %v4843
    %v4866 = vadd.f32 %v4865, %v4844
    %v4867 = vadd.f32 %v4866, %v4845
    %v4868 = vadd.f32 %v4867, %v4846
    %v4869 = vsel %vm2395, %v4847, 0.0
    %v4870 = vadd.f32 %v4868, %v4869
    %v4871 = vrot.slane %v4870, 4
    %v4872 = vadd.f32 %v4870, %v4871
    %v4873 = vrot.slane %v4872, 2
    %v4874 = vadd.f32 %v4872, %v4873
    %v4875 = vrot.slane %v4874, 1
    %v4876 = vadd.f32 %v4874, %v4875
    %v4877 = vmul.f32 %v4876, 0.0078125
    %v4878 = vsub.f32 %v4777, %v4877
    %v4879 = vsub.f32 %v4778, %v4877
    %v4880 = vsub.f32 %v4779, %v4877
    %v4881 = vsub.f32 %v4780, %v4877
    %v4882 = vsub.f32 %v4781, %v4877
    %v4883 = vsub.f32 %v4782, %v4877
    %v4884 = vsub.f32 %v4783, %v4877
    %v4885 = vsub.f32 %v4784, %v4877
    %v4886 = vsub.f32 %v4785, %v4877
    %v4887 = vsub.f32 %v4786, %v4877
    %v4888 = vsub.f32 %v4787, %v4877
    %v4889 = vsub.f32 %v4788, %v4877
    %v4890 = vsub.f32 %v4789, %v4877
    %v4891 = vsub.f32 %v4790, %v4877
    %v4892 = vsub.f32 %v4791, %v4877
    %v4893 = vsub.f32 %v4792, %v4877
    %v4894 = vsub.f32 %v4793, %v4877
    %v4895 = vsub.f32 %v4794, %v4877
    %v4896 = vsub.f32 %v4795, %v4877
    %v4897 = vsub.f32 %v4796, %v4877
    %v4898 = vsub.f32 %v4797, %v4877
    %v4899 = vsub.f32 %v4798, %v4877
    %v4900 = vsub.f32 %v4799, %v4877
    %v4901 = vmul.f32 %v4878, %v2239
    %v4902 = vmul.f32 %v4879, %v2244
    %v4903 = vmul.f32 %v4880, %v2249
    %v4904 = vmul.f32 %v4881, %v2254
    %v4905 = vmul.f32 %v4882, %v2259
    %v4906 = vmul.f32 %v4883, %v2264
    %v4907 = vmul.f32 %v4884, %v2269
    %v4908 = vmul.f32 %v4885, %v2274
    %v4909 = vmul.f32 %v4886, %v2279
    %v4910 = vmul.f32 %v4887, %v2284
    %v4911 = vmul.f32 %v4888, %v2289
    %v4912 = vmul.f32 %v4889, %v2294
    %v4913 = vmul.f32 %v4890, %v2299
    %v4914 = vmul.f32 %v4891, %v2304
    %v4915 = vmul.f32 %v4892, %v2309
    %v4916 = vmul.f32 %v4893, %v2314
    %v4917 = vmul.f32 %v4894, %v2319
    %v4918 = vmul.f32 %v4895, %v2324
    %v4919 = vmul.f32 %v4896, %v2329
    %v4920 = vmul.f32 %v4897, %v2334
    %v4921 = vmul.f32 %v4898, %v2339
    %v4922 = vmul.f32 %v4899, %v2344
    %v4923 = vmul.f32 %v4900, %v2349
    %v4924 = vmul.f32 %v4901, %v4901
    %v4925 = vmul.f32 %v4902, %v4902
    %v4926 = vmul.f32 %v4903, %v4903
    %v4927 = vmul.f32 %v4904, %v4904
    %v4928 = vmul.f32 %v4905, %v4905
    %v4929 = vmul.f32 %v4906, %v4906
    %v4930 = vmul.f32 %v4907, %v4907
    %v4931 = vmul.f32 %v4908, %v4908
    %v4932 = vmul.f32 %v4909, %v4909
    %v4933 = vmul.f32 %v4910, %v4910
    %v4934 = vmul.f32 %v4911, %v4911
    %v4935 = vmul.f32 %v4912, %v4912
    %v4936 = vmul.f32 %v4913, %v4913
    %v4937 = vmul.f32 %v4914, %v4914
    %v4938 = vmul.f32 %v4915, %v4915
    %v4939 = vmul.f32 %v4916, %v4916
    %v4940 = vmul.f32 %v4917, %v4917
    %v4941 = vmul.f32 %v4918, %v4918
    %v4942 = vmul.f32 %v4919, %v4919
    %v4943 = vmul.f32 %v4920, %v4920
    %v4944 = vmul.f32 %v4921, %v4921
    %v4945 = vmul.f32 %v4922, %v4922
    %v4946 = vmul.f32 %v4923, %v4923
    %v4947 = vadd.f32 %v4924, %v4925
    %v4948 = vadd.f32 %v4947, %v4926
    %v4949 = vadd.f32 %v4948, %v4927
    %v4950 = vadd.f32 %v4949, %v4928
    %v4951 = vadd.f32 %v4950, %v4929
    %v4952 = vadd.f32 %v4951, %v4930
    %v4953 = vadd.f32 %v4952, %v4931
    %v4954 = vadd.f32 %v4953, %v4932
    %v4955 = vadd.f32 %v4954, %v4933
    %v4956 = vadd.f32 %v4955, %v4934
    %v4957 = vadd.f32 %v4956, %v4935
    %v4958 = vadd.f32 %v4957, %v4936
    %v4959 = vadd.f32 %v4958, %v4937
    %v4960 = vadd.f32 %v4959, %v4938
    %v4961 = vadd.f32 %v4960, %v4939
    %v4962 = vadd.f32 %v4961, %v4940
    %v4963 = vadd.f32 %v4962, %v4941
    %v4964 = vadd.f32 %v4963, %v4942
    %v4965 = vadd.f32 %v4964, %v4943
    %v4966 = vadd.f32 %v4965, %v4944
    %v4967 = vadd.f32 %v4966, %v4945
    %v4968 = vsel %vm2395, %v4946, 0.0
    %v4969 = vadd.f32 %v4967, %v4968
    %v4970 = vrot.slane %v4969, 4
    %v4971 = vadd.f32 %v4969, %v4970
    %v4972 = vrot.slane %v4971, 2
    %v4973 = vadd.f32 %v4971, %v4972
    %v4974 = vrot.slane %v4973, 1
    %v4975 = vadd.f32 %v4973, %v4974
    %v4976 = vmul.f32 %v4975, 0.0078125
    %v4978 = vlaneseq
    %v4979 = vshrl.u32 %v4978, 7
    %v4980 = vsub.s32 0, %v4979
    %v4981 = vrot.slane %v4823, %v4980
    %v4983 = vmul.f32 %v4981, %v4901
    %v4984 = vmul.f32 %v4981, %v4902
    %v4985 = vmul.f32 %v4981, %v4903
    %v4986 = vmul.f32 %v4981, %v4904
    %v4987 = vmul.f32 %v4981, %v4905
    %v4988 = vmul.f32 %v4981, %v4906
    %v4989 = vmul.f32 %v4981, %v4907
    %v4990 = vmul.f32 %v4981, %v4908
    %v4991 = vmul.f32 %v4981, %v4909
    %v4992 = vmul.f32 %v4981, %v4910
    %v4993 = vmul.f32 %v4981, %v4911
    %v4994 = vmul.f32 %v4981, %v4912
    %v4995 = vmul.f32 %v4981, %v4913
    %v4996 = vmul.f32 %v4981, %v4914
    %v4997 = vmul.f32 %v4981, %v4915
    %v4998 = vmul.f32 %v4981, %v4916
    %v4999 = vmul.f32 %v4981, %v4917
    %v5000 = vmul.f32 %v4981, %v4918
    %v5001 = vmul.f32 %v4981, %v4919
    %v5002 = vmul.f32 %v4981, %v4920
    %v5003 = vmul.f32 %v4981, %v4921
    %v5004 = vmul.f32 %v4981, %v4922
    %v5005 = vmul.f32 %v4981, %v4923
    %v5006 = vadd.f32 %v4976, 1e-05
    %v5007 = vrsqrt.pop %v5006
    %v5008 = vmul.f32 %v4983, %v5007
    %v5009 = vmul.f32 %v4984, %v5007
    %v5010 = vmul.f32 %v4985, %v5007
    %v5011 = vmul.f32 %v4986, %v5007
    %v5012 = vmul.f32 %v4987, %v5007
    %v5013 = vmul.f32 %v4988, %v5007
    %v5014 = vmul.f32 %v4989, %v5007
    %v5015 = vmul.f32 %v4990, %v5007
    %v5016 = vmul.f32 %v4991, %v5007
    %v5017 = vmul.f32 %v4992, %v5007
    %v5018 = vmul.f32 %v4993, %v5007
    %v5019 = vmul.f32 %v4994, %v5007
    %v5020 = vmul.f32 %v4995, %v5007
    %v5021 = vmul.f32 %v4996, %v5007
    %v5022 = vmul.f32 %v4997, %v5007
    %v5023 = vmul.f32 %v4998, %v5007
    %v5024 = vmul.f32 %v4999, %v5007
    %v5025 = vmul.f32 %v5000, %v5007
    %v5026 = vmul.f32 %v5001, %v5007
    %v5027 = vmul.f32 %v5002, %v5007
    %v5028 = vmul.f32 %v5003, %v5007
    %v5029 = vmul.f32 %v5004, %v5007
    %v5030 = vmul.f32 %v5005, %v5007
    %v5032 = vlaneseq
    %v5033 = vshrl.u32 %v5032, 7
    %v5034 = vsub.s32 0, %v5033
    %v5035 = vrot.slane %v4824, %v5034
    %v5037 = vadd.f32 %v5008, %v5035
    %v5038 = vadd.f32 %v5009, %v5035
    %v5039 = vadd.f32 %v5010, %v5035
    %v5040 = vadd.f32 %v5011, %v5035
    %v5041 = vadd.f32 %v5012, %v5035
    %v5042 = vadd.f32 %v5013, %v5035
    %v5043 = vadd.f32 %v5014, %v5035
    %v5044 = vadd.f32 %v5015, %v5035
    %v5045 = vadd.f32 %v5016, %v5035
    %v5046 = vadd.f32 %v5017, %v5035
    %v5047 = vadd.f32 %v5018, %v5035
    %v5048 = vadd.f32 %v5019, %v5035
    %v5049 = vadd.f32 %v5020, %v5035
    %v5050 = vadd.f32 %v5021, %v5035
    %v5051 = vadd.f32 %v5022, %v5035
    %v5052 = vadd.f32 %v5023, %v5035
    %v5053 = vadd.f32 %v5024, %v5035
    %v5054 = vadd.f32 %v5025, %v5035
    %v5055 = vadd.f32 %v5026, %v5035
    %v5056 = vadd.f32 %v5027, %v5035
    %v5057 = vadd.f32 %v5028, %v5035
    %v5058 = vadd.f32 %v5029, %v5035
    %v5059 = vadd.f32 %v5030, %v5035
    %v5060 = vadd.f32 %v5037, %v4800
    %v5061 = vadd.f32 %v5038, %v4801
    %v5062 = vadd.f32 %v5039, %v4802
    %v5063 = vadd.f32 %v5040, %v4803
    %v5064 = vadd.f32 %v5041, %v4804
    %v5065 = vadd.f32 %v5042, %v4805
    %v5066 = vadd.f32 %v5043, %v4806
    %v5067 = vadd.f32 %v5044, %v4807
    %v5068 = vadd.f32 %v5045, %v4808
    %v5069 = vadd.f32 %v5046, %v4809
    %v5070 = vadd.f32 %v5047, %v4810
    %v5071 = vadd.f32 %v5048, %v4811
    %v5072 = vadd.f32 %v5049, %v4812
    %v5073 = vadd.f32 %v5050, %v4813
    %v5074 = vadd.f32 %v5051, %v4814
    %v5075 = vadd.f32 %v5052, %v4815
    %v5076 = vadd.f32 %v5053, %v4816
    %v5077 = vadd.f32 %v5054, %v4817
    %v5078 = vadd.f32 %v5055, %v4818
    %v5079 = vadd.f32 %v5056, %v4819
    %v5080 = vadd.f32 %v5057, %v4820
    %v5081 = vadd.f32 %v5058, %v4821
    %v5082 = vadd.f32 %v5059, %v4822
    %v5083 = vmax.f32 %v5060, 0.0
    %v5084 = vmax.f32 %v5061, 0.0
    %v5085 = vmax.f32 %v5062, 0.0
    %v5086 = vmax.f32 %v5063, 0.0
    %v5087 = vmax.f32 %v5064, 0.0
    %v5088 = vmax.f32 %v5065, 0.0
    %v5089 = vmax.f32 %v5066, 0.0
    %v5090 = vmax.f32 %v5067, 0.0
    %v5091 = vmax.f32 %v5068, 0.0
    %v5092 = vmax.f32 %v5069, 0.0
    %v5093 = vmax.f32 %v5070, 0.0
    %v5094 = vmax.f32 %v5071, 0.0
    %v5095 = vmax.f32 %v5072, 0.0
    %v5096 = vmax.f32 %v5073, 0.0
    %v5097 = vmax.f32 %v5074, 0.0
    %v5098 = vmax.f32 %v5075, 0.0
    %v5099 = vmax.f32 %v5076, 0.0
    %v5100 = vmax.f32 %v5077, 0.0
    %v5101 = vmax.f32 %v5078, 0.0
    %v5102 = vmax.f32 %v5079, 0.0
    %v5103 = vmax.f32 %v5080, 0.0
    %v5104 = vmax.f32 %v5081, 0.0
    %v5105 = vmax.f32 %v5082, 0.0
    %5106 = vst [vmem:[#allocation9] sm:$0xff] %v5083
    %5107 = vst [vmem:[#allocation9 + $0x8] sm:$0xff] %v5084
    %5108 = vst [vmem:[#allocation9 + $0x10] sm:$0xff] %v5085
    %5109 = vst [vmem:[#allocation9 + $0x18] sm:$0xff] %v5086
    %5110 = vst [vmem:[#allocation9 + $0x20] sm:$0xff] %v5087
    %5111 = vst [vmem:[#allocation9 + $0x28] sm:$0xff] %v5088
    %5112 = vst [vmem:[#allocation9 + $0x30] sm:$0xff] %v5089
    %5113 = vst [vmem:[#allocation9 + $0x38] sm:$0xff] %v5090
    %5114 = vst [vmem:[#allocation9 + $0x40] sm:$0xff] %v5091
    %5115 = vst [vmem:[#allocation9 + $0x48] sm:$0xff] %v5092
    %5116 = vst [vmem:[#allocation9 + $0x50] sm:$0xff] %v5093
    %5117 = vst [vmem:[#allocation9 + $0x58] sm:$0xff] %v5094
    %5118 = vst [vmem:[#allocation9 + $0x60] sm:$0xff] %v5095
    %5119 = vst [vmem:[#allocation9 + $0x68] sm:$0xff] %v5096
    %5120 = vst [vmem:[#allocation9 + $0x70] sm:$0xff] %v5097
    %5121 = vst [vmem:[#allocation9 + $0x78] sm:$0xff] %v5098
    %5122 = vst [vmem:[#allocation9 + $0x80] sm:$0xff] %v5099
    %5123 = vst [vmem:[#allocation9 + $0x88] sm:$0xff] %v5100
    %5124 = vst [vmem:[#allocation9 + $0x90] sm:$0xff] %v5101
    %5125 = vst [vmem:[#allocation9 + $0x98] sm:$0xff] %v5102
    %5126 = vst [vmem:[#allocation9 + $0xa0] sm:$0xff] %v5103
    %5127 = vst [vmem:[#allocation9 + $0xa8] sm:$0xff] %v5104
    %5128 = vst [vmem:[#allocation9 + $0xb0] sm:$0x3] %v5105
    %5129 = vst [vmem:[#allocation9 + $0xb2] sm:$0xff] 0.0
    %5130 = vst [vmem:[#allocation9 + $0xba] sm:$0xff] 0.0
    %5131 = vst [vmem:[#allocation9 + $0xc2] sm:$0x3f] 0.0
    // Predicated region
    $region46: #{tpu_custom_call.1} parent=1 // pred_check
      _
    $region47: #{tpu_custom_call.1} parent=1 // pred_check_branch
      %5133 = sbr.rel (0) target = $region49
    $region48: #{tpu_custom_call.1} parent=1 // pred_region
      %s5135 = ssub.s32 3200, 3200
      %5136 = vsyncadd [#allocation5], %s5135
      %s5137 = sshll.u32 [#allocation9], 4
      %s5138 = int_to_ptr.vmem [resolvable:$true] %s5137
      %5143 = dma.vmem_to_hbm [thread:$0]  %s5138, 3200, %s8, [#allocation5], 128, 128, 8
    $region49: #{tpu_custom_call.1} parent=1 // pred_fallthru
      _
    // Predicated region
    $region50: #{tpu_custom_call.1} parent=1 // pred_check
      _
    $region51: #{tpu_custom_call.1} parent=1 // pred_check_branch
      %5145 = sbr.rel (0) target = $region53
    $region52: #{tpu_custom_call.1} parent=1 // pred_region
      %5146 = dma.done [#allocation5], 3200
    $region53: #{tpu_custom_call.1} parent=1 // pred_fallthru
      _
    %5147 = vsyncpa [#allocation4], 1
    %5148 = vsyncpa [#allocation7], 1
    %5149 = vsyncpa [#allocation5], 1

</llo_original>
